<compile_context>
chip_gen: v7x
topology: tpu7x:2x2x1
jax: 0.10.0
libtpu: 0.0.40
codegen_flags: <defaults>
</compile_context>

<pallas_src>
import functools
import math

import numpy as np
import jax
import jax.numpy as jnp
from jax import lax
from jax.experimental import pallas as pl
from jax.experimental.pallas import tpu as pltpu

# PyTorch nn.LayerNorm default eps; match the exported checkpoint if different.
LN_EPS = 1e-5

SMALL_D_ORDER = ("ln1_g", "ln1_b", "ln2_g", "ln2_b", "ln3_g", "ln3_b",
                 "bq", "bk", "bv", "bo")
SMALL_FF_ORDER = ("ffn_b1", "lnf_g", "lnf_b")


def _vmem_limit_bytes():
    """Scoped VMEM limit with headroom (v7x has only 64 MiB per TensorCore)."""
    cap = 128 * 1024 * 1024
    try:
        info = pltpu.get_tpu_info()
        cap = int(getattr(info, "vmem_capacity_bytes", cap) or cap)
    except Exception:
        pass
    return min(int(cap * 3 // 4), 96 * 1024 * 1024)


def _layer_norm(x, g, b):
    mu = jnp.mean(x, axis=-1, keepdims=True)
    var = jnp.mean(jnp.square(x - mu), axis=-1, keepdims=True)
    return (x - mu) * lax.rsqrt(var + LN_EPS) * g + b


# ----------------------------------------------------------------------------
# Pallas kernels
# ----------------------------------------------------------------------------
def _decoder_stack_kernel(
    # activations / masks (resident across all layers)
    x_ref, tmask_ref, mem_ref, mmask_ref, an_g_ref, an_b_ref,
    # per-layer weights (stacked along a leading layer axis, streamed per step)
    vec_d_ref, vec_ff_ref, fsmn_ref, w1_ref, w2_ref, wq_ref, wkv_ref, wo_ref,
    # outputs
    out_ref,
    # scratch
    x_scr, pad_scr,
    *, n_head, kernel_size):
    """One Paraformer SANM decoder layer per grid step; grid = (num_layers,)."""
    layer = pl.program_id(0)
    n_layers = pl.num_programs(0)

    B, T, D = x_ref.shape
    S = mem_ref.shape[1]
    BT = B * T
    H = n_head
    dk = D // H
    K = kernel_size
    lpad = (K - 1) // 2       # TODO(synk): sanm_shift may make this asymmetric
    P = ((lpad + 7) // 8) * 8 # sublane-aligned store offset in the pad buffer
    cdt = w1_ref.dtype        # matmul compute dtype (bf16)

    @pl.when(layer == 0)
    def _init():
        x_scr[...] = x_ref[...].reshape(BT, D).astype(jnp.float32)
        # Zero the FSMN halo once; halo rows are never overwritten later.
        pad_scr[...] = jnp.zeros_like(pad_scr)

    x = x_scr[...]                              # (BT, D) f32 carry
    tmask = tmask_ref[...].reshape(BT, 1)       # multiplicative {0, 1}
    mmask = mmask_ref[...]                      # (B, 1, S) additive {0, -1e4}

    vd = vec_d_ref[0]                           # (10, D) f32
    ln1_g, ln1_b = vd[0:1], vd[1:2]
    ln2_g, ln2_b = vd[2:3], vd[3:4]
    ln3_g, ln3_b = vd[4:5], vd[5:6]
    bq, bk, bv, bo = vd[6:7], vd[7:8], vd[8:9], vd[9:10]
    vff = vec_ff_ref[0]                         # (3, DFF) f32
    ffn_b1, lnf_g, lnf_b = vff[0:1], vff[1:2], vff[2:3]

    # ---- feed-forward: w2(LN(relu(w1 LN1(x) + b1)))  (w2 has no bias) ----
    residual = x
    t = _layer_norm(x, ln1_g, ln1_b)
    h = jnp.dot(t.astype(cdt), w1_ref[0],
                preferred_element_type=jnp.float32) + ffn_b1
    h = jnp.maximum(h, 0.0)
    h = _layer_norm(h, lnf_g, lnf_b)
    t = jnp.dot(h.astype(cdt), w2_ref[0], preferred_element_type=jnp.float32)

    # ---- FSMN "self-attention": depthwise conv over time (VPU, no matmuls) --
    tn = _layer_norm(t, ln2_g, ln2_b)
    masked = tn * tmask                          # (BT, D)
    pad_scr[:, P:P + T, :] = masked.reshape(B, T, D)
    w = fsmn_ref[0]                              # (K, D) f32
    conv = jnp.zeros((B, T, D), jnp.float32)
    for kk in range(K):                          # static unroll, zero-padded shifts
        off = P - lpad + kk
        conv = conv + pad_scr[:, off:off + T, :] * w[kk:kk + 1, :].reshape(1, 1, D)
    x = residual + (conv.reshape(BT, D) + masked) * tmask

    # ---- multi-head cross attention over memory (additive mask) ----
    residual = x
    xn = _layer_norm(x, ln3_g, ln3_b)
    mem_flat = mem_ref[...].reshape(B * S, D)    # bf16 (pre-cast outside)
    q = jnp.dot(xn.astype(cdt), wq_ref[0],
                preferred_element_type=jnp.float32) + bq
    kv = jnp.dot(mem_flat.astype(cdt), wkv_ref[0],
                 preferred_element_type=jnp.float32)
    k = kv[:, :D] + bk
    v = kv[:, D:] + bv

    # head split into (B*H, ., dk) groups; dk is a 128-multiple for the
    # production (d_model=512, 4 heads) config, keeping these slices lane-dense.
    qh = jnp.stack([q[b * T:(b + 1) * T, hh * dk:(hh + 1) * dk]
                    for b in range(B) for hh in range(H)], axis=0).astype(cdt)
    kh = jnp.stack([k[b * S:(b + 1) * S, hh * dk:(hh + 1) * dk]
                    for b in range(B) for hh in range(H)], axis=0).astype(cdt)
    vh = jnp.stack([v[b * S:(b + 1) * S, hh * dk:(hh + 1) * dk]
                    for b in range(B) for hh in range(H)], axis=0).astype(cdt)

    scale = 1.0 / math.sqrt(dk)
    scores = jnp.einsum("gtd,gsd->gts", qh, kh,
                        preferred_element_type=jnp.float32) * scale
    scores = scores.reshape(B, H, T, S) + mmask[:, :, None, :]
    scores = scores - jnp.max(scores, axis=-1, keepdims=True)
    p = jnp.exp(scores)
    p = p * pl.reciprocal(jnp.sum(p, axis=-1, keepdims=True), approx=True)
    ctx = jnp.einsum("gts,gsd->gtd", p.reshape(B * H, T, S).astype(cdt), vh,
                     preferred_element_type=jnp.float32)      # (B*H, T, dk)
    # regroup heads into a lane-dense (BT, D) buffer via concatenates
    ctx_bt = jnp.concatenate(
        [jnp.concatenate([ctx[b * H + hh] for hh in range(H)], axis=1)
         for b in range(B)], axis=0)
    attn = jnp.dot(ctx_bt.astype(cdt), wo_ref[0],
                   preferred_element_type=jnp.float32) + bo
    new_x = residual + attn
    x_scr[...] = new_x

    @pl.when(layer == n_layers - 1)
    def _store():
        # fold after_norm into the final store so the vocab projection does not
        # recompute the LayerNorm once per vocab tile
        xn_out = _layer_norm(new_x, an_g_ref[...], an_b_ref[...])
        out_ref[...] = xn_out.reshape(B, T, D).astype(out_ref.dtype)


def _final_proj_kernel(x_ref, w_ref, b_ref, out_ref):
    y = jnp.dot(x_ref[...], w_ref[...], preferred_element_type=jnp.float32)
    out_ref[...] = (y + b_ref[...]).astype(out_ref.dtype)


# ----------------------------------------------------------------------------
# Wrappers
# ----------------------------------------------------------------------------
def decoder_stack(x, tmask3, mem_bf16, mmask3, an_g, an_b, stacked,
                  *, n_head, kernel_size):
    """Run the whole decoder-layer stack (+ after_norm) in ONE pallas_call."""
    B, T, D = x.shape
    S = mem_bf16.shape[1]
    assert T % 8 == 0 and S % 8 == 0 and D % 128 == 0, \
        "pad T/S to a multiple of 8 and D to a multiple of 128"
    L = stacked["w1"].shape[0]
    lpad = (kernel_size - 1) // 2
    rpad = kernel_size - 1 - lpad
    P = ((lpad + 7) // 8) * 8
    pad_len = P + T + rpad

    weight_arrays = [stacked[k] for k in
                     ("vec_d", "vec_ff", "fsmn", "w1", "w2", "wq", "wkv", "wo")]

    def layer_map(l):
        return (l, 0, 0)

    def const3(l):
        return (0, 0, 0)

    in_specs = [
        pl.BlockSpec((B, T, D), const3),          # x               (resident)
        pl.BlockSpec((B, T, 1), const3),          # tgt mult. mask  (resident)
        pl.BlockSpec((B, S, D), const3),          # encoder memory  (resident)
        pl.BlockSpec((B, 1, S), const3),          # mem add. mask   (resident)
        pl.BlockSpec((1, D), lambda l: (0, 0)),   # after_norm gamma
        pl.BlockSpec((1, D), lambda l: (0, 0)),   # after_norm beta
    ] + [pl.BlockSpec((1,) + w.shape[1:], layer_map) for w in weight_arrays]

    return pl.pallas_call(
        functools.partial(_decoder_stack_kernel, n_head=n_head,
                          kernel_size=kernel_size),
        out_shape=jax.ShapeDtypeStruct((B, T, D), jnp.float32),
        grid=(L,),                                # layer axis only; batch is in M
        in_specs=in_specs,
        out_specs=pl.BlockSpec((B, T, D), const3),
        scratch_shapes=[
            pltpu.VMEM((B * T, D), jnp.float32),        # activation carry
            pltpu.VMEM((B, pad_len, D), jnp.float32),   # FSMN zero-padded buffer
        ],
        compiler_params=pltpu.CompilerParams(
            dimension_semantics=("arbitrary",),
            vmem_limit_bytes=_vmem_limit_bytes()),
    )(x, tmask3, mem_bf16, mmask3, an_g, an_b, *weight_arrays)


def final_projection(x_bt, wout, bout, *, vocab_tile=512):
    """output_layer: (B*T, D) @ (D, V) + b, tiled over 128-multiple vocab tiles."""
    BT, D = x_bt.shape
    V = wout.shape[1]
    tv = min(vocab_tile, ((V + 127) // 128) * 128)
    Vp = ((V + tv - 1) // tv) * tv
    if Vp != V:                                   # pad vocab, slice off below
        wout = jnp.pad(wout, ((0, 0), (0, Vp - V)))
        bout = jnp.pad(bout, ((0, 0), (0, Vp - V)))
    out = pl.pallas_call(
        _final_proj_kernel,
        out_shape=jax.ShapeDtypeStruct((BT, Vp), jnp.float32),
        grid=(Vp // tv,),
        in_specs=[pl.BlockSpec((BT, D), lambda v: (0, 0)),
                  pl.BlockSpec((D, tv), lambda v: (0, v)),
                  pl.BlockSpec((1, tv), lambda v: (0, v))],
        out_specs=pl.BlockSpec((BT, tv), lambda v: (0, v)),
        compiler_params=pltpu.CompilerParams(
            dimension_semantics=("parallel",),
            vmem_limit_bytes=_vmem_limit_bytes()),
    )(x_bt, wout, bout)
    return out[:, :V]


def paraformer_decoder_san_forward(hs_pad, hlens, ys_in_pad, ys_in_lens, params,
                                   *, n_head, kernel_size):
    """Mirrors ParaformerDecoderSANExport.forward; returns (logits, ys_in_lens)."""
    B, T, D = ys_in_pad.shape
    S = hs_pad.shape[1]
    # make_pad_mask (sequence_mask, flip=False): 1 where position < length
    tgt_mask = (jnp.arange(T)[None, :] < ys_in_lens[:, None]).astype(jnp.float32)
    mem_mask = (jnp.arange(S)[None, :] < hlens[:, None]).astype(jnp.float32)
    tgt_mask_3d = tgt_mask[:, :, None]                          # (B, T, 1) mult.
    mem_mask_add = ((1.0 - mem_mask) * -10000.0)[:, None, :]    # (B, 1, S) add.

    layers = params["layers"]
    stacked = {
        "vec_d": jnp.stack(
            [jnp.concatenate([lp[k] for k in SMALL_D_ORDER], axis=0)
             for lp in layers], axis=0),                        # (L, 10, D)
        "vec_ff": jnp.stack(
            [jnp.concatenate([lp[k] for k in SMALL_FF_ORDER], axis=0)
             for lp in layers], axis=0),                        # (L, 3, DFF)
        "fsmn": jnp.stack([lp["fsmn_w"] for lp in layers], axis=0),
        "w1": jnp.stack([lp["ffn_w1"] for lp in layers], axis=0),
        "w2": jnp.stack([lp["ffn_w2"] for lp in layers], axis=0),
        "wq": jnp.stack([lp["wq"] for lp in layers], axis=0),
        "wkv": jnp.stack([jnp.concatenate([lp["wk"], lp["wv"]], axis=1)
                          for lp in layers], axis=0),           # fused K|V
        "wo": jnp.stack([lp["wo"] for lp in layers], axis=0),
    }

    mem_bf16 = hs_pad.astype(jnp.bfloat16)      # halve memory DMA + in-kernel cast
    x = decoder_stack(ys_in_pad.astype(jnp.float32), tgt_mask_3d, mem_bf16,
                      mem_mask_add, params["after_norm_g"],
                      params["after_norm_b"], stacked,
                      n_head=n_head, kernel_size=kernel_size)
    x_bt = x.reshape(B * T, D).astype(jnp.bfloat16)
    logits = final_projection(x_bt, params["out_w"], params["out_b"])
    return logits.reshape(B, T, -1), ys_in_lens


# ----------------------------------------------------------------------------
# Deterministic parameter init (matmul weights stored in bf16, rest f32)
# ----------------------------------------------------------------------------
def init_params(key, *, num_layers, d_model, d_ff, n_head, kernel_size, vocab,
                matmul_dtype=jnp.bfloat16):
    def nrm(k, shape, dtype=jnp.float32, scale=0.05):
        return (scale * jax.random.normal(k, shape, dtype=jnp.float32)).astype(dtype)

    layers = []
    for i in range(num_layers):
        ks = jax.random.split(jax.random.fold_in(key, i), 12)
        layers.append(dict(
            ln1_g=jnp.ones((1, d_model), jnp.float32),
            ln1_b=jnp.zeros((1, d_model), jnp.float32),
            ffn_w1=nrm(ks[0], (d_model, d_ff), matmul_dtype),
            ffn_b1=nrm(ks[1], (1, d_ff)),
            lnf_g=jnp.ones((1, d_ff), jnp.float32),
            lnf_b=jnp.zeros((1, d_ff), jnp.float32),
            ffn_w2=nrm(ks[2], (d_ff, d_model), matmul_dtype),
            ln2_g=jnp.ones((1, d_model), jnp.float32),
            ln2_b=jnp.zeros((1, d_model), jnp.float32),
            fsmn_w=nrm(ks[3], (kernel_size, d_model)),
            ln3_g=jnp.ones((1, d_model), jnp.float32),
            ln3_b=jnp.zeros((1, d_model), jnp.float32),
            wq=nrm(ks[4], (d_model, d_model), matmul_dtype), bq=nrm(ks[5], (1, d_model)),
            wk=nrm(ks[6], (d_model, d_model), matmul_dtype), bk=nrm(ks[7], (1, d_model)),
            wv=nrm(ks[8], (d_model, d_model), matmul_dtype), bv=nrm(ks[9], (1, d_model)),
            wo=nrm(ks[10], (d_model, d_model), matmul_dtype), bo=nrm(ks[11], (1, d_model)),
        ))
    ko = jax.random.split(jax.random.fold_in(key, 1000), 2)
    return dict(
        layers=layers,
        after_norm_g=jnp.ones((1, d_model), jnp.float32),
        after_norm_b=jnp.zeros((1, d_model), jnp.float32),
        out_w=nrm(ko[0], (d_model, vocab), matmul_dtype),
        out_b=nrm(ko[1], (1, vocab)),
    )


# ----------------------------------------------------------------------------
# Pure-JAX reference (f32 math on the same weights) for a sanity check
# ----------------------------------------------------------------------------
def _ref_forward(hs_pad, hlens, ys_in_pad, ys_in_lens, params, *, n_head, kernel_size):
    B, T, D = ys_in_pad.shape
    S = hs_pad.shape[1]
    tgt_mask = (jnp.arange(T)[None, :] < ys_in_lens[:, None]).astype(jnp.float32)[:, :, None]
    mem_add = ((1.0 - (jnp.arange(S)[None, :] < hlens[:, None]).astype(jnp.float32))
               * -10000.0)[:, None, :]
    lpad = (kernel_size - 1) // 2
    rpad = kernel_size - 1 - lpad
    dk = D // n_head
    x = ys_in_pad
    for p in params["layers"]:
        residual = x
        t = _layer_norm(x, p["ln1_g"], p["ln1_b"])
        h = jnp.maximum(t @ p["ffn_w1"] + p["ffn_b1"], 0.0)
        h = _layer_norm(h, p["lnf_g"], p["lnf_b"])
        t = h @ p["ffn_w2"]
        tn = _layer_norm(t, p["ln2_g"], p["ln2_b"])
        masked = tn * tgt_mask
        pad = jnp.pad(masked, ((0, 0), (lpad, rpad), (0, 0)))
        conv = sum(pad[:, kk:kk + T, :] * p["fsmn_w"][kk][None, None, :]
                   for kk in range(kernel_size))
        x = residual + (conv + masked) * tgt_mask
        residual = x
        xn = _layer_norm(x, p["ln3_g"], p["ln3_b"])
        q = (xn @ p["wq"] + p["bq"]).reshape(B, T, n_head, dk).transpose(0, 2, 1, 3)
        k = (hs_pad @ p["wk"] + p["bk"]).reshape(B, S, n_head, dk).transpose(0, 2, 1, 3)
        v = (hs_pad @ p["wv"] + p["bv"]).reshape(B, S, n_head, dk).transpose(0, 2, 1, 3)
        scores = jnp.einsum("bhtd,bhsd->bhts", q, k) / math.sqrt(dk) + mem_add[:, :, None, :]
        attn = jax.nn.softmax(scores, axis=-1)
        ctx = jnp.einsum("bhts,bhsd->bhtd", attn, v).transpose(0, 2, 1, 3).reshape(B, T, D)
        x = residual + ctx @ p["wo"] + p["bo"]
    xn = _layer_norm(x, params["after_norm_g"], params["after_norm_b"])
    return xn @ params["out_w"] + params["out_b"]


# ----------------------------------------------------------------------------
if __name__ == "__main__":
    # Small but aligned shapes: T, S multiples of 8; D multiple of 128; dk=128
    # (as in production Paraformer d_model=512 / 4 heads); vocab deliberately
    # NOT a multiple of 128 to exercise the padded vocab tiling.
    B, T, S = 2, 16, 32          # batch, target length, memory length
    D, H, DFF, K, V = 256, 2, 512, 11, 300
    NUM_LAYERS = 2

    key = jax.random.PRNGKey(0)
    k1, k2, kp = jax.random.split(key, 3)
    # bf16-representable memory so kernel (bf16 mem) and f32 reference agree
    hs_pad = jax.random.normal(k1, (B, S, D), dtype=jnp.float32)
    hs_pad = hs_pad.astype(jnp.bfloat16).astype(jnp.float32)
    ys_in_pad = jax.random.normal(k2, (B, T, D), dtype=jnp.float32)
    hlens = jnp.array([S, 20], dtype=jnp.int32)
    ys_in_lens = jnp.array([T, 9], dtype=jnp.int32)

    params = init_params(kp, num_layers=NUM_LAYERS, d_model=D, d_ff=DFF,
                         n_head=H, kernel_size=K, vocab=V,
                         matmul_dtype=jnp.bfloat16)

    # f32 reference on the same (bf16-stored) weights
    with jax.default_matmul_precision("highest"):
        ref = _ref_forward(hs_pad, hlens, ys_in_pad, ys_in_lens, params,
                           n_head=H, kernel_size=K)
        ref = jax.block_until_ready(ref)

    fwd = jax.jit(functools.partial(paraformer_decoder_san_forward,
                                    n_head=H, kernel_size=K))
    logits, out_lens = fwd(hs_pad, hlens, ys_in_pad, ys_in_lens, params)
    logits = jax.block_until_ready(logits)

    assert logits.shape == (B, T, V), logits.shape
    assert out_lens.shape == (B,)
    np.testing.assert_allclose(np.asarray(logits), np.asarray(ref),
                               atol=5e-2, rtol=5e-2)
    print("KERNEL_OK")
</pallas_src>

<mosaic_0001>
module attributes {stable_mosaic.version = 11 : i64} {
  func.func @_decoder_stack_kernel(%arg0: i32, %arg1: memref<2x16x256xf32, #tpu.memory_space<vmem>>, %arg2: memref<2x16x1xf32, #tpu.memory_space<vmem>>, %arg3: memref<2x32x256xbf16, #tpu.memory_space<vmem>>, %arg4: memref<2x1x32xf32, #tpu.memory_space<vmem>>, %arg5: memref<1x256xf32, #tpu.memory_space<vmem>>, %arg6: memref<1x256xf32, #tpu.memory_space<vmem>>, %arg7: memref<1x10x256xf32, #tpu.memory_space<vmem>>, %arg8: memref<1x3x512xf32, #tpu.memory_space<vmem>>, %arg9: memref<1x11x256xf32, #tpu.memory_space<vmem>>, %arg10: memref<1x256x512xbf16, #tpu.memory_space<vmem>>, %arg11: memref<1x512x256xbf16, #tpu.memory_space<vmem>>, %arg12: memref<1x256x256xbf16, #tpu.memory_space<vmem>>, %arg13: memref<1x256x512xbf16, #tpu.memory_space<vmem>>, %arg14: memref<1x256x256xbf16, #tpu.memory_space<vmem>>, %arg15: memref<2x16x256xf32, #tpu.memory_space<vmem>>, %arg16: memref<32x256xf32, #tpu.memory_space<vmem>>, %arg17: memref<2x29x256xf32, #tpu.memory_space<vmem>>) attributes {dimension_semantics = [#tpu.dimension_semantics<arbitrary>], iteration_bounds = array<i64: 2>, scalar_prefetch = 0 : i64, scratch_operands = 2 : i64, tpu.core_type = #tpu.core_type<tc>, window_params = [{pipeline_mode = #tpu.pipeline_mode<synchronous>, transform_indices = @transform_0, window_bounds = array<i64: 2, 16, 256>}, {pipeline_mode = #tpu.pipeline_mode<synchronous>, transform_indices = @transform_1, window_bounds = array<i64: 2, 16, 1>}, {pipeline_mode = #tpu.pipeline_mode<synchronous>, transform_indices = @transform_2, window_bounds = array<i64: 2, 32, 256>}, {pipeline_mode = #tpu.pipeline_mode<synchronous>, transform_indices = @transform_3, window_bounds = array<i64: 2, 1, 32>}, {pipeline_mode = #tpu.pipeline_mode<synchronous>, transform_indices = @transform_4, window_bounds = array<i64: 1, 256>}, {pipeline_mode = #tpu.pipeline_mode<synchronous>, transform_indices = @transform_5, window_bounds = array<i64: 1, 256>}, {transform_indices = @transform_6, window_bounds = array<i64: 1, 10, 256>}, {transform_indices = @transform_7, window_bounds = array<i64: 1, 3, 512>}, {transform_indices = @transform_8, window_bounds = array<i64: 1, 11, 256>}, {transform_indices = @transform_9, window_bounds = array<i64: 1, 256, 512>}, {transform_indices = @transform_10, window_bounds = array<i64: 1, 512, 256>}, {transform_indices = @transform_11, window_bounds = array<i64: 1, 256, 256>}, {transform_indices = @transform_12, window_bounds = array<i64: 1, 256, 512>}, {transform_indices = @transform_13, window_bounds = array<i64: 1, 256, 256>}, {pipeline_mode = #tpu.pipeline_mode<synchronous>, transform_indices = @transform_14, window_bounds = array<i64: 2, 16, 256>}]} {
    %c0_i32 = arith.constant 0 : i32
    %0 = arith.cmpi eq, %arg0, %c0_i32 : i32
    %1 = arith.extui %0 : i1 to i32
    %c0_i32_0 = arith.constant 0 : i32
    %2 = arith.cmpi ne, %1, %c0_i32_0 : i32
    scf.if %2 {
      %c0_94 = arith.constant 0 : index
      %c0_95 = arith.constant 0 : index
      %c0_96 = arith.constant 0 : index
      %291 = vector.load %arg1[%c0_94, %c0_95, %c0_96] : memref<2x16x256xf32, #tpu.memory_space<vmem>>, vector<2x16x256xf32>
      %292 = vector.shape_cast %291 : vector<2x16x256xf32> to vector<32x256xf32>
      %c0_97 = arith.constant 0 : index
      %c0_98 = arith.constant 0 : index
      %293 = vector.load %arg16[%c0_97, %c0_98] : memref<32x256xf32, #tpu.memory_space<vmem>>, vector<32x256xf32>
      tpu.vector_store %arg16[%c0_97, %c0_98], %292 {strides = array<i32>} : memref<32x256xf32, #tpu.memory_space<vmem>>, vector<32x256xf32>,
      %cst_99 = arith.constant 0.000000e+00 : f32
      %294 = vector.broadcast %cst_99 : f32 to vector<2x29x256xf32>
      %c0_100 = arith.constant 0 : index
      %c0_101 = arith.constant 0 : index
      %c0_102 = arith.constant 0 : index
      %295 = vector.load %arg17[%c0_100, %c0_101, %c0_102] : memref<2x29x256xf32, #tpu.memory_space<vmem>>, vector<2x29x256xf32>
      tpu.vector_store %arg17[%c0_100, %c0_101, %c0_102], %294 {strides = array<i32>} : memref<2x29x256xf32, #tpu.memory_space<vmem>>, vector<2x29x256xf32>,
    } else {
    }
    %c0 = arith.constant 0 : index
    %c0_1 = arith.constant 0 : index
    %3 = vector.load %arg16[%c0, %c0_1] : memref<32x256xf32, #tpu.memory_space<vmem>>, vector<32x256xf32>
    %c0_2 = arith.constant 0 : index
    %c0_3 = arith.constant 0 : index
    %c0_4 = arith.constant 0 : index
    %4 = vector.load %arg2[%c0_2, %c0_3, %c0_4] : memref<2x16x1xf32, #tpu.memory_space<vmem>>, vector<2x16x1xf32>
    %5 = vector.shape_cast %4 : vector<2x16x1xf32> to vector<32x1xf32>
    %c0_5 = arith.constant 0 : index
    %c0_6 = arith.constant 0 : index
    %c0_7 = arith.constant 0 : index
    %6 = vector.load %arg4[%c0_5, %c0_6, %c0_7] : memref<2x1x32xf32, #tpu.memory_space<vmem>>, vector<2x1x32xf32>
    %c0_8 = arith.constant 0 : index
    %c0_9 = arith.constant 0 : index
    %c0_10 = arith.constant 0 : index
    %7 = vector.load %arg7[%c0_8, %c0_9, %c0_10] : memref<1x10x256xf32, #tpu.memory_space<vmem>>, vector<1x10x256xf32>
    %8 = vector.shape_cast %7 : vector<1x10x256xf32> to vector<10x256xf32>
    %9 = vector.extract_strided_slice %8 {offsets = [0, 0], sizes = [1, 256], strides = [1, 1]} : vector<10x256xf32> to vector<1x256xf32>
    %10 = vector.extract_strided_slice %8 {offsets = [1, 0], sizes = [1, 256], strides = [1, 1]} : vector<10x256xf32> to vector<1x256xf32>
    %11 = vector.extract_strided_slice %8 {offsets = [2, 0], sizes = [1, 256], strides = [1, 1]} : vector<10x256xf32> to vector<1x256xf32>
    %12 = vector.extract_strided_slice %8 {offsets = [3, 0], sizes = [1, 256], strides = [1, 1]} : vector<10x256xf32> to vector<1x256xf32>
    %13 = vector.extract_strided_slice %8 {offsets = [4, 0], sizes = [1, 256], strides = [1, 1]} : vector<10x256xf32> to vector<1x256xf32>
    %14 = vector.extract_strided_slice %8 {offsets = [5, 0], sizes = [1, 256], strides = [1, 1]} : vector<10x256xf32> to vector<1x256xf32>
    %15 = vector.extract_strided_slice %8 {offsets = [6, 0], sizes = [1, 256], strides = [1, 1]} : vector<10x256xf32> to vector<1x256xf32>
    %16 = vector.extract_strided_slice %8 {offsets = [7, 0], sizes = [1, 256], strides = [1, 1]} : vector<10x256xf32> to vector<1x256xf32>
    %17 = vector.extract_strided_slice %8 {offsets = [8, 0], sizes = [1, 256], strides = [1, 1]} : vector<10x256xf32> to vector<1x256xf32>
    %18 = vector.extract_strided_slice %8 {offsets = [9, 0], sizes = [1, 256], strides = [1, 1]} : vector<10x256xf32> to vector<1x256xf32>
    %c0_11 = arith.constant 0 : index
    %c0_12 = arith.constant 0 : index
    %c0_13 = arith.constant 0 : index
    %19 = vector.load %arg8[%c0_11, %c0_12, %c0_13] : memref<1x3x512xf32, #tpu.memory_space<vmem>>, vector<1x3x512xf32>
    %20 = vector.shape_cast %19 : vector<1x3x512xf32> to vector<3x512xf32>
    %21 = vector.extract_strided_slice %20 {offsets = [0, 0], sizes = [1, 512], strides = [1, 1]} : vector<3x512xf32> to vector<1x512xf32>
    %22 = vector.extract_strided_slice %20 {offsets = [1, 0], sizes = [1, 512], strides = [1, 1]} : vector<3x512xf32> to vector<1x512xf32>
    %23 = vector.extract_strided_slice %20 {offsets = [2, 0], sizes = [1, 512], strides = [1, 1]} : vector<3x512xf32> to vector<1x512xf32>
    %cst = arith.constant dense<0.000000e+00> : vector<32xf32>
    %24 = vector.multi_reduction <add>, %3, %cst [1] : vector<32x256xf32> to vector<32xf32>
    %25 = vector.shape_cast %24 : vector<32xf32> to vector<32x1xf32>
    %cst_14 = arith.constant 2.560000e+02 : f32
    %26 = vector.broadcast %cst_14 : f32 to vector<32x1xf32>
    %27 = arith.divf %25, %26 : vector<32x1xf32>
    %28 = vector.broadcast %27 : vector<32x1xf32> to vector<32x256xf32>
    %29 = arith.subf %3, %28 : vector<32x256xf32>
    %30 = arith.mulf %29, %29 : vector<32x256xf32>
    %cst_15 = arith.constant dense<0.000000e+00> : vector<32xf32>
    %31 = vector.multi_reduction <add>, %30, %cst_15 [1] : vector<32x256xf32> to vector<32xf32>
    %32 = vector.shape_cast %31 : vector<32xf32> to vector<32x1xf32>
    %cst_16 = arith.constant 2.560000e+02 : f32
    %33 = vector.broadcast %cst_16 : f32 to vector<32x1xf32>
    %34 = arith.divf %32, %33 : vector<32x1xf32>
    %35 = vector.broadcast %27 : vector<32x1xf32> to vector<32x256xf32>
    %36 = arith.subf %3, %35 : vector<32x256xf32>
    %cst_17 = arith.constant 9.99999974E-6 : f32
    %37 = vector.broadcast %cst_17 : f32 to vector<32x1xf32>
    %38 = arith.addf %34, %37 : vector<32x1xf32>
    %39 = math.rsqrt %38 : vector<32x1xf32>
    %40 = vector.broadcast %39 : vector<32x1xf32> to vector<32x256xf32>
    %41 = arith.mulf %36, %40 : vector<32x256xf32>
    %42 = vector.broadcast %9 : vector<1x256xf32> to vector<32x256xf32>
    %43 = arith.mulf %41, %42 : vector<32x256xf32>
    %44 = vector.broadcast %10 : vector<1x256xf32> to vector<32x256xf32>
    %45 = arith.addf %43, %44 : vector<32x256xf32>
    %46 = arith.truncf %45 : vector<32x256xf32> to vector<32x256xbf16>
    %c0_18 = arith.constant 0 : index
    %c0_19 = arith.constant 0 : index
    %c0_20 = arith.constant 0 : index
    %47 = vector.load %arg10[%c0_18, %c0_19, %c0_20] : memref<1x256x512xbf16, #tpu.memory_space<vmem>>, vector<1x256x512xbf16>
    %48 = vector.shape_cast %47 : vector<1x256x512xbf16> to vector<256x512xbf16>
    %cst_21 = arith.constant dense<0.000000e+00> : vector<32x512xf32>
    %49 = tpu.matmul %46, %48, %cst_21 {dimension_numbers = #tpu.dot_dimension_numbers<[1], [0], [0], [1], [0, 0, 1, 1], [], []>} : vector<32x256xbf16>, vector<256x512xbf16>, vector<32x512xf32> -> vector<32x512xf32>
    %50 = vector.broadcast %21 : vector<1x512xf32> to vector<32x512xf32>
    %51 = arith.addf %49, %50 : vector<32x512xf32>
    %cst_22 = arith.constant 0.000000e+00 : f32
    %52 = vector.broadcast %cst_22 : f32 to vector<32x512xf32>
    %53 = arith.maximumf %51, %52 : vector<32x512xf32>
    %cst_23 = arith.constant dense<0.000000e+00> : vector<32xf32>
    %54 = vector.multi_reduction <add>, %53, %cst_23 [1] : vector<32x512xf32> to vector<32xf32>
    %55 = vector.shape_cast %54 : vector<32xf32> to vector<32x1xf32>
    %cst_24 = arith.constant 5.120000e+02 : f32
    %56 = vector.broadcast %cst_24 : f32 to vector<32x1xf32>
    %57 = arith.divf %55, %56 : vector<32x1xf32>
    %58 = vector.broadcast %57 : vector<32x1xf32> to vector<32x512xf32>
    %59 = arith.subf %53, %58 : vector<32x512xf32>
    %60 = arith.mulf %59, %59 : vector<32x512xf32>
    %cst_25 = arith.constant dense<0.000000e+00> : vector<32xf32>
    %61 = vector.multi_reduction <add>, %60, %cst_25 [1] : vector<32x512xf32> to vector<32xf32>
    %62 = vector.shape_cast %61 : vector<32xf32> to vector<32x1xf32>
    %cst_26 = arith.constant 5.120000e+02 : f32
    %63 = vector.broadcast %cst_26 : f32 to vector<32x1xf32>
    %64 = arith.divf %62, %63 : vector<32x1xf32>
    %65 = vector.broadcast %57 : vector<32x1xf32> to vector<32x512xf32>
    %66 = arith.subf %53, %65 : vector<32x512xf32>
    %cst_27 = arith.constant 9.99999974E-6 : f32
    %67 = vector.broadcast %cst_27 : f32 to vector<32x1xf32>
    %68 = arith.addf %64, %67 : vector<32x1xf32>
    %69 = math.rsqrt %68 : vector<32x1xf32>
    %70 = vector.broadcast %69 : vector<32x1xf32> to vector<32x512xf32>
    %71 = arith.mulf %66, %70 : vector<32x512xf32>
    %72 = vector.broadcast %22 : vector<1x512xf32> to vector<32x512xf32>
    %73 = arith.mulf %71, %72 : vector<32x512xf32>
    %74 = vector.broadcast %23 : vector<1x512xf32> to vector<32x512xf32>
    %75 = arith.addf %73, %74 : vector<32x512xf32>
    %76 = arith.truncf %75 : vector<32x512xf32> to vector<32x512xbf16>
    %c0_28 = arith.constant 0 : index
    %c0_29 = arith.constant 0 : index
    %c0_30 = arith.constant 0 : index
    %77 = vector.load %arg11[%c0_28, %c0_29, %c0_30] : memref<1x512x256xbf16, #tpu.memory_space<vmem>>, vector<1x512x256xbf16>
    %78 = vector.shape_cast %77 : vector<1x512x256xbf16> to vector<512x256xbf16>
    %cst_31 = arith.constant dense<0.000000e+00> : vector<32x256xf32>
    %79 = tpu.matmul %76, %78, %cst_31 {dimension_numbers = #tpu.dot_dimension_numbers<[1], [0], [0], [1], [0, 0, 1, 1], [], []>} : vector<32x512xbf16>, vector<512x256xbf16>, vector<32x256xf32> -> vector<32x256xf32>
    %cst_32 = arith.constant dense<0.000000e+00> : vector<32xf32>
    %80 = vector.multi_reduction <add>, %79, %cst_32 [1] : vector<32x256xf32> to vector<32xf32>
    %81 = vector.shape_cast %80 : vector<32xf32> to vector<32x1xf32>
    %cst_33 = arith.constant 2.560000e+02 : f32
    %82 = vector.broadcast %cst_33 : f32 to vector<32x1xf32>
    %83 = arith.divf %81, %82 : vector<32x1xf32>
    %84 = vector.broadcast %83 : vector<32x1xf32> to vector<32x256xf32>
    %85 = arith.subf %79, %84 : vector<32x256xf32>
    %86 = arith.mulf %85, %85 : vector<32x256xf32>
    %cst_34 = arith.constant dense<0.000000e+00> : vector<32xf32>
    %87 = vector.multi_reduction <add>, %86, %cst_34 [1] : vector<32x256xf32> to vector<32xf32>
    %88 = vector.shape_cast %87 : vector<32xf32> to vector<32x1xf32>
    %cst_35 = arith.constant 2.560000e+02 : f32
    %89 = vector.broadcast %cst_35 : f32 to vector<32x1xf32>
    %90 = arith.divf %88, %89 : vector<32x1xf32>
    %91 = vector.broadcast %83 : vector<32x1xf32> to vector<32x256xf32>
    %92 = arith.subf %79, %91 : vector<32x256xf32>
    %cst_36 = arith.constant 9.99999974E-6 : f32
    %93 = vector.broadcast %cst_36 : f32 to vector<32x1xf32>
    %94 = arith.addf %90, %93 : vector<32x1xf32>
    %95 = math.rsqrt %94 : vector<32x1xf32>
    %96 = vector.broadcast %95 : vector<32x1xf32> to vector<32x256xf32>
    %97 = arith.mulf %92, %96 : vector<32x256xf32>
    %98 = vector.broadcast %11 : vector<1x256xf32> to vector<32x256xf32>
    %99 = arith.mulf %97, %98 : vector<32x256xf32>
    %100 = vector.broadcast %12 : vector<1x256xf32> to vector<32x256xf32>
    %101 = arith.addf %99, %100 : vector<32x256xf32>
    %102 = vector.broadcast %5 : vector<32x1xf32> to vector<32x256xf32>
    %103 = arith.mulf %101, %102 : vector<32x256xf32>
    %104 = vector.shape_cast %103 : vector<32x256xf32> to vector<2x16x256xf32>
    %c0_37 = arith.constant 0 : index
    %c8 = arith.constant 8 : index
    %c0_38 = arith.constant 0 : index
    %105 = vector.load %arg17[%c0_37, %c8, %c0_38] : memref<2x29x256xf32, #tpu.memory_space<vmem>>, vector<2x16x256xf32>
    tpu.vector_store %arg17[%c0_37, %c8, %c0_38], %104 {strides = array<i32>} : memref<2x29x256xf32, #tpu.memory_space<vmem>>, vector<2x16x256xf32>,
    %c0_39 = arith.constant 0 : index
    %c0_40 = arith.constant 0 : index
    %c0_41 = arith.constant 0 : index
    %106 = vector.load %arg9[%c0_39, %c0_40, %c0_41] : memref<1x11x256xf32, #tpu.memory_space<vmem>>, vector<1x11x256xf32>
    %107 = vector.shape_cast %106 : vector<1x11x256xf32> to vector<11x256xf32>
    %cst_42 = arith.constant 0.000000e+00 : f32
    %108 = vector.broadcast %cst_42 : f32 to vector<2x16x256xf32>
    %c0_43 = arith.constant 0 : index
    %c3 = arith.constant 3 : index
    %c0_44 = arith.constant 0 : index
    %109 = vector.load %arg17[%c0_43, %c3, %c0_44] : memref<2x29x256xf32, #tpu.memory_space<vmem>>, vector<2x16x256xf32>
    %110 = vector.extract_strided_slice %107 {offsets = [0, 0], sizes = [1, 256], strides = [1, 1]} : vector<11x256xf32> to vector<1x256xf32>
    %111 = vector.shape_cast %110 : vector<1x256xf32> to vector<1x1x256xf32>
    %112 = vector.broadcast %111 : vector<1x1x256xf32> to vector<2x16x256xf32>
    %113 = arith.mulf %109, %112 : vector<2x16x256xf32>
    %114 = arith.addf %108, %113 : vector<2x16x256xf32>
    %c0_45 = arith.constant 0 : index
    %c4 = arith.constant 4 : index
    %c0_46 = arith.constant 0 : index
    %115 = vector.load %arg17[%c0_45, %c4, %c0_46] : memref<2x29x256xf32, #tpu.memory_space<vmem>>, vector<2x16x256xf32>
    %116 = vector.extract_strided_slice %107 {offsets = [1, 0], sizes = [1, 256], strides = [1, 1]} : vector<11x256xf32> to vector<1x256xf32>
    %117 = vector.shape_cast %116 : vector<1x256xf32> to vector<1x1x256xf32>
    %118 = vector.broadcast %117 : vector<1x1x256xf32> to vector<2x16x256xf32>
    %119 = arith.mulf %115, %118 : vector<2x16x256xf32>
    %120 = arith.addf %114, %119 : vector<2x16x256xf32>
    %c0_47 = arith.constant 0 : index
    %c5 = arith.constant 5 : index
    %c0_48 = arith.constant 0 : index
    %121 = vector.load %arg17[%c0_47, %c5, %c0_48] : memref<2x29x256xf32, #tpu.memory_space<vmem>>, vector<2x16x256xf32>
    %122 = vector.extract_strided_slice %107 {offsets = [2, 0], sizes = [1, 256], strides = [1, 1]} : vector<11x256xf32> to vector<1x256xf32>
    %123 = vector.shape_cast %122 : vector<1x256xf32> to vector<1x1x256xf32>
    %124 = vector.broadcast %123 : vector<1x1x256xf32> to vector<2x16x256xf32>
    %125 = arith.mulf %121, %124 : vector<2x16x256xf32>
    %126 = arith.addf %120, %125 : vector<2x16x256xf32>
    %c0_49 = arith.constant 0 : index
    %c6 = arith.constant 6 : index
    %c0_50 = arith.constant 0 : index
    %127 = vector.load %arg17[%c0_49, %c6, %c0_50] : memref<2x29x256xf32, #tpu.memory_space<vmem>>, vector<2x16x256xf32>
    %128 = vector.extract_strided_slice %107 {offsets = [3, 0], sizes = [1, 256], strides = [1, 1]} : vector<11x256xf32> to vector<1x256xf32>
    %129 = vector.shape_cast %128 : vector<1x256xf32> to vector<1x1x256xf32>
    %130 = vector.broadcast %129 : vector<1x1x256xf32> to vector<2x16x256xf32>
    %131 = arith.mulf %127, %130 : vector<2x16x256xf32>
    %132 = arith.addf %126, %131 : vector<2x16x256xf32>
    %c0_51 = arith.constant 0 : index
    %c7 = arith.constant 7 : index
    %c0_52 = arith.constant 0 : index
    %133 = vector.load %arg17[%c0_51, %c7, %c0_52] : memref<2x29x256xf32, #tpu.memory_space<vmem>>, vector<2x16x256xf32>
    %134 = vector.extract_strided_slice %107 {offsets = [4, 0], sizes = [1, 256], strides = [1, 1]} : vector<11x256xf32> to vector<1x256xf32>
    %135 = vector.shape_cast %134 : vector<1x256xf32> to vector<1x1x256xf32>
    %136 = vector.broadcast %135 : vector<1x1x256xf32> to vector<2x16x256xf32>
    %137 = arith.mulf %133, %136 : vector<2x16x256xf32>
    %138 = arith.addf %132, %137 : vector<2x16x256xf32>
    %c0_53 = arith.constant 0 : index
    %c8_54 = arith.constant 8 : index
    %c0_55 = arith.constant 0 : index
    %139 = vector.load %arg17[%c0_53, %c8_54, %c0_55] : memref<2x29x256xf32, #tpu.memory_space<vmem>>, vector<2x16x256xf32>
    %140 = vector.extract_strided_slice %107 {offsets = [5, 0], sizes = [1, 256], strides = [1, 1]} : vector<11x256xf32> to vector<1x256xf32>
    %141 = vector.shape_cast %140 : vector<1x256xf32> to vector<1x1x256xf32>
    %142 = vector.broadcast %141 : vector<1x1x256xf32> to vector<2x16x256xf32>
    %143 = arith.mulf %139, %142 : vector<2x16x256xf32>
    %144 = arith.addf %138, %143 : vector<2x16x256xf32>
    %c0_56 = arith.constant 0 : index
    %c9 = arith.constant 9 : index
    %c0_57 = arith.constant 0 : index
    %145 = vector.load %arg17[%c0_56, %c9, %c0_57] : memref<2x29x256xf32, #tpu.memory_space<vmem>>, vector<2x16x256xf32>
    %146 = vector.extract_strided_slice %107 {offsets = [6, 0], sizes = [1, 256], strides = [1, 1]} : vector<11x256xf32> to vector<1x256xf32>
    %147 = vector.shape_cast %146 : vector<1x256xf32> to vector<1x1x256xf32>
    %148 = vector.broadcast %147 : vector<1x1x256xf32> to vector<2x16x256xf32>
    %149 = arith.mulf %145, %148 : vector<2x16x256xf32>
    %150 = arith.addf %144, %149 : vector<2x16x256xf32>
    %c0_58 = arith.constant 0 : index
    %c10 = arith.constant 10 : index
    %c0_59 = arith.constant 0 : index
    %151 = vector.load %arg17[%c0_58, %c10, %c0_59] : memref<2x29x256xf32, #tpu.memory_space<vmem>>, vector<2x16x256xf32>
    %152 = vector.extract_strided_slice %107 {offsets = [7, 0], sizes = [1, 256], strides = [1, 1]} : vector<11x256xf32> to vector<1x256xf32>
    %153 = vector.shape_cast %152 : vector<1x256xf32> to vector<1x1x256xf32>
    %154 = vector.broadcast %153 : vector<1x1x256xf32> to vector<2x16x256xf32>
    %155 = arith.mulf %151, %154 : vector<2x16x256xf32>
    %156 = arith.addf %150, %155 : vector<2x16x256xf32>
    %c0_60 = arith.constant 0 : index
    %c11 = arith.constant 11 : index
    %c0_61 = arith.constant 0 : index
    %157 = vector.load %arg17[%c0_60, %c11, %c0_61] : memref<2x29x256xf32, #tpu.memory_space<vmem>>, vector<2x16x256xf32>
    %158 = vector.extract_strided_slice %107 {offsets = [8, 0], sizes = [1, 256], strides = [1, 1]} : vector<11x256xf32> to vector<1x256xf32>
    %159 = vector.shape_cast %158 : vector<1x256xf32> to vector<1x1x256xf32>
    %160 = vector.broadcast %159 : vector<1x1x256xf32> to vector<2x16x256xf32>
    %161 = arith.mulf %157, %160 : vector<2x16x256xf32>
    %162 = arith.addf %156, %161 : vector<2x16x256xf32>
    %c0_62 = arith.constant 0 : index
    %c12 = arith.constant 12 : index
    %c0_63 = arith.constant 0 : index
    %163 = vector.load %arg17[%c0_62, %c12, %c0_63] : memref<2x29x256xf32, #tpu.memory_space<vmem>>, vector<2x16x256xf32>
    %164 = vector.extract_strided_slice %107 {offsets = [9, 0], sizes = [1, 256], strides = [1, 1]} : vector<11x256xf32> to vector<1x256xf32>
    %165 = vector.shape_cast %164 : vector<1x256xf32> to vector<1x1x256xf32>
    %166 = vector.broadcast %165 : vector<1x1x256xf32> to vector<2x16x256xf32>
    %167 = arith.mulf %163, %166 : vector<2x16x256xf32>
    %168 = arith.addf %162, %167 : vector<2x16x256xf32>
    %c0_64 = arith.constant 0 : index
    %c13 = arith.constant 13 : index
    %c0_65 = arith.constant 0 : index
    %169 = vector.load %arg17[%c0_64, %c13, %c0_65] : memref<2x29x256xf32, #tpu.memory_space<vmem>>, vector<2x16x256xf32>
    %170 = vector.extract_strided_slice %107 {offsets = [10, 0], sizes = [1, 256], strides = [1, 1]} : vector<11x256xf32> to vector<1x256xf32>
    %171 = vector.shape_cast %170 : vector<1x256xf32> to vector<1x1x256xf32>
    %172 = vector.broadcast %171 : vector<1x1x256xf32> to vector<2x16x256xf32>
    %173 = arith.mulf %169, %172 : vector<2x16x256xf32>
    %174 = arith.addf %168, %173 : vector<2x16x256xf32>
    %175 = vector.shape_cast %174 : vector<2x16x256xf32> to vector<32x256xf32>
    %176 = arith.addf %175, %103 : vector<32x256xf32>
    %177 = vector.broadcast %5 : vector<32x1xf32> to vector<32x256xf32>
    %178 = arith.mulf %176, %177 : vector<32x256xf32>
    %179 = arith.addf %3, %178 : vector<32x256xf32>
    %cst_66 = arith.constant dense<0.000000e+00> : vector<32xf32>
    %180 = vector.multi_reduction <add>, %179, %cst_66 [1] : vector<32x256xf32> to vector<32xf32>
    %181 = vector.shape_cast %180 : vector<32xf32> to vector<32x1xf32>
    %cst_67 = arith.constant 2.560000e+02 : f32
    %182 = vector.broadcast %cst_67 : f32 to vector<32x1xf32>
    %183 = arith.divf %181, %182 : vector<32x1xf32>
    %184 = vector.broadcast %183 : vector<32x1xf32> to vector<32x256xf32>
    %185 = arith.subf %179, %184 : vector<32x256xf32>
    %186 = arith.mulf %185, %185 : vector<32x256xf32>
    %cst_68 = arith.constant dense<0.000000e+00> : vector<32xf32>
    %187 = vector.multi_reduction <add>, %186, %cst_68 [1] : vector<32x256xf32> to vector<32xf32>
    %188 = vector.shape_cast %187 : vector<32xf32> to vector<32x1xf32>
    %cst_69 = arith.constant 2.560000e+02 : f32
    %189 = vector.broadcast %cst_69 : f32 to vector<32x1xf32>
    %190 = arith.divf %188, %189 : vector<32x1xf32>
    %191 = vector.broadcast %183 : vector<32x1xf32> to vector<32x256xf32>
    %192 = arith.subf %179, %191 : vector<32x256xf32>
    %cst_70 = arith.constant 9.99999974E-6 : f32
    %193 = vector.broadcast %cst_70 : f32 to vector<32x1xf32>
    %194 = arith.addf %190, %193 : vector<32x1xf32>
    %195 = math.rsqrt %194 : vector<32x1xf32>
    %196 = vector.broadcast %195 : vector<32x1xf32> to vector<32x256xf32>
    %197 = arith.mulf %192, %196 : vector<32x256xf32>
    %198 = vector.broadcast %13 : vector<1x256xf32> to vector<32x256xf32>
    %199 = arith.mulf %197, %198 : vector<32x256xf32>
    %200 = vector.broadcast %14 : vector<1x256xf32> to vector<32x256xf32>
    %201 = arith.addf %199, %200 : vector<32x256xf32>
    %c0_71 = arith.constant 0 : index
    %c0_72 = arith.constant 0 : index
    %c0_73 = arith.constant 0 : index
    %202 = vector.load %arg3[%c0_71, %c0_72, %c0_73] : memref<2x32x256xbf16, #tpu.memory_space<vmem>>, vector<2x32x256xbf16>
    %203 = vector.shape_cast %202 : vector<2x32x256xbf16> to vector<64x256xbf16>
    %204 = arith.truncf %201 : vector<32x256xf32> to vector<32x256xbf16>
    %c0_74 = arith.constant 0 : index
    %c0_75 = arith.constant 0 : index
    %c0_76 = arith.constant 0 : index
    %205 = vector.load %arg12[%c0_74, %c0_75, %c0_76] : memref<1x256x256xbf16, #tpu.memory_space<vmem>>, vector<1x256x256xbf16>
    %206 = vector.shape_cast %205 : vector<1x256x256xbf16> to vector<256x256xbf16>
    %cst_77 = arith.constant dense<0.000000e+00> : vector<32x256xf32>
    %207 = tpu.matmul %204, %206, %cst_77 {dimension_numbers = #tpu.dot_dimension_numbers<[1], [0], [0], [1], [0, 0, 1, 1], [], []>} : vector<32x256xbf16>, vector<256x256xbf16>, vector<32x256xf32> -> vector<32x256xf32>
    %208 = vector.broadcast %15 : vector<1x256xf32> to vector<32x256xf32>
    %209 = arith.addf %207, %208 : vector<32x256xf32>
    %c0_78 = arith.constant 0 : index
    %c0_79 = arith.constant 0 : index
    %c0_80 = arith.constant 0 : index
    %210 = vector.load %arg13[%c0_78, %c0_79, %c0_80] : memref<1x256x512xbf16, #tpu.memory_space<vmem>>, vector<1x256x512xbf16>
    %211 = vector.shape_cast %210 : vector<1x256x512xbf16> to vector<256x512xbf16>
    %cst_81 = arith.constant dense<0.000000e+00> : vector<64x512xf32>
    %212 = tpu.matmul %203, %211, %cst_81 {dimension_numbers = #tpu.dot_dimension_numbers<[1], [0], [0], [1], [0, 0, 1, 1], [], []>} : vector<64x256xbf16>, vector<256x512xbf16>, vector<64x512xf32> -> vector<64x512xf32>
    %213 = vector.extract_strided_slice %212 {offsets = [0, 0], sizes = [64, 256], strides = [1, 1]} : vector<64x512xf32> to vector<64x256xf32>
    %214 = vector.broadcast %16 : vector<1x256xf32> to vector<64x256xf32>
    %215 = arith.addf %213, %214 : vector<64x256xf32>
    %216 = vector.extract_strided_slice %212 {offsets = [0, 256], sizes = [64, 256], strides = [1, 1]} : vector<64x512xf32> to vector<64x256xf32>
    %217 = vector.broadcast %17 : vector<1x256xf32> to vector<64x256xf32>
    %218 = arith.addf %216, %217 : vector<64x256xf32>
    %219 = vector.extract_strided_slice %209 {offsets = [0, 0], sizes = [16, 128], strides = [1, 1]} : vector<32x256xf32> to vector<16x128xf32>
    %220 = vector.extract_strided_slice %209 {offsets = [0, 128], sizes = [16, 128], strides = [1, 1]} : vector<32x256xf32> to vector<16x128xf32>
    %221 = vector.extract_strided_slice %209 {offsets = [16, 0], sizes = [16, 128], strides = [1, 1]} : vector<32x256xf32> to vector<16x128xf32>
    %222 = vector.extract_strided_slice %209 {offsets = [16, 128], sizes = [16, 128], strides = [1, 1]} : vector<32x256xf32> to vector<16x128xf32>
    %223 = vector.shape_cast %219 : vector<16x128xf32> to vector<1x16x128xf32>
    %224 = vector.shape_cast %220 : vector<16x128xf32> to vector<1x16x128xf32>
    %225 = vector.shape_cast %221 : vector<16x128xf32> to vector<1x16x128xf32>
    %226 = vector.shape_cast %222 : vector<16x128xf32> to vector<1x16x128xf32>
    %227 = tpu.concatenate %223, %224, %225, %226 in 0 : vector<1x16x128xf32>, vector<1x16x128xf32>, vector<1x16x128xf32>, vector<1x16x128xf32> -> vector<4x16x128xf32>
    %228 = arith.truncf %227 : vector<4x16x128xf32> to vector<4x16x128xbf16>
    %229 = vector.extract_strided_slice %215 {offsets = [0, 0], sizes = [32, 128], strides = [1, 1]} : vector<64x256xf32> to vector<32x128xf32>
    %230 = vector.extract_strided_slice %215 {offsets = [0, 128], sizes = [32, 128], strides = [1, 1]} : vector<64x256xf32> to vector<32x128xf32>
    %231 = vector.extract_strided_slice %215 {offsets = [32, 0], sizes = [32, 128], strides = [1, 1]} : vector<64x256xf32> to vector<32x128xf32>
    %232 = vector.extract_strided_slice %215 {offsets = [32, 128], sizes = [32, 128], strides = [1, 1]} : vector<64x256xf32> to vector<32x128xf32>
    %233 = vector.shape_cast %229 : vector<32x128xf32> to vector<1x32x128xf32>
    %234 = vector.shape_cast %230 : vector<32x128xf32> to vector<1x32x128xf32>
    %235 = vector.shape_cast %231 : vector<32x128xf32> to vector<1x32x128xf32>
    %236 = vector.shape_cast %232 : vector<32x128xf32> to vector<1x32x128xf32>
    %237 = tpu.concatenate %233, %234, %235, %236 in 0 : vector<1x32x128xf32>, vector<1x32x128xf32>, vector<1x32x128xf32>, vector<1x32x128xf32> -> vector<4x32x128xf32>
    %238 = arith.truncf %237 : vector<4x32x128xf32> to vector<4x32x128xbf16>
    %239 = vector.extract_strided_slice %218 {offsets = [0, 0], sizes = [32, 128], strides = [1, 1]} : vector<64x256xf32> to vector<32x128xf32>
    %240 = vector.extract_strided_slice %218 {offsets = [0, 128], sizes = [32, 128], strides = [1, 1]} : vector<64x256xf32> to vector<32x128xf32>
    %241 = vector.extract_strided_slice %218 {offsets = [32, 0], sizes = [32, 128], strides = [1, 1]} : vector<64x256xf32> to vector<32x128xf32>
    %242 = vector.extract_strided_slice %218 {offsets = [32, 128], sizes = [32, 128], strides = [1, 1]} : vector<64x256xf32> to vector<32x128xf32>
    %243 = vector.shape_cast %239 : vector<32x128xf32> to vector<1x32x128xf32>
    %244 = vector.shape_cast %240 : vector<32x128xf32> to vector<1x32x128xf32>
    %245 = vector.shape_cast %241 : vector<32x128xf32> to vector<1x32x128xf32>
    %246 = vector.shape_cast %242 : vector<32x128xf32> to vector<1x32x128xf32>
    %247 = tpu.concatenate %243, %244, %245, %246 in 0 : vector<1x32x128xf32>, vector<1x32x128xf32>, vector<1x32x128xf32>, vector<1x32x128xf32> -> vector<4x32x128xf32>
    %248 = arith.truncf %247 : vector<4x32x128xf32> to vector<4x32x128xbf16>
    "tpu.trace_start"() <{level = 10 : i32, message = "gtd,gsd->gts"}> : () -> ()
    %cst_82 = arith.constant dense<0.000000e+00> : vector<4x16x32xf32>
    %249 = tpu.matmul %228, %238, %cst_82 {dimension_numbers = #tpu.dot_dimension_numbers<[2], [2], [1], [1], [0, 0, 0, 1, 1, 1], [0], [0]>} : vector<4x16x128xbf16>, vector<4x32x128xbf16>, vector<4x16x32xf32> -> vector<4x16x32xf32>
    "tpu.trace_stop"() : () -> ()
    %cst_83 = arith.constant 0.0883883461 : f32
    %250 = vector.broadcast %cst_83 : f32 to vector<4x16x32xf32>
    %251 = arith.mulf %249, %250 : vector<4x16x32xf32>
    %252 = vector.shape_cast %251 : vector<4x16x32xf32> to vector<2x2x16x32xf32>
    %253 = vector.shape_cast %6 : vector<2x1x32xf32> to vector<2x1x1x32xf32>
    %254 = vector.broadcast %253 : vector<2x1x1x32xf32> to vector<2x2x16x32xf32>
    %255 = arith.addf %252, %254 : vector<2x2x16x32xf32>
    %cst_84 = arith.constant dense<0xFF800000> : vector<2x2x16xf32>
    %256 = vector.multi_reduction <maximumf>, %255, %cst_84 [3] : vector<2x2x16x32xf32> to vector<2x2x16xf32>
    %257 = vector.shape_cast %256 : vector<2x2x16xf32> to vector<2x2x16x1xf32>
    %258 = vector.broadcast %257 : vector<2x2x16x1xf32> to vector<2x2x16x32xf32>
    %259 = arith.subf %255, %258 : vector<2x2x16x32xf32>
    %260 = math.exp %259 : vector<2x2x16x32xf32>
    %cst_85 = arith.constant dense<0.000000e+00> : vector<2x2x16xf32>
    %261 = vector.multi_reduction <add>, %260, %cst_85 [3] : vector<2x2x16x32xf32> to vector<2x2x16xf32>
    %262 = vector.shape_cast %261 : vector<2x2x16xf32> to vector<2x2x16x1xf32>
    %263 = tpu.reciprocal %262 {approx = true} : vector<2x2x16x1xf32> -> vector<2x2x16x1xf32>
    %264 = vector.broadcast %263 : vector<2x2x16x1xf32> to vector<2x2x16x32xf32>
    %265 = arith.mulf %260, %264 : vector<2x2x16x32xf32>
    %266 = vector.shape_cast %265 : vector<2x2x16x32xf32> to vector<4x16x32xf32>
    %267 = arith.truncf %266 : vector<4x16x32xf32> to vector<4x16x32xbf16>
    "tpu.trace_start"() <{level = 10 : i32, message = "gts,gsd->gtd"}> : () -> ()
    %cst_86 = arith.constant dense<0.000000e+00> : vector<4x16x128xf32>
    %268 = tpu.matmul %267, %248, %cst_86 {dimension_numbers = #tpu.dot_dimension_numbers<[2], [1], [1], [2], [0, 0, 0, 1, 1, 2], [0], [0]>} : vector<4x16x32xbf16>, vector<4x32x128xbf16>, vector<4x16x128xf32> -> vector<4x16x128xf32>
    "tpu.trace_stop"() : () -> ()
    %269 = vector.extract_strided_slice %268 {offsets = [0, 0, 0], sizes = [1, 16, 128], strides = [1, 1, 1]} : vector<4x16x128xf32> to vector<1x16x128xf32>
    %270 = vector.shape_cast %269 : vector<1x16x128xf32> to vector<16x128xf32>
    %271 = vector.extract_strided_slice %268 {offsets = [1, 0, 0], sizes = [1, 16, 128], strides = [1, 1, 1]} : vector<4x16x128xf32> to vector<1x16x128xf32>
    %272 = vector.shape_cast %271 : vector<1x16x128xf32> to vector<16x128xf32>
    %273 = tpu.concatenate %270, %272 in 1 : vector<16x128xf32>, vector<16x128xf32> -> vector<16x256xf32>
    %274 = vector.extract_strided_slice %268 {offsets = [2, 0, 0], sizes = [1, 16, 128], strides = [1, 1, 1]} : vector<4x16x128xf32> to vector<1x16x128xf32>
    %275 = vector.shape_cast %274 : vector<1x16x128xf32> to vector<16x128xf32>
    %276 = vector.extract_strided_slice %268 {offsets = [3, 0, 0], sizes = [1, 16, 128], strides = [1, 1, 1]} : vector<4x16x128xf32> to vector<1x16x128xf32>
    %277 = vector.shape_cast %276 : vector<1x16x128xf32> to vector<16x128xf32>
    %278 = tpu.concatenate %275, %277 in 1 : vector<16x128xf32>, vector<16x128xf32> -> vector<16x256xf32>
    %279 = tpu.concatenate %273, %278 in 0 : vector<16x256xf32>, vector<16x256xf32> -> vector<32x256xf32>
    %280 = arith.truncf %279 : vector<32x256xf32> to vector<32x256xbf16>
    %c0_87 = arith.constant 0 : index
    %c0_88 = arith.constant 0 : index
    %c0_89 = arith.constant 0 : index
    %281 = vector.load %arg14[%c0_87, %c0_88, %c0_89] : memref<1x256x256xbf16, #tpu.memory_space<vmem>>, vector<1x256x256xbf16>
    %282 = vector.shape_cast %281 : vector<1x256x256xbf16> to vector<256x256xbf16>
    %cst_90 = arith.constant dense<0.000000e+00> : vector<32x256xf32>
    %283 = tpu.matmul %280, %282, %cst_90 {dimension_numbers = #tpu.dot_dimension_numbers<[1], [0], [0], [1], [0, 0, 1, 1], [], []>} : vector<32x256xbf16>, vector<256x256xbf16>, vector<32x256xf32> -> vector<32x256xf32>
    %284 = vector.broadcast %18 : vector<1x256xf32> to vector<32x256xf32>
    %285 = arith.addf %283, %284 : vector<32x256xf32>
    %286 = arith.addf %179, %285 : vector<32x256xf32>
    %c0_91 = arith.constant 0 : index
    %c0_92 = arith.constant 0 : index
    %287 = vector.load %arg16[%c0_91, %c0_92] : memref<32x256xf32, #tpu.memory_space<vmem>>, vector<32x256xf32>
    tpu.vector_store %arg16[%c0_91, %c0_92], %286 {strides = array<i32>} : memref<32x256xf32, #tpu.memory_space<vmem>>, vector<32x256xf32>,
    %c1_i32 = arith.constant 1 : i32
    %288 = arith.cmpi eq, %arg0, %c1_i32 : i32
    %289 = arith.extui %288 : i1 to i32
    %c0_i32_93 = arith.constant 0 : i32
    %290 = arith.cmpi ne, %289, %c0_i32_93 : i32
    scf.if %290 {
      %c0_94 = arith.constant 0 : index
      %c0_95 = arith.constant 0 : index
      %291 = vector.load %arg5[%c0_94, %c0_95] : memref<1x256xf32, #tpu.memory_space<vmem>>, vector<1x256xf32>
      %c0_96 = arith.constant 0 : index
      %c0_97 = arith.constant 0 : index
      %292 = vector.load %arg6[%c0_96, %c0_97] : memref<1x256xf32, #tpu.memory_space<vmem>>, vector<1x256xf32>
      %cst_98 = arith.constant dense<0.000000e+00> : vector<32xf32>
      %293 = vector.multi_reduction <add>, %286, %cst_98 [1] : vector<32x256xf32> to vector<32xf32>
      %294 = vector.shape_cast %293 : vector<32xf32> to vector<32x1xf32>
      %cst_99 = arith.constant 2.560000e+02 : f32
      %295 = vector.broadcast %cst_99 : f32 to vector<32x1xf32>
      %296 = arith.divf %294, %295 : vector<32x1xf32>
      %297 = vector.broadcast %296 : vector<32x1xf32> to vector<32x256xf32>
      %298 = arith.subf %286, %297 : vector<32x256xf32>
      %299 = arith.mulf %298, %298 : vector<32x256xf32>
      %cst_100 = arith.constant dense<0.000000e+00> : vector<32xf32>
      %300 = vector.multi_reduction <add>, %299, %cst_100 [1] : vector<32x256xf32> to vector<32xf32>
      %301 = vector.shape_cast %300 : vector<32xf32> to vector<32x1xf32>
      %cst_101 = arith.constant 2.560000e+02 : f32
      %302 = vector.broadcast %cst_101 : f32 to vector<32x1xf32>
      %303 = arith.divf %301, %302 : vector<32x1xf32>
      %304 = vector.broadcast %296 : vector<32x1xf32> to vector<32x256xf32>
      %305 = arith.subf %286, %304 : vector<32x256xf32>
      %cst_102 = arith.constant 9.99999974E-6 : f32
      %306 = vector.broadcast %cst_102 : f32 to vector<32x1xf32>
      %307 = arith.addf %303, %306 : vector<32x1xf32>
      %308 = math.rsqrt %307 : vector<32x1xf32>
      %309 = vector.broadcast %308 : vector<32x1xf32> to vector<32x256xf32>
      %310 = arith.mulf %305, %309 : vector<32x256xf32>
      %311 = vector.broadcast %291 : vector<1x256xf32> to vector<32x256xf32>
      %312 = arith.mulf %310, %311 : vector<32x256xf32>
      %313 = vector.broadcast %292 : vector<1x256xf32> to vector<32x256xf32>
      %314 = arith.addf %312, %313 : vector<32x256xf32>
      %315 = vector.shape_cast %314 : vector<32x256xf32> to vector<2x16x256xf32>
      %c0_103 = arith.constant 0 : index
      %c0_104 = arith.constant 0 : index
      %c0_105 = arith.constant 0 : index
      %316 = vector.load %arg15[%c0_103, %c0_104, %c0_105] : memref<2x16x256xf32, #tpu.memory_space<vmem>>, vector<2x16x256xf32>
      tpu.vector_store %arg15[%c0_103, %c0_104, %c0_105], %315 {strides = array<i32>} : memref<2x16x256xf32, #tpu.memory_space<vmem>>, vector<2x16x256xf32>,
    } else {
    }
    return
  }
  func.func @transform_0(%arg0: i32) -> (i32, i32, i32) {
    %c0_i32 = arith.constant 0 : i32
    %c0_i32_0 = arith.constant 0 : i32
    %c0_i32_1 = arith.constant 0 : i32
    %c0_i32_2 = arith.constant 0 : i32
    return %c0_i32, %c0_i32_0, %c0_i32_1 : i32, i32, i32
  }
  func.func @transform_1(%arg0: i32) -> (i32, i32, i32) {
    %c0_i32 = arith.constant 0 : i32
    %c0_i32_0 = arith.constant 0 : i32
    %c0_i32_1 = arith.constant 0 : i32
    %c0_i32_2 = arith.constant 0 : i32
    return %c0_i32, %c0_i32_0, %c0_i32_1 : i32, i32, i32
  }
  func.func @transform_2(%arg0: i32) -> (i32, i32, i32) {
    %c0_i32 = arith.constant 0 : i32
    %c0_i32_0 = arith.constant 0 : i32
    %c0_i32_1 = arith.constant 0 : i32
    %c0_i32_2 = arith.constant 0 : i32
    return %c0_i32, %c0_i32_0, %c0_i32_1 : i32, i32, i32
  }
  func.func @transform_3(%arg0: i32) -> (i32, i32, i32) {
    %c0_i32 = arith.constant 0 : i32
    %c0_i32_0 = arith.constant 0 : i32
    %c0_i32_1 = arith.constant 0 : i32
    %c0_i32_2 = arith.constant 0 : i32
    return %c0_i32, %c0_i32_0, %c0_i32_1 : i32, i32, i32
  }
  func.func @transform_4(%arg0: i32) -> (i32, i32) {
    %c0_i32 = arith.constant 0 : i32
    %c0_i32_0 = arith.constant 0 : i32
    %c0_i32_1 = arith.constant 0 : i32
    return %c0_i32, %c0_i32_0 : i32, i32
  }
  func.func @transform_5(%arg0: i32) -> (i32, i32) {
    %c0_i32 = arith.constant 0 : i32
    %c0_i32_0 = arith.constant 0 : i32
    %c0_i32_1 = arith.constant 0 : i32
    return %c0_i32, %c0_i32_0 : i32, i32
  }
  func.func @transform_6(%arg0: i32) -> (i32, i32, i32) {
    %c0_i32 = arith.constant 0 : i32
    %c0_i32_0 = arith.constant 0 : i32
    %c0_i32_1 = arith.constant 0 : i32
    return %arg0, %c0_i32, %c0_i32_0 : i32, i32, i32
  }
  func.func @transform_7(%arg0: i32) -> (i32, i32, i32) {
    %c0_i32 = arith.constant 0 : i32
    %c0_i32_0 = arith.constant 0 : i32
    %c0_i32_1 = arith.constant 0 : i32
    return %arg0, %c0_i32, %c0_i32_0 : i32, i32, i32
  }
  func.func @transform_8(%arg0: i32) -> (i32, i32, i32) {
    %c0_i32 = arith.constant 0 : i32
    %c0_i32_0 = arith.constant 0 : i32
    %c0_i32_1 = arith.constant 0 : i32
    return %arg0, %c0_i32, %c0_i32_0 : i32, i32, i32
  }
  func.func @transform_9(%arg0: i32) -> (i32, i32, i32) {
    %c0_i32 = arith.constant 0 : i32
    %c0_i32_0 = arith.constant 0 : i32
    %c0_i32_1 = arith.constant 0 : i32
    return %arg0, %c0_i32, %c0_i32_0 : i32, i32, i32
  }
  func.func @transform_10(%arg0: i32) -> (i32, i32, i32) {
    %c0_i32 = arith.constant 0 : i32
    %c0_i32_0 = arith.constant 0 : i32
    %c0_i32_1 = arith.constant 0 : i32
    return %arg0, %c0_i32, %c0_i32_0 : i32, i32, i32
  }
  func.func @transform_11(%arg0: i32) -> (i32, i32, i32) {
    %c0_i32 = arith.constant 0 : i32
    %c0_i32_0 = arith.constant 0 : i32
    %c0_i32_1 = arith.constant 0 : i32
    return %arg0, %c0_i32, %c0_i32_0 : i32, i32, i32
  }
  func.func @transform_12(%arg0: i32) -> (i32, i32, i32) {
    %c0_i32 = arith.constant 0 : i32
    %c0_i32_0 = arith.constant 0 : i32
    %c0_i32_1 = arith.constant 0 : i32
    return %arg0, %c0_i32, %c0_i32_0 : i32, i32, i32
  }
  func.func @transform_13(%arg0: i32) -> (i32, i32, i32) {
    %c0_i32 = arith.constant 0 : i32
    %c0_i32_0 = arith.constant 0 : i32
    %c0_i32_1 = arith.constant 0 : i32
    return %arg0, %c0_i32, %c0_i32_0 : i32, i32, i32
  }
  func.func @transform_14(%arg0: i32) -> (i32, i32, i32) {
    %c0_i32 = arith.constant 0 : i32
    %c0_i32_0 = arith.constant 0 : i32
    %c0_i32_1 = arith.constant 0 : i32
    %c0_i32_2 = arith.constant 0 : i32
    return %c0_i32, %c0_i32_0, %c0_i32_1 : i32, i32, i32
  }
}

module attributes {stable_mosaic.version = 11 : i64} {
  func.func @_final_proj_kernel(%arg0: i32, %arg1: memref<32x256xbf16, #tpu.memory_space<vmem>>, %arg2: memref<256x384xbf16, #tpu.memory_space<vmem>>, %arg3: memref<1x384xf32, #tpu.memory_space<vmem>>, %arg4: memref<32x384xf32, #tpu.memory_space<vmem>>) attributes {dimension_semantics = [#tpu.dimension_semantics<parallel>], iteration_bounds = array<i64: 1>, scalar_prefetch = 0 : i64, scratch_operands = 0 : i64, tpu.core_type = #tpu.core_type<tc>, window_params = [{pipeline_mode = #tpu.pipeline_mode<synchronous>, transform_indices = @transform_0, window_bounds = array<i64: 32, 256>}, {transform_indices = @transform_1, window_bounds = array<i64: 256, 384>}, {transform_indices = @transform_2, window_bounds = array<i64: 1, 384>}, {transform_indices = @transform_3, window_bounds = array<i64: 32, 384>}]} {
    %c0 = arith.constant 0 : index
    %c0_0 = arith.constant 0 : index
    %0 = vector.load %arg1[%c0, %c0_0] : memref<32x256xbf16, #tpu.memory_space<vmem>>, vector<32x256xbf16>
    %c0_1 = arith.constant 0 : index
    %c0_2 = arith.constant 0 : index
    %1 = vector.load %arg2[%c0_1, %c0_2] : memref<256x384xbf16, #tpu.memory_space<vmem>>, vector<256x384xbf16>
    %cst = arith.constant dense<0.000000e+00> : vector<32x384xf32>
    %2 = tpu.matmul %0, %1, %cst {dimension_numbers = #tpu.dot_dimension_numbers<[1], [0], [0], [1], [0, 0, 1, 1], [], []>} : vector<32x256xbf16>, vector<256x384xbf16>, vector<32x384xf32> -> vector<32x384xf32>
    %c0_3 = arith.constant 0 : index
    %c0_4 = arith.constant 0 : index
    %3 = vector.load %arg3[%c0_3, %c0_4] : memref<1x384xf32, #tpu.memory_space<vmem>>, vector<1x384xf32>
    %4 = vector.broadcast %3 : vector<1x384xf32> to vector<32x384xf32>
    %5 = arith.addf %2, %4 : vector<32x384xf32>
    %c0_5 = arith.constant 0 : index
    %c0_6 = arith.constant 0 : index
    %6 = vector.load %arg4[%c0_5, %c0_6] : memref<32x384xf32, #tpu.memory_space<vmem>>, vector<32x384xf32>
    tpu.vector_store %arg4[%c0_5, %c0_6], %5 {strides = array<i32>} : memref<32x384xf32, #tpu.memory_space<vmem>>, vector<32x384xf32>,
    return
  }
  func.func @transform_0(%arg0: i32) -> (i32, i32) {
    %c0_i32 = arith.constant 0 : i32
    %c0_i32_0 = arith.constant 0 : i32
    %c0_i32_1 = arith.constant 0 : i32
    return %c0_i32, %c0_i32_0 : i32, i32
  }
  func.func @transform_1(%arg0: i32) -> (i32, i32) {
    %c0_i32 = arith.constant 0 : i32
    %c0_i32_0 = arith.constant 0 : i32
    return %c0_i32, %arg0 : i32, i32
  }
  func.func @transform_2(%arg0: i32) -> (i32, i32) {
    %c0_i32 = arith.constant 0 : i32
    %c0_i32_0 = arith.constant 0 : i32
    return %c0_i32, %arg0 : i32, i32
  }
  func.func @transform_3(%arg0: i32) -> (i32, i32) {
    %c0_i32 = arith.constant 0 : i32
    %c0_i32_0 = arith.constant 0 : i32
    return %c0_i32, %arg0 : i32, i32
  }
}

</mosaic_0001>

<llo_original>
// kernel: paraformer_decoder_san_forward.3
$region0: #{paraformer_decoder_san_forward.3}
  #allocation0 [shape = 'u32[]', space=smem, size = 0x4, offset = 0x4, fixed_abs, tag = 'smem constant byte address 0x4 - core index']
  #allocation1 [shape = 'u32[144,128]{1,0:T(1,128)}', space=vmem, size = 0x12000, scoped, tag = 'internal scratch']
  %s0 = inlined_call_operand.hbm [shape: bf16[32,256], index: 0, kind: input, shape index: {}]
  %s1 = inlined_call_operand.hbm [shape: bf16[256,384], index: 1, kind: input, shape index: {}]
  %s2 = inlined_call_operand.hbm [shape: f32[1,384], index: 2, kind: input, shape index: {}]
  %s3 = inlined_call_operand.hbm [shape: f32[32,384], index: 3, kind: output, shape index: {}]
  %s4 = sld [smem:[#allocation0]]
  $region34: #{paraformer_decoder_san_forward.3} parent=0
    _
  %s6 = ssub.s32 1, %s4
  %s7 = scalar_select 0, %s6, %s4
  $region1: #{paraformer_decoder_san_forward.3} parent=0
    #allocation2 [shape = 'u8[16384]{0}', space=vmem, size = 0x4000, scoped, tag = 'input window, operand 0, single buffered']
    #allocation3 [shape = 's32[1]{0}', space=sflag, size = 0x4, scoped, tag = 'scoped memory for paraformer_decoder_san_forward.3']
    #allocation4 [shape = 's32[1]{0}', space=sflag, size = 0x4, scoped, tag = 'scoped memory for paraformer_decoder_san_forward.3']
    #allocation5 [shape = 'u8[196608]{0}', space=vmem, size = 0x30000, scoped, tag = 'input window, operand 1, single buffered']
    #allocation6 [shape = 's32[1]{0}', space=sflag, size = 0x4, scoped, tag = 'scoped memory for paraformer_decoder_san_forward.3']
    #allocation7 [shape = 'u8[1536]{0}', space=vmem, size = 0x800, scoped, tag = 'input window, operand 2, single buffered']
    #allocation8 [shape = 'u8[49152]{0}', space=vmem, size = 0xc000, scoped, tag = 'output window, operand 0, single buffered']
    %8 = vsyncpa [#allocation3], 0
    %9 = vsyncpa [#allocation6], 0
    %10 = vsyncpa [#allocation4], 0
    // Predicated region
    $region2: #{paraformer_decoder_san_forward.3} parent=1 // pred_check
      _
    $region3: #{paraformer_decoder_san_forward.3} parent=1 // pred_check_branch
      %12 = sbr.rel (0) target = $region5
    $region4: #{paraformer_decoder_san_forward.3} parent=1 // pred_region
      %s14 = ssub.s32 512, 512
      %15 = vsyncadd [#allocation3], %s14
      %s16 = sshll.u32 [#allocation2], 4
      %s17 = int_to_ptr.vmem [resolvable:$true] %s16
      %22 = dma.hbm_to_vmem [thread:$0]  %s0, 512, %s17, [#allocation3], 128, 128, 8
    $region5: #{paraformer_decoder_san_forward.3} parent=1 // pred_fallthru
      _
    // Predicated region
    $region6: #{paraformer_decoder_san_forward.3} parent=1 // pred_check
      _
    $region7: #{paraformer_decoder_san_forward.3} parent=1 // pred_check_branch
      %24 = sbr.rel (0) target = $region9
    $region8: #{paraformer_decoder_san_forward.3} parent=1 // pred_region
      %s26 = ssub.s32 6144, 6144
      %27 = vsyncadd [#allocation6], %s26
      %s28 = sshll.u32 [#allocation5], 4
      %s29 = int_to_ptr.vmem [resolvable:$true] %s28
      %34 = dma.hbm_to_vmem [thread:$0]  %s1, 6144, %s29, [#allocation6], 192, 192, 12
    $region9: #{paraformer_decoder_san_forward.3} parent=1 // pred_fallthru
      _
    // Predicated region
    $region10: #{paraformer_decoder_san_forward.3} parent=1 // pred_check
      _
    $region11: #{paraformer_decoder_san_forward.3} parent=1 // pred_check_branch
      %36 = sbr.rel (0) target = $region13
    $region12: #{paraformer_decoder_san_forward.3} parent=1 // pred_region
      %s38 = ssub.s32 48, 48
      %39 = vsyncadd [#allocation6], %s38
      %s41 = sshll.u32 [#allocation7], 4
      %s42 = int_to_ptr.vmem [resolvable:$true] %s41
      %44 = dma.hbm_to_vmem [thread:$0]  %s2, 48, %s42, [#allocation6]
    $region13: #{paraformer_decoder_san_forward.3} parent=1 // pred_fallthru
      _
    // Predicated region
    $region14: #{paraformer_decoder_san_forward.3} parent=1 // pred_check
      _
    $region15: #{paraformer_decoder_san_forward.3} parent=1 // pred_check_branch
      %46 = sbr.rel (0) target = $region17
    $region16: #{paraformer_decoder_san_forward.3} parent=1 // pred_region
      %47 = dma.done [#allocation3], 512
    $region17: #{paraformer_decoder_san_forward.3} parent=1 // pred_fallthru
      _
    // Predicated region
    $region18: #{paraformer_decoder_san_forward.3} parent=1 // pred_check
      _
    $region19: #{paraformer_decoder_san_forward.3} parent=1 // pred_check_branch
      %49 = sbr.rel (0) target = $region21
    $region20: #{paraformer_decoder_san_forward.3} parent=1 // pred_region
      %50 = dma.done [#allocation6], 6144
    $region21: #{paraformer_decoder_san_forward.3} parent=1 // pred_fallthru
      _
    // Predicated region
    $region22: #{paraformer_decoder_san_forward.3} parent=1 // pred_check
      _
    $region23: #{paraformer_decoder_san_forward.3} parent=1 // pred_check_branch
      %52 = sbr.rel (0) target = $region25
    $region24: #{paraformer_decoder_san_forward.3} parent=1 // pred_region
      %53 = dma.done [#allocation6], 48
    $region25: #{paraformer_decoder_san_forward.3} parent=1 // pred_fallthru
      _
    %v55 = vld [vmem:[#allocation2] sm:$0xff]
    %v56 = vld [vmem:[#allocation2 + $0x8] sm:$0xff]
    %v57 = vld [vmem:[#allocation2 + $0x10] sm:$0xff]
    %v58 = vld [vmem:[#allocation2 + $0x18] sm:$0xff]
    %v59 = vld [vmem:[#allocation5] sm:$0xff]
    %v60 = vld [vmem:[#allocation5 + $0x8] sm:$0xf]
    %v61 = vld [vmem:[#allocation5 + $0xc] sm:$0xff]
    %v62 = vld [vmem:[#allocation5 + $0x14] sm:$0xf]
    %v63 = vld [vmem:[#allocation5 + $0x18] sm:$0xff]
    %v64 = vld [vmem:[#allocation5 + $0x20] sm:$0xf]
    %v65 = vld [vmem:[#allocation5 + $0x24] sm:$0xff]
    %v66 = vld [vmem:[#allocation5 + $0x2c] sm:$0xf]
    %v67 = vld [vmem:[#allocation5 + $0x30] sm:$0xff]
    %v68 = vld [vmem:[#allocation5 + $0x38] sm:$0xf]
    %v69 = vld [vmem:[#allocation5 + $0x3c] sm:$0xff]
    %v70 = vld [vmem:[#allocation5 + $0x44] sm:$0xf]
    %v71 = vld [vmem:[#allocation5 + $0x48] sm:$0xff]
    %v72 = vld [vmem:[#allocation5 + $0x50] sm:$0xf]
    %v73 = vld [vmem:[#allocation5 + $0x54] sm:$0xff]
    %v74 = vld [vmem:[#allocation5 + $0x5c] sm:$0xf]
    %v75 = vld [vmem:[#allocation5 + $0x60] sm:$0xff]
    %v76 = vld [vmem:[#allocation5 + $0x68] sm:$0xf]
    %v77 = vld [vmem:[#allocation5 + $0x6c] sm:$0xff]
    %v78 = vld [vmem:[#allocation5 + $0x74] sm:$0xf]
    %v79 = vld [vmem:[#allocation5 + $0x78] sm:$0xff]
    %v80 = vld [vmem:[#allocation5 + $0x80] sm:$0xf]
    %v81 = vld [vmem:[#allocation5 + $0x84] sm:$0xff]
    %v82 = vld [vmem:[#allocation5 + $0x8c] sm:$0xf]
    %v83 = vld [vmem:[#allocation5 + $0x90] sm:$0xff]
    %v84 = vld [vmem:[#allocation5 + $0x98] sm:$0xf]
    %v85 = vld [vmem:[#allocation5 + $0x9c] sm:$0xff]
    %v86 = vld [vmem:[#allocation5 + $0xa4] sm:$0xf]
    %v87 = vld [vmem:[#allocation5 + $0xa8] sm:$0xff]
    %v88 = vld [vmem:[#allocation5 + $0xb0] sm:$0xf]
    %v89 = vld [vmem:[#allocation5 + $0xb4] sm:$0xff]
    %v90 = vld [vmem:[#allocation5 + $0xbc] sm:$0xf]
    %v91 = vld [vmem:[#allocation5 + $0xc0] sm:$0xff]
    %v92 = vld [vmem:[#allocation5 + $0xc8] sm:$0xf]
    %v93 = vld [vmem:[#allocation5 + $0xcc] sm:$0xff]
    %v94 = vld [vmem:[#allocation5 + $0xd4] sm:$0xf]
    %v95 = vld [vmem:[#allocation5 + $0xd8] sm:$0xff]
    %v96 = vld [vmem:[#allocation5 + $0xe0] sm:$0xf]
    %v97 = vld [vmem:[#allocation5 + $0xe4] sm:$0xff]
    %v98 = vld [vmem:[#allocation5 + $0xec] sm:$0xf]
    %v99 = vld [vmem:[#allocation5 + $0xf0] sm:$0xff]
    %v100 = vld [vmem:[#allocation5 + $0xf8] sm:$0xf]
    %v101 = vld [vmem:[#allocation5 + $0xfc] sm:$0xff]
    %v102 = vld [vmem:[#allocation5 + $0x104] sm:$0xf]
    %v103 = vld [vmem:[#allocation5 + $0x108] sm:$0xff]
    %v104 = vld [vmem:[#allocation5 + $0x110] sm:$0xf]
    %v105 = vld [vmem:[#allocation5 + $0x114] sm:$0xff]
    %v106 = vld [vmem:[#allocation5 + $0x11c] sm:$0xf]
    %v107 = vld [vmem:[#allocation5 + $0x120] sm:$0xff]
    %v108 = vld [vmem:[#allocation5 + $0x128] sm:$0xf]
    %v109 = vld [vmem:[#allocation5 + $0x12c] sm:$0xff]
    %v110 = vld [vmem:[#allocation5 + $0x134] sm:$0xf]
    %v111 = vld [vmem:[#allocation5 + $0x138] sm:$0xff]
    %v112 = vld [vmem:[#allocation5 + $0x140] sm:$0xf]
    %v113 = vld [vmem:[#allocation5 + $0x144] sm:$0xff]
    %v114 = vld [vmem:[#allocation5 + $0x14c] sm:$0xf]
    %v115 = vld [vmem:[#allocation5 + $0x150] sm:$0xff]
    %v116 = vld [vmem:[#allocation5 + $0x158] sm:$0xf]
    %v117 = vld [vmem:[#allocation5 + $0x15c] sm:$0xff]
    %v118 = vld [vmem:[#allocation5 + $0x164] sm:$0xf]
    %v119 = vld [vmem:[#allocation5 + $0x168] sm:$0xff]
    %v120 = vld [vmem:[#allocation5 + $0x170] sm:$0xf]
    %v121 = vld [vmem:[#allocation5 + $0x174] sm:$0xff]
    %v122 = vld [vmem:[#allocation5 + $0x17c] sm:$0xf]
    %v123 = vld [vmem:[#allocation7] sm:$0x7]
    %v125 = vlaneseq
    %v126 = vshrl.u32 %v125, 7
    %v127 = vsub.s32 0, %v126
    %v128 = vrot.slane %v123, %v127
    %v129 = vlaneseq
    %v130 = vshrl.u32 %v129, 7
    %v131 = vsub.s32 1, %v130
    %v132 = vrot.slane %v123, %v131
    %v133 = vlaneseq
    %v134 = vshrl.u32 %v133, 7
    %v135 = vsub.s32 2, %v134
    %v136 = vrot.slane %v123, %v135
    %v144 = vunpack.c.l.b16 %v55
    %v145 = vunpack.c.h.b16 %v55
    %v146 = vunpack.c.l.b16 %v56
    %v147 = vunpack.c.h.b16 %v56
    %v148 = vunpack.c.l.b16 %v57
    %v149 = vunpack.c.h.b16 %v57
    %v150 = vunpack.c.l.b16 %v58
    %v151 = vunpack.c.h.b16 %v58
    %v152 = vpack.c.b16 %v146, %v144
    %v153 = vpack.c.b16 %v147, %v145
    %v154 = vpack.c.b16 %v150, %v148
    %v155 = vpack.c.b16 %v151, %v149
    %v224 = vunpack.c.l.b16 %v59
    %v225 = vunpack.c.h.b16 %v59
    %v226 = vunpack.c.l.b16 %v60
    %v227 = vunpack.c.l.b16 %v61
    %v228 = vunpack.c.h.b16 %v61
    %v229 = vunpack.c.l.b16 %v62
    %v230 = vunpack.c.l.b16 %v63
    %v231 = vunpack.c.h.b16 %v63
    %v232 = vunpack.c.l.b16 %v64
    %v233 = vunpack.c.l.b16 %v65
    %v234 = vunpack.c.h.b16 %v65
    %v235 = vunpack.c.l.b16 %v66
    %v236 = vunpack.c.l.b16 %v67
    %v237 = vunpack.c.h.b16 %v67
    %v238 = vunpack.c.l.b16 %v68
    %v239 = vunpack.c.l.b16 %v69
    %v240 = vunpack.c.h.b16 %v69
    %v241 = vunpack.c.l.b16 %v70
    %v242 = vunpack.c.l.b16 %v71
    %v243 = vunpack.c.h.b16 %v71
    %v244 = vunpack.c.l.b16 %v72
    %v245 = vunpack.c.l.b16 %v73
    %v246 = vunpack.c.h.b16 %v73
    %v247 = vunpack.c.l.b16 %v74
    %v248 = vunpack.c.l.b16 %v75
    %v249 = vunpack.c.h.b16 %v75
    %v250 = vunpack.c.l.b16 %v76
    %v251 = vunpack.c.l.b16 %v77
    %v252 = vunpack.c.h.b16 %v77
    %v253 = vunpack.c.l.b16 %v78
    %v254 = vunpack.c.l.b16 %v79
    %v255 = vunpack.c.h.b16 %v79
    %v256 = vunpack.c.l.b16 %v80
    %v257 = vunpack.c.l.b16 %v81
    %v258 = vunpack.c.h.b16 %v81
    %v259 = vunpack.c.l.b16 %v82
    %v260 = vunpack.c.l.b16 %v83
    %v261 = vunpack.c.h.b16 %v83
    %v262 = vunpack.c.l.b16 %v84
    %v263 = vunpack.c.l.b16 %v85
    %v264 = vunpack.c.h.b16 %v85
    %v265 = vunpack.c.l.b16 %v86
    %v266 = vunpack.c.l.b16 %v87
    %v267 = vunpack.c.h.b16 %v87
    %v268 = vunpack.c.l.b16 %v88
    %v269 = vunpack.c.l.b16 %v89
    %v270 = vunpack.c.h.b16 %v89
    %v271 = vunpack.c.l.b16 %v90
    %v272 = vunpack.c.l.b16 %v91
    %v273 = vunpack.c.h.b16 %v91
    %v274 = vunpack.c.l.b16 %v92
    %v275 = vunpack.c.l.b16 %v93
    %v276 = vunpack.c.h.b16 %v93
    %v277 = vunpack.c.l.b16 %v94
    %v278 = vunpack.c.l.b16 %v95
    %v279 = vunpack.c.h.b16 %v95
    %v280 = vunpack.c.l.b16 %v96
    %v281 = vunpack.c.l.b16 %v97
    %v282 = vunpack.c.h.b16 %v97
    %v283 = vunpack.c.l.b16 %v98
    %v284 = vunpack.c.l.b16 %v99
    %v285 = vunpack.c.h.b16 %v99
    %v286 = vunpack.c.l.b16 %v100
    %v287 = vunpack.c.l.b16 %v101
    %v288 = vunpack.c.h.b16 %v101
    %v289 = vunpack.c.l.b16 %v102
    %v290 = vunpack.c.l.b16 %v103
    %v291 = vunpack.c.h.b16 %v103
    %v292 = vunpack.c.l.b16 %v104
    %v293 = vunpack.c.l.b16 %v105
    %v294 = vunpack.c.h.b16 %v105
    %v295 = vunpack.c.l.b16 %v106
    %v296 = vunpack.c.l.b16 %v107
    %v297 = vunpack.c.h.b16 %v107
    %v298 = vunpack.c.l.b16 %v108
    %v299 = vunpack.c.l.b16 %v109
    %v300 = vunpack.c.h.b16 %v109
    %v301 = vunpack.c.l.b16 %v110
    %v302 = vunpack.c.l.b16 %v111
    %v303 = vunpack.c.h.b16 %v111
    %v304 = vunpack.c.l.b16 %v112
    %v305 = vunpack.c.l.b16 %v113
    %v306 = vunpack.c.h.b16 %v113
    %v307 = vunpack.c.l.b16 %v114
    %v308 = vunpack.c.l.b16 %v115
    %v309 = vunpack.c.h.b16 %v115
    %v310 = vunpack.c.l.b16 %v116
    %v311 = vunpack.c.l.b16 %v117
    %v312 = vunpack.c.h.b16 %v117
    %v313 = vunpack.c.l.b16 %v118
    %v314 = vunpack.c.l.b16 %v119
    %v315 = vunpack.c.h.b16 %v119
    %v316 = vunpack.c.l.b16 %v120
    %v317 = vunpack.c.l.b16 %v121
    %v318 = vunpack.c.h.b16 %v121
    %v319 = vunpack.c.l.b16 %v122
    %v320 = vpack.c.b16 %v227, %v224
    %v321 = vpack.c.b16 %v228, %v225
    %v322 = vpack.c.b16 %v229, %v226
    %v323 = vpack.c.b16 %v233, %v230
    %v324 = vpack.c.b16 %v234, %v231
    %v325 = vpack.c.b16 %v235, %v232
    %v326 = vpack.c.b16 %v239, %v236
    %v327 = vpack.c.b16 %v240, %v237
    %v328 = vpack.c.b16 %v241, %v238
    %v329 = vpack.c.b16 %v245, %v242
    %v330 = vpack.c.b16 %v246, %v243
    %v331 = vpack.c.b16 %v247, %v244
    %v332 = vpack.c.b16 %v251, %v248
    %v333 = vpack.c.b16 %v252, %v249
    %v334 = vpack.c.b16 %v253, %v250
    %v335 = vpack.c.b16 %v257, %v254
    %v336 = vpack.c.b16 %v258, %v255
    %v337 = vpack.c.b16 %v259, %v256
    %v338 = vpack.c.b16 %v263, %v260
    %v339 = vpack.c.b16 %v264, %v261
    %v340 = vpack.c.b16 %v265, %v262
    %v341 = vpack.c.b16 %v269, %v266
    %v342 = vpack.c.b16 %v270, %v267
    %v343 = vpack.c.b16 %v271, %v268
    %v344 = vpack.c.b16 %v275, %v272
    %v345 = vpack.c.b16 %v276, %v273
    %v346 = vpack.c.b16 %v277, %v274
    %v347 = vpack.c.b16 %v281, %v278
    %v348 = vpack.c.b16 %v282, %v279
    %v349 = vpack.c.b16 %v283, %v280
    %v350 = vpack.c.b16 %v287, %v284
    %v351 = vpack.c.b16 %v288, %v285
    %v352 = vpack.c.b16 %v289, %v286
    %v353 = vpack.c.b16 %v293, %v290
    %v354 = vpack.c.b16 %v294, %v291
    %v355 = vpack.c.b16 %v295, %v292
    %v356 = vpack.c.b16 %v299, %v296
    %v357 = vpack.c.b16 %v300, %v297
    %v358 = vpack.c.b16 %v301, %v298
    %v359 = vpack.c.b16 %v305, %v302
    %v360 = vpack.c.b16 %v306, %v303
    %v361 = vpack.c.b16 %v307, %v304
    %v362 = vpack.c.b16 %v311, %v308
    %v363 = vpack.c.b16 %v312, %v309
    %v364 = vpack.c.b16 %v313, %v310
    %v365 = vpack.c.b16 %v317, %v314
    %v366 = vpack.c.b16 %v318, %v315
    %v367 = vpack.c.b16 %v319, %v316
    %416 = vmatprep.subr.bf16.mxu0 %v321
    %417 = vmatpush1.bf16.msra.mxu0 %v320
    %418 = vmatprep.subr.bf16.mxu0 %v324
    %419 = vmatpush1.bf16.msra.mxu0 %v323
    %420 = vmatprep.subr.bf16.mxu0 %v327
    %421 = vmatpush1.bf16.msra.mxu0 %v326
    %422 = vmatprep.subr.bf16.mxu0 %v330
    %423 = vmatpush1.bf16.msra.mxu0 %v329
    %424 = vmatprep.subr.bf16.mxu0 %v333
    %425 = vmatpush1.bf16.msra.mxu0 %v332
    %426 = vmatprep.subr.bf16.mxu0 %v336
    %427 = vmatpush1.bf16.msra.mxu0 %v335
    %428 = vmatprep.subr.bf16.mxu0 %v339
    %429 = vmatpush1.bf16.msra.mxu0 %v338
    %430 = vmatprep.subr.bf16.mxu0 %v342
    %431 = vmatpush1.bf16.msra.mxu0 %v341
    %432 = vmatprep.subr.bf16.mxu0 %v345
    %433 = vmatpush1.bf16.msra.mxu0 %v344
    %434 = vmatprep.subr.bf16.mxu0 %v348
    %435 = vmatpush1.bf16.msra.mxu0 %v347
    %436 = vmatprep.subr.bf16.mxu0 %v351
    %437 = vmatpush1.bf16.msra.mxu0 %v350
    %438 = vmatprep.subr.bf16.mxu0 %v354
    %439 = vmatpush1.bf16.msra.mxu0 %v353
    %440 = vmatprep.subr.bf16.mxu0 %v357
    %441 = vmatpush1.bf16.msra.mxu0 %v356
    %442 = vmatprep.subr.bf16.mxu0 %v360
    %443 = vmatpush1.bf16.msra.mxu0 %v359
    %444 = vmatprep.subr.bf16.mxu0 %v363
    %445 = vmatpush1.bf16.msra.mxu0 %v362
    %446 = vmatprep.subr.bf16.mxu0 %v366
    %447 = vmatpush1.bf16.msra.mxu0 %v365
    %448 = vmatprep.mubr.bf16.mxu0 %v153
    %449 = vmatmul.mubr.bf16.gmra.mrb[0].mxu0 %v152
    %v450 = vpop.f32.mrb[0].mxu0
    %v451 = vadd.f32 %v128, %v450
    %v452 = vpop.f32.mrb[0].mxu0
    %v453 = vadd.f32 %v132, %v452
    %v454 = vpop.f32.mrb[0].mxu0
    %v455 = vadd.f32 %v128, %v454
    %v456 = vpop.f32.mrb[0].mxu0
    %v457 = vadd.f32 %v132, %v456
    %458 = vmatprep.mubr.bf16.mxu0 %v155
    %459 = vmatmul.mubr.bf16.gmra.mrb[0].mxu0 %v154
    %v460 = vpop.f32.mrb[0].mxu0
    %v461 = vadd.f32 %v128, %v460
    %v462 = vpop.f32.mrb[0].mxu0
    %v463 = vadd.f32 %v132, %v462
    %v464 = vpop.f32.mrb[0].mxu0
    %v465 = vadd.f32 %v128, %v464
    %v466 = vpop.f32.mrb[0].mxu0
    %v467 = vadd.f32 %v132, %v466
    %468 = vdwg.mxu0
    %469 = vmatprep.subr.bf16.mxu0 0
    %470 = vmatpush1.bf16.msra.mxu0 %v322
    %471 = vmatprep.subr.bf16.mxu0 0
    %472 = vmatpush1.bf16.msra.mxu0 %v325
    %473 = vmatprep.subr.bf16.mxu0 0
    %474 = vmatpush1.bf16.msra.mxu0 %v328
    %475 = vmatprep.subr.bf16.mxu0 0
    %476 = vmatpush1.bf16.msra.mxu0 %v331
    %477 = vmatprep.subr.bf16.mxu0 0
    %478 = vmatpush1.bf16.msra.mxu0 %v334
    %479 = vmatprep.subr.bf16.mxu0 0
    %480 = vmatpush1.bf16.msra.mxu0 %v337
    %481 = vmatprep.subr.bf16.mxu0 0
    %482 = vmatpush1.bf16.msra.mxu0 %v340
    %483 = vmatprep.subr.bf16.mxu0 0
    %484 = vmatpush1.bf16.msra.mxu0 %v343
    %485 = vmatprep.subr.bf16.mxu0 0
    %486 = vmatpush1.bf16.msra.mxu0 %v346
    %487 = vmatprep.subr.bf16.mxu0 0
    %488 = vmatpush1.bf16.msra.mxu0 %v349
    %489 = vmatprep.subr.bf16.mxu0 0
    %490 = vmatpush1.bf16.msra.mxu0 %v352
    %491 = vmatprep.subr.bf16.mxu0 0
    %492 = vmatpush1.bf16.msra.mxu0 %v355
    %493 = vmatprep.subr.bf16.mxu0 0
    %494 = vmatpush1.bf16.msra.mxu0 %v358
    %495 = vmatprep.subr.bf16.mxu0 0
    %496 = vmatpush1.bf16.msra.mxu0 %v361
    %497 = vmatprep.subr.bf16.mxu0 0
    %498 = vmatpush1.bf16.msra.mxu0 %v364
    %499 = vmatprep.subr.bf16.mxu0 0
    %500 = vmatpush1.bf16.msra.mxu0 %v367
    %501 = vmatprep.mubr.bf16.mxu0 %v153
    %502 = vmatmul.mubr.bf16.gmra.mrb[0].mxu0 %v152
    %v503 = vpop.f32.mrb[0].mxu0
    %v504 = vadd.f32 %v136, %v503
    %v505 = vpop.f32.mrb[0].mxu0
    %v506 = vpop.f32.mrb[0].mxu0
    %v507 = vadd.f32 %v136, %v506
    %v508 = vpop.f32.mrb[0].mxu0
    %509 = vmatprep.mubr.bf16.mxu0 %v155
    %510 = vmatmul.mubr.bf16.gmra.mrb[0].mxu0 %v154
    %v511 = vpop.f32.mrb[0].mxu0
    %v512 = vadd.f32 %v136, %v511
    %v513 = vpop.f32.mrb[0].mxu0
    %v514 = vpop.f32.mrb[0].mxu0
    %v515 = vadd.f32 %v136, %v514
    %v516 = vpop.f32.mrb[0].mxu0
    %517 = vdwg.mxu0
    %518 = vst [vmem:[#allocation8] sm:$0xff] %v451
    %519 = vst [vmem:[#allocation8 + $0x8] sm:$0xff] %v453
    %520 = vst [vmem:[#allocation8 + $0x10] sm:$0xff] %v504
    %521 = vst [vmem:[#allocation8 + $0x18] sm:$0xff] %v455
    %522 = vst [vmem:[#allocation8 + $0x20] sm:$0xff] %v457
    %523 = vst [vmem:[#allocation8 + $0x28] sm:$0xff] %v507
    %524 = vst [vmem:[#allocation8 + $0x30] sm:$0xff] %v461
    %525 = vst [vmem:[#allocation8 + $0x38] sm:$0xff] %v463
    %526 = vst [vmem:[#allocation8 + $0x40] sm:$0xff] %v512
    %527 = vst [vmem:[#allocation8 + $0x48] sm:$0xff] %v465
    %528 = vst [vmem:[#allocation8 + $0x50] sm:$0xff] %v467
    %529 = vst [vmem:[#allocation8 + $0x58] sm:$0xff] %v515
    // Predicated region
    $region26: #{paraformer_decoder_san_forward.3} parent=1 // pred_check
      _
    $region27: #{paraformer_decoder_san_forward.3} parent=1 // pred_check_branch
      %531 = sbr.rel (0) target = $region29
    $region28: #{paraformer_decoder_san_forward.3} parent=1 // pred_region
      %s533 = ssub.s32 1536, 1536
      %534 = vsyncadd [#allocation4], %s533
      %s535 = sshll.u32 [#allocation8], 4
      %s536 = int_to_ptr.vmem [resolvable:$true] %s535
      %541 = dma.vmem_to_hbm [thread:$0]  %s536, 1536, %s3, [#allocation4], 384, 384, 24
    $region29: #{paraformer_decoder_san_forward.3} parent=1 // pred_fallthru
      _
    // Predicated region
    $region30: #{paraformer_decoder_san_forward.3} parent=1 // pred_check
      _
    $region31: #{paraformer_decoder_san_forward.3} parent=1 // pred_check_branch
      %543 = sbr.rel (0) target = $region33
    $region32: #{paraformer_decoder_san_forward.3} parent=1 // pred_region
      %544 = dma.done [#allocation4], 1536
    $region33: #{paraformer_decoder_san_forward.3} parent=1 // pred_fallthru
      _
    %545 = vsyncpa [#allocation3], 1
    %546 = vsyncpa [#allocation6], 1
    %547 = vsyncpa [#allocation4], 1

// kernel: paraformer_decoder_san_forward.2
$region0: #{paraformer_decoder_san_forward.2}
  #allocation0 [shape = 'u32[]', space=smem, size = 0x4, offset = 0x4, fixed_abs, tag = 'smem constant byte address 0x4 - core index']
  #allocation1 [shape = 'u32[144,128]{1,0:T(1,128)}', space=vmem, size = 0x12000, scoped, tag = 'internal scratch']
  #allocation2 [shape = 'f32[32,256]{1,0:T(8,128)}', space=vmem, size = 0x8000, scoped, tag = 'scratch operand']
  #allocation3 [shape = 'f32[2,29,256]{2,1,0:T(8,128)}', space=vmem, size = 0x10000, scoped, tag = 'scratch operand']
  %s0 = inlined_call_operand.hbm [shape: f32[2,16,256], index: 0, kind: input, shape index: {}]
  %s1 = inlined_call_operand.hbm [shape: f32[2,16,1], index: 1, kind: input, shape index: {}]
  %s2 = inlined_call_operand.hbm [shape: bf16[2,32,256], index: 2, kind: input, shape index: {}]
  %s3 = inlined_call_operand.hbm [shape: f32[2,1,32], index: 3, kind: input, shape index: {}]
  %s4 = inlined_call_operand.hbm [shape: f32[1,256], index: 4, kind: input, shape index: {}]
  %s5 = inlined_call_operand.hbm [shape: f32[1,256], index: 5, kind: input, shape index: {}]
  %s6 = inlined_call_operand.hbm [shape: f32[2,10,256], index: 6, kind: input, shape index: {}]
  %s7 = inlined_call_operand.hbm [shape: f32[2,3,512], index: 7, kind: input, shape index: {}]
  %s8 = inlined_call_operand.hbm [shape: f32[2,11,256], index: 8, kind: input, shape index: {}]
  %s9 = inlined_call_operand.hbm [shape: bf16[2,256,512], index: 9, kind: input, shape index: {}]
  %s10 = inlined_call_operand.hbm [shape: bf16[2,512,256], index: 10, kind: input, shape index: {}]
  %s11 = inlined_call_operand.hbm [shape: bf16[2,256,256], index: 11, kind: input, shape index: {}]
  %s12 = inlined_call_operand.hbm [shape: bf16[2,256,512], index: 12, kind: input, shape index: {}]
  %s13 = inlined_call_operand.hbm [shape: bf16[2,256,256], index: 13, kind: input, shape index: {}]
  %s14 = inlined_call_operand.hbm [shape: f32[2,16,256], index: 14, kind: output, shape index: {}]
  %s15 = sld [smem:[#allocation0]]
  $region153: #{paraformer_decoder_san_forward.2} parent=0
    _
  %s17 = ssub.s32 1, %s15
  %s18 = scalar_select 0, %s17, %s15
  $region1: #{paraformer_decoder_san_forward.2} parent=0
    #allocation4 [shape = 'u8[32768]{0}', space=vmem, size = 0x8000, scoped, tag = 'input window, operand 0, single buffered']
    #allocation5 [shape = 's32[2]{0}', space=sflag, size = 0x8, scoped, tag = 'scoped memory for paraformer_decoder_san_forward.2']
    #allocation6 [shape = 's32[2]{0}', space=sflag, size = 0x8, scoped, tag = 'scoped memory for paraformer_decoder_san_forward.2']
    #allocation7 [shape = 'u8[16384]{0}', space=vmem, size = 0x4000, scoped, tag = 'input window, operand 1, single buffered']
    #allocation8 [shape = 's32[1]{0}', space=sflag, size = 0x4, scoped, tag = 'scoped memory for paraformer_decoder_san_forward.2']
    #allocation9 [shape = 'u8[32768]{0}', space=vmem, size = 0x8000, scoped, tag = 'input window, operand 2, single buffered']
    #allocation10 [shape = 'u8[1024]{0}', space=vmem, size = 0x400, scoped, tag = 'input window, operand 3, single buffered']
    #allocation11 [shape = 's32[1]{0}', space=sflag, size = 0x4, scoped, tag = 'scoped memory for paraformer_decoder_san_forward.2']
    #allocation12 [shape = 'u8[1024]{0}', space=vmem, size = 0x400, scoped, tag = 'input window, operand 4, single buffered']
    #allocation13 [shape = 'u8[1024]{0}', space=vmem, size = 0x400, scoped, tag = 'input window, operand 5, single buffered']
    #allocation14 [shape = 's32[1]{0}', space=sflag, size = 0x4, scoped, tag = 'scoped memory for paraformer_decoder_san_forward.2']
    #allocation15 [shape = 'u8[32768]{0}', space=vmem, size = 0x8000, scoped, tag = 'input window, operand 6']
    #allocation16 [shape = 'u8[16384]{0}', space=vmem, size = 0x4000, scoped, tag = 'input window, operand 7']
    #allocation17 [shape = 'u8[32768]{0}', space=vmem, size = 0x8000, scoped, tag = 'input window, operand 8']
    #allocation18 [shape = 'u8[524288]{0}', space=vmem, size = 0x80000, scoped, tag = 'input window, operand 9']
    #allocation19 [shape = 'u8[524288]{0}', space=vmem, size = 0x80000, scoped, tag = 'input window, operand 10']
    #allocation20 [shape = 'u8[262144]{0}', space=vmem, size = 0x40000, scoped, tag = 'input window, operand 11']
    #allocation21 [shape = 'u8[524288]{0}', space=vmem, size = 0x80000, scoped, tag = 'input window, operand 12']
    #allocation22 [shape = 'u8[262144]{0}', space=vmem, size = 0x40000, scoped, tag = 'input window, operand 13']
    #allocation23 [shape = 'u8[32768]{0}', space=vmem, size = 0x8000, scoped, tag = 'output window, operand 0, single buffered']
    %19 = vsyncpa [#allocation5], 0
    %20 = vsyncpa [#allocation8], 0
    %21 = vsyncpa [#allocation11], 0
    %22 = vsyncpa [#allocation14], 0
    %23 = vsyncpa [#allocation6], 0
    loop: start=0, step=1, limit=4
    $region2: #{paraformer_decoder_san_forward.2} parent=1 // loop_pre_header
      _
    $region3: #{paraformer_decoder_san_forward.2} parent=1 // loop_header
      %s25 = sphi 0, %s29
      %p26 = scmp.ge.s32.totalorder %s25, 4
      %s33 = sphi 0, %s33
      %s35 = sphi 0, %s33
      %s36 = sphi 0, %s35
      %s50 = sphi 0, %s36
      %s54 = sphi 0, %s54
      %s56 = sphi 0, %s54
      %s57 = sphi 0, %s56
      %s71 = sphi 0, %s57
      %s75 = sphi 0, %s75
      %s77 = sphi 0, %s75
      %s78 = sphi 0, %s77
      %s92 = sphi 0, %s78
      %s96 = sphi 0, %s96
      %s98 = sphi 0, %s96
      %s99 = sphi 0, %s98
      %s113 = sphi 0, %s99
      %s117 = sphi 0, %s117
      %s119 = sphi 0, %s117
      %s120 = sphi 0, %s119
      %s134 = sphi 0, %s120
      %s138 = sphi 0, %s138
      %s140 = sphi 0, %s138
      %s141 = sphi 0, %s140
      %s155 = sphi 0, %s141
      %s161 = sphi 0, %s163
      %s164 = sphi 0, %s161
      %s165 = sphi 0, %s164
      %s181 = sphi 0, %s165
      %s187 = sphi 0, %s189
      %s190 = sphi 0, %s187
      %s191 = sphi 0, %s190
      %s207 = sphi 0, %s191
      %s213 = sphi 0, %s215
      %s216 = sphi 0, %s213
      %s217 = sphi 0, %s216
      %s233 = sphi 0, %s217
      %s239 = sphi 0, %s241
      %s242 = sphi 0, %s239
      %s243 = sphi 0, %s242
      %s259 = sphi 0, %s243
      %s265 = sphi 0, %s267
      %s268 = sphi 0, %s265
      %s269 = sphi 0, %s268
      %s285 = sphi 0, %s269
      %s291 = sphi 0, %s293
      %s294 = sphi 0, %s291
      %s295 = sphi 0, %s294
      %s311 = sphi 0, %s295
      %s317 = sphi 0, %s319
      %s320 = sphi 0, %s317
      %s321 = sphi 0, %s320
      %s337 = sphi 0, %s321
      %s343 = sphi 0, %s345
      %s346 = sphi 0, %s343
      %s347 = sphi 0, %s346
      %s363 = sphi 0, %s347
      %s367 = sphi 0, %s367
      %s369 = sphi 0, %s367
      %s370 = sphi 0, %s369
      %s384 = sphi 0, %s370
    $region4: #{paraformer_decoder_san_forward.2} parent=1 // loop_header_branch
      %28 = sbr.rel (%p26) target = $region8
    $region5: #{paraformer_decoder_san_forward.2} parent=1 // loop_body
      %s30 = ssub.s32 %s25, 1
      %s31 = ssub.s32 %s25, 2
      %s32 = sadd.s32 %s25, 1
      %s34 = sadd.s32 %s33, 1
      %p37 = scmp.eq.s32.totalorder %s25, 1
      %p38 = scmp.ne.s32.totalorder %s33, %s35
      %p39 = scmp.eq.s32.totalorder %s25, 0
      %p40 = por %p38, %p39
      %p41 = scmp.ne.s32.totalorder %s33, %s35
      %p42 = scmp.eq.s32.totalorder %s30, 1
      %p43 = por %p41, %p42
      %p44 = scmp.ne.s32.totalorder %s35, %s36
      %p45 = scmp.eq.s32.totalorder %s30, 0
      %p46 = por %p44, %p45
      %p47 = scmp.ne.s32.totalorder %s35, %s36
      %p48 = scmp.eq.s32.totalorder %s31, 1
      %p49 = por %p47, %p48
      %p51 = scmp.ne.s32.totalorder %s36, %s50
      %p52 = scmp.eq.s32.totalorder %s31, 0
      %p53 = por %p51, %p52
      %s55 = sadd.s32 %s54, 1
      %p58 = scmp.eq.s32.totalorder %s25, 1
      %p59 = scmp.ne.s32.totalorder %s54, %s56
      %p60 = scmp.eq.s32.totalorder %s25, 0
      %p61 = por %p59, %p60
      %p62 = scmp.ne.s32.totalorder %s54, %s56
      %p63 = scmp.eq.s32.totalorder %s30, 1
      %p64 = por %p62, %p63
      %p65 = scmp.ne.s32.totalorder %s56, %s57
      %p66 = scmp.eq.s32.totalorder %s30, 0
      %p67 = por %p65, %p66
      %p68 = scmp.ne.s32.totalorder %s56, %s57
      %p69 = scmp.eq.s32.totalorder %s31, 1
      %p70 = por %p68, %p69
      %p72 = scmp.ne.s32.totalorder %s57, %s71
      %p73 = scmp.eq.s32.totalorder %s31, 0
      %p74 = por %p72, %p73
      %s76 = sadd.s32 %s75, 1
      %p79 = scmp.eq.s32.totalorder %s25, 1
      %p80 = scmp.ne.s32.totalorder %s75, %s77
      %p81 = scmp.eq.s32.totalorder %s25, 0
      %p82 = por %p80, %p81
      %p83 = scmp.ne.s32.totalorder %s75, %s77
      %p84 = scmp.eq.s32.totalorder %s30, 1
      %p85 = por %p83, %p84
      %p86 = scmp.ne.s32.totalorder %s77, %s78
      %p87 = scmp.eq.s32.totalorder %s30, 0
      %p88 = por %p86, %p87
      %p89 = scmp.ne.s32.totalorder %s77, %s78
      %p90 = scmp.eq.s32.totalorder %s31, 1
      %p91 = por %p89, %p90
      %p93 = scmp.ne.s32.totalorder %s78, %s92
      %p94 = scmp.eq.s32.totalorder %s31, 0
      %p95 = por %p93, %p94
      %s97 = sadd.s32 %s96, 1
      %p100 = scmp.eq.s32.totalorder %s25, 1
      %p101 = scmp.ne.s32.totalorder %s96, %s98
      %p102 = scmp.eq.s32.totalorder %s25, 0
      %p103 = por %p101, %p102
      %p104 = scmp.ne.s32.totalorder %s96, %s98
      %p105 = scmp.eq.s32.totalorder %s30, 1
      %p106 = por %p104, %p105
      %p107 = scmp.ne.s32.totalorder %s98, %s99
      %p108 = scmp.eq.s32.totalorder %s30, 0
      %p109 = por %p107, %p108
      %p110 = scmp.ne.s32.totalorder %s98, %s99
      %p111 = scmp.eq.s32.totalorder %s31, 1
      %p112 = por %p110, %p111
      %p114 = scmp.ne.s32.totalorder %s99, %s113
      %p115 = scmp.eq.s32.totalorder %s31, 0
      %p116 = por %p114, %p115
      %s118 = sadd.s32 %s117, 1
      %p121 = scmp.eq.s32.totalorder %s25, 1
      %p122 = scmp.ne.s32.totalorder %s117, %s119
      %p123 = scmp.eq.s32.totalorder %s25, 0
      %p124 = por %p122, %p123
      %p125 = scmp.ne.s32.totalorder %s117, %s119
      %p126 = scmp.eq.s32.totalorder %s30, 1
      %p127 = por %p125, %p126
      %p128 = scmp.ne.s32.totalorder %s119, %s120
      %p129 = scmp.eq.s32.totalorder %s30, 0
      %p130 = por %p128, %p129
      %p131 = scmp.ne.s32.totalorder %s119, %s120
      %p132 = scmp.eq.s32.totalorder %s31, 1
      %p133 = por %p131, %p132
      %p135 = scmp.ne.s32.totalorder %s120, %s134
      %p136 = scmp.eq.s32.totalorder %s31, 0
      %p137 = por %p135, %p136
      %s139 = sadd.s32 %s138, 1
      %p142 = scmp.eq.s32.totalorder %s25, 1
      %p143 = scmp.ne.s32.totalorder %s138, %s140
      %p144 = scmp.eq.s32.totalorder %s25, 0
      %p145 = por %p143, %p144
      %p146 = scmp.ne.s32.totalorder %s138, %s140
      %p147 = scmp.eq.s32.totalorder %s30, 1
      %p148 = por %p146, %p147
      %p149 = scmp.ne.s32.totalorder %s140, %s141
      %p150 = scmp.eq.s32.totalorder %s30, 0
      %p151 = por %p149, %p150
      %p152 = scmp.ne.s32.totalorder %s140, %s141
      %p153 = scmp.eq.s32.totalorder %s31, 1
      %p154 = por %p152, %p153
      %p156 = scmp.ne.s32.totalorder %s141, %s155
      %p157 = scmp.eq.s32.totalorder %s31, 0
      %p158 = por %p156, %p157
      %s159 = ssub.s32 %s25, %s32
      %p160 = scmp.eq.s32.totalorder %s159, 0
      %s162 = sadd.s32 %s161, 1
      %s163 = scalar_select %p160, %s161, %s162
      %p166 = pneg %p160
      %p167 = scmp.eq.s32.totalorder %s25, 1
      %p168 = por %p166, %p167
      %p169 = scmp.ne.s32.totalorder %s161, %s164
      %p170 = scmp.eq.s32.totalorder %s25, 0
      %p171 = por %p169, %p170
      %p172 = scmp.ne.s32.totalorder %s161, %s164
      %p173 = scmp.eq.s32.totalorder %s30, 1
      %p174 = por %p172, %p173
      %p175 = scmp.ne.s32.totalorder %s164, %s165
      %p176 = scmp.eq.s32.totalorder %s30, 0
      %p177 = por %p175, %p176
      %p178 = scmp.ne.s32.totalorder %s164, %s165
      %p179 = scmp.eq.s32.totalorder %s31, 1
      %p180 = por %p178, %p179
      %p182 = scmp.ne.s32.totalorder %s165, %s181
      %p183 = scmp.eq.s32.totalorder %s31, 0
      %p184 = por %p182, %p183
      %s185 = ssub.s32 %s25, %s32
      %p186 = scmp.eq.s32.totalorder %s185, 0
      %s188 = sadd.s32 %s187, 1
      %s189 = scalar_select %p186, %s187, %s188
      %p192 = pneg %p186
      %p193 = scmp.eq.s32.totalorder %s25, 1
      %p194 = por %p192, %p193
      %p195 = scmp.ne.s32.totalorder %s187, %s190
      %p196 = scmp.eq.s32.totalorder %s25, 0
      %p197 = por %p195, %p196
      %p198 = scmp.ne.s32.totalorder %s187, %s190
      %p199 = scmp.eq.s32.totalorder %s30, 1
      %p200 = por %p198, %p199
      %p201 = scmp.ne.s32.totalorder %s190, %s191
      %p202 = scmp.eq.s32.totalorder %s30, 0
      %p203 = por %p201, %p202
      %p204 = scmp.ne.s32.totalorder %s190, %s191
      %p205 = scmp.eq.s32.totalorder %s31, 1
      %p206 = por %p204, %p205
      %p208 = scmp.ne.s32.totalorder %s191, %s207
      %p209 = scmp.eq.s32.totalorder %s31, 0
      %p210 = por %p208, %p209
      %s211 = ssub.s32 %s25, %s32
      %p212 = scmp.eq.s32.totalorder %s211, 0
      %s214 = sadd.s32 %s213, 1
      %s215 = scalar_select %p212, %s213, %s214
      %p218 = pneg %p212
      %p219 = scmp.eq.s32.totalorder %s25, 1
      %p220 = por %p218, %p219
      %p221 = scmp.ne.s32.totalorder %s213, %s216
      %p222 = scmp.eq.s32.totalorder %s25, 0
      %p223 = por %p221, %p222
      %p224 = scmp.ne.s32.totalorder %s213, %s216
      %p225 = scmp.eq.s32.totalorder %s30, 1
      %p226 = por %p224, %p225
      %p227 = scmp.ne.s32.totalorder %s216, %s217
      %p228 = scmp.eq.s32.totalorder %s30, 0
      %p229 = por %p227, %p228
      %p230 = scmp.ne.s32.totalorder %s216, %s217
      %p231 = scmp.eq.s32.totalorder %s31, 1
      %p232 = por %p230, %p231
      %p234 = scmp.ne.s32.totalorder %s217, %s233
      %p235 = scmp.eq.s32.totalorder %s31, 0
      %p236 = por %p234, %p235
      %s237 = ssub.s32 %s25, %s32
      %p238 = scmp.eq.s32.totalorder %s237, 0
      %s240 = sadd.s32 %s239, 1
      %s241 = scalar_select %p238, %s239, %s240
      %p244 = pneg %p238
      %p245 = scmp.eq.s32.totalorder %s25, 1
      %p246 = por %p244, %p245
      %p247 = scmp.ne.s32.totalorder %s239, %s242
      %p248 = scmp.eq.s32.totalorder %s25, 0
      %p249 = por %p247, %p248
      %p250 = scmp.ne.s32.totalorder %s239, %s242
      %p251 = scmp.eq.s32.totalorder %s30, 1
      %p252 = por %p250, %p251
      %p253 = scmp.ne.s32.totalorder %s242, %s243
      %p254 = scmp.eq.s32.totalorder %s30, 0
      %p255 = por %p253, %p254
      %p256 = scmp.ne.s32.totalorder %s242, %s243
      %p257 = scmp.eq.s32.totalorder %s31, 1
      %p258 = por %p256, %p257
      %p260 = scmp.ne.s32.totalorder %s243, %s259
      %p261 = scmp.eq.s32.totalorder %s31, 0
      %p262 = por %p260, %p261
      %s263 = ssub.s32 %s25, %s32
      %p264 = scmp.eq.s32.totalorder %s263, 0
      %s266 = sadd.s32 %s265, 1
      %s267 = scalar_select %p264, %s265, %s266
      %p270 = pneg %p264
      %p271 = scmp.eq.s32.totalorder %s25, 1
      %p272 = por %p270, %p271
      %p273 = scmp.ne.s32.totalorder %s265, %s268
      %p274 = scmp.eq.s32.totalorder %s25, 0
      %p275 = por %p273, %p274
      %p276 = scmp.ne.s32.totalorder %s265, %s268
      %p277 = scmp.eq.s32.totalorder %s30, 1
      %p278 = por %p276, %p277
      %p279 = scmp.ne.s32.totalorder %s268, %s269
      %p280 = scmp.eq.s32.totalorder %s30, 0
      %p281 = por %p279, %p280
      %p282 = scmp.ne.s32.totalorder %s268, %s269
      %p283 = scmp.eq.s32.totalorder %s31, 1
      %p284 = por %p282, %p283
      %p286 = scmp.ne.s32.totalorder %s269, %s285
      %p287 = scmp.eq.s32.totalorder %s31, 0
      %p288 = por %p286, %p287
      %s289 = ssub.s32 %s25, %s32
      %p290 = scmp.eq.s32.totalorder %s289, 0
      %s292 = sadd.s32 %s291, 1
      %s293 = scalar_select %p290, %s291, %s292
      %p296 = pneg %p290
      %p297 = scmp.eq.s32.totalorder %s25, 1
      %p298 = por %p296, %p297
      %p299 = scmp.ne.s32.totalorder %s291, %s294
      %p300 = scmp.eq.s32.totalorder %s25, 0
      %p301 = por %p299, %p300
      %p302 = scmp.ne.s32.totalorder %s291, %s294
      %p303 = scmp.eq.s32.totalorder %s30, 1
      %p304 = por %p302, %p303
      %p305 = scmp.ne.s32.totalorder %s294, %s295
      %p306 = scmp.eq.s32.totalorder %s30, 0
      %p307 = por %p305, %p306
      %p308 = scmp.ne.s32.totalorder %s294, %s295
      %p309 = scmp.eq.s32.totalorder %s31, 1
      %p310 = por %p308, %p309
      %p312 = scmp.ne.s32.totalorder %s295, %s311
      %p313 = scmp.eq.s32.totalorder %s31, 0
      %p314 = por %p312, %p313
      %s315 = ssub.s32 %s25, %s32
      %p316 = scmp.eq.s32.totalorder %s315, 0
      %s318 = sadd.s32 %s317, 1
      %s319 = scalar_select %p316, %s317, %s318
      %p322 = pneg %p316
      %p323 = scmp.eq.s32.totalorder %s25, 1
      %p324 = por %p322, %p323
      %p325 = scmp.ne.s32.totalorder %s317, %s320
      %p326 = scmp.eq.s32.totalorder %s25, 0
      %p327 = por %p325, %p326
      %p328 = scmp.ne.s32.totalorder %s317, %s320
      %p329 = scmp.eq.s32.totalorder %s30, 1
      %p330 = por %p328, %p329
      %p331 = scmp.ne.s32.totalorder %s320, %s321
      %p332 = scmp.eq.s32.totalorder %s30, 0
      %p333 = por %p331, %p332
      %p334 = scmp.ne.s32.totalorder %s320, %s321
      %p335 = scmp.eq.s32.totalorder %s31, 1
      %p336 = por %p334, %p335
      %p338 = scmp.ne.s32.totalorder %s321, %s337
      %p339 = scmp.eq.s32.totalorder %s31, 0
      %p340 = por %p338, %p339
      %s341 = ssub.s32 %s25, %s32
      %p342 = scmp.eq.s32.totalorder %s341, 0
      %s344 = sadd.s32 %s343, 1
      %s345 = scalar_select %p342, %s343, %s344
      %p348 = pneg %p342
      %p349 = scmp.eq.s32.totalorder %s25, 1
      %p350 = por %p348, %p349
      %p351 = scmp.ne.s32.totalorder %s343, %s346
      %p352 = scmp.eq.s32.totalorder %s25, 0
      %p353 = por %p351, %p352
      %p354 = scmp.ne.s32.totalorder %s343, %s346
      %p355 = scmp.eq.s32.totalorder %s30, 1
      %p356 = por %p354, %p355
      %p357 = scmp.ne.s32.totalorder %s346, %s347
      %p358 = scmp.eq.s32.totalorder %s30, 0
      %p359 = por %p357, %p358
      %p360 = scmp.ne.s32.totalorder %s346, %s347
      %p361 = scmp.eq.s32.totalorder %s31, 1
      %p362 = por %p360, %p361
      %p364 = scmp.ne.s32.totalorder %s347, %s363
      %p365 = scmp.eq.s32.totalorder %s31, 0
      %p366 = por %p364, %p365
      %s368 = sadd.s32 %s367, 1
      %p371 = scmp.eq.s32.totalorder %s25, 1
      %p372 = scmp.ne.s32.totalorder %s367, %s369
      %p373 = scmp.eq.s32.totalorder %s25, 0
      %p374 = por %p372, %p373
      %p375 = scmp.ne.s32.totalorder %s367, %s369
      %p376 = scmp.eq.s32.totalorder %s30, 1
      %p377 = por %p375, %p376
      %p378 = scmp.ne.s32.totalorder %s369, %s370
      %p379 = scmp.eq.s32.totalorder %s30, 0
      %p380 = por %p378, %p379
      %p381 = scmp.ne.s32.totalorder %s369, %s370
      %p382 = scmp.eq.s32.totalorder %s31, 1
      %p383 = por %p381, %p382
      %p385 = scmp.ne.s32.totalorder %s370, %s384
      %p386 = scmp.eq.s32.totalorder %s31, 0
      %p387 = por %p385, %p386
      %p388 = scmp.le.s32.totalorder 1, %s25
      %p389 = scmp.lt.s32.totalorder %s25, 3
      %p390 = pnand %p388, %p389
      %p391 = pneg %p390
      // Predicated region
      $region9: #{paraformer_decoder_san_forward.2} parent=5 // pred_check
        _
      $region10: #{paraformer_decoder_san_forward.2} parent=5 // pred_check_branch
        %393 = sbr.rel (%p390) target = $region12
      $region11: #{paraformer_decoder_san_forward.2} parent=5 // pred_region
        %s394 = ssub.s32 %s25, 1
        // Predicated region
        $region13: #{paraformer_decoder_san_forward.2} parent=11 // pred_check
          %p395 = pneg %p46
        $region14: #{paraformer_decoder_san_forward.2} parent=11 // pred_check_branch
          %397 = sbr.rel (%p395) target = $region16
        $region15: #{paraformer_decoder_san_forward.2} parent=11 // pred_region
          %s399 = ssub.s32 1024, 1024
          %400 = vsyncadd [#allocation5], %s399
          %s401 = sshll.u32 [#allocation4], 4
          %s402 = int_to_ptr.vmem [resolvable:$true] %s401
          %407 = dma.hbm_to_vmem [thread:$0]  %s0, 1024, %s402, [#allocation5], 256, 256, 16
        $region16: #{paraformer_decoder_san_forward.2} parent=11 // pred_fallthru
          _
        // Predicated region
        $region17: #{paraformer_decoder_san_forward.2} parent=11 // pred_check
          %p408 = pneg %p67
        $region18: #{paraformer_decoder_san_forward.2} parent=11 // pred_check_branch
          %410 = sbr.rel (%p408) target = $region20
        $region19: #{paraformer_decoder_san_forward.2} parent=11 // pred_region
          %s412 = ssub.s32 512, 512
          %413 = vsyncadd [#allocation8], %s412
          %s414 = sshll.u32 [#allocation7], 4
          %s415 = int_to_ptr.vmem [resolvable:$true] %s414
          %420 = dma.hbm_to_vmem [thread:$0]  %s1, 512, %s415, [#allocation8], 128, 128, 8
        $region20: #{paraformer_decoder_san_forward.2} parent=11 // pred_fallthru
          _
        // Predicated region
        $region21: #{paraformer_decoder_san_forward.2} parent=11 // pred_check
          %p421 = pneg %p88
        $region22: #{paraformer_decoder_san_forward.2} parent=11 // pred_check_branch
          %423 = sbr.rel (%p421) target = $region24
        $region23: #{paraformer_decoder_san_forward.2} parent=11 // pred_region
          %s425 = ssub.s32 1024, 1024
          %426 = vsyncadd [#allocation8], %s425
          %s427 = sshll.u32 [#allocation9], 4
          %s428 = int_to_ptr.vmem [resolvable:$true] %s427
          %433 = dma.hbm_to_vmem [thread:$0]  %s2, 1024, %s428, [#allocation8], 128, 128, 8
        $region24: #{paraformer_decoder_san_forward.2} parent=11 // pred_fallthru
          _
        // Predicated region
        $region25: #{paraformer_decoder_san_forward.2} parent=11 // pred_check
          %p434 = pneg %p109
        $region26: #{paraformer_decoder_san_forward.2} parent=11 // pred_check_branch
          %436 = sbr.rel (%p434) target = $region28
        $region27: #{paraformer_decoder_san_forward.2} parent=11 // pred_region
          %s438 = ssub.s32 32, 32
          %439 = vsyncadd [#allocation11], %s438
          %s440 = sshll.u32 [#allocation10], 4
          %s441 = int_to_ptr.vmem [resolvable:$true] %s440
          %446 = dma.hbm_to_vmem [thread:$0]  %s3, 32, %s441, [#allocation11], 16, 16, 1
        $region28: #{paraformer_decoder_san_forward.2} parent=11 // pred_fallthru
          _
        // Predicated region
        $region29: #{paraformer_decoder_san_forward.2} parent=11 // pred_check
          %p447 = pneg %p130
        $region30: #{paraformer_decoder_san_forward.2} parent=11 // pred_check_branch
          %449 = sbr.rel (%p447) target = $region32
        $region31: #{paraformer_decoder_san_forward.2} parent=11 // pred_region
          %s451 = ssub.s32 32, 32
          %452 = vsyncadd [#allocation11], %s451
          %s454 = sshll.u32 [#allocation12], 4
          %s455 = int_to_ptr.vmem [resolvable:$true] %s454
          %457 = dma.hbm_to_vmem [thread:$0]  %s4, 32, %s455, [#allocation11]
        $region32: #{paraformer_decoder_san_forward.2} parent=11 // pred_fallthru
          _
        // Predicated region
        $region33: #{paraformer_decoder_san_forward.2} parent=11 // pred_check
          %p458 = pneg %p151
        $region34: #{paraformer_decoder_san_forward.2} parent=11 // pred_check_branch
          %460 = sbr.rel (%p458) target = $region36
        $region35: #{paraformer_decoder_san_forward.2} parent=11 // pred_region
          %s462 = ssub.s32 32, 32
          %463 = vsyncadd [#allocation14], %s462
          %s465 = sshll.u32 [#allocation13], 4
          %s466 = int_to_ptr.vmem [resolvable:$true] %s465
          %468 = dma.hbm_to_vmem [thread:$0]  %s5, 32, %s466, [#allocation14]
        $region36: #{paraformer_decoder_san_forward.2} parent=11 // pred_fallthru
          _
      $region12: #{paraformer_decoder_san_forward.2} parent=5 // pred_fallthru
        _
      %p469 = scmp.lt.s32.totalorder %s25, 2
      // Predicated region
      $region37: #{paraformer_decoder_san_forward.2} parent=5 // pred_check
        %p470 = pneg %p469
      $region38: #{paraformer_decoder_san_forward.2} parent=5 // pred_check_branch
        %472 = sbr.rel (%p470) target = $region40
      $region39: #{paraformer_decoder_san_forward.2} parent=5 // pred_region
        // Predicated region
        $region41: #{paraformer_decoder_san_forward.2} parent=39 // pred_check
          %p473 = pneg %p171
        $region42: #{paraformer_decoder_san_forward.2} parent=39 // pred_check_branch
          %475 = sbr.rel (%p473) target = $region44
        $region43: #{paraformer_decoder_san_forward.2} parent=39 // pred_region
          %s476 = sand.u32 %s25, 1
          %s477 = scalar_lea.sflag [#allocation5], %s476
          %s478 = sand.u32 %s161, 1
          %s479 = smul.addr %s478, 32
          %s480 = scalar_lea.vmem [#allocation15], %s479
          %s482 = ssub.s32 512, 512
          %483 = vsyncadd %s477, %s482
          %s484 = smul.addr %s25, 4
          %s485 = smul.addr %s484, 128
          %s486 = scalar_lea.hbm %s6, %s485
          %s487 = sshll.u32 %s480, 4
          %s488 = int_to_ptr.vmem [resolvable:$true] %s487
          %493 = dma.hbm_to_vmem [thread:$0]  %s486, 512, %s488, %s477, 256, 256, 16
        $region44: #{paraformer_decoder_san_forward.2} parent=39 // pred_fallthru
          _
        // Predicated region
        $region45: #{paraformer_decoder_san_forward.2} parent=39 // pred_check
          %p494 = pneg %p197
        $region46: #{paraformer_decoder_san_forward.2} parent=39 // pred_check_branch
          %496 = sbr.rel (%p494) target = $region48
        $region47: #{paraformer_decoder_san_forward.2} parent=39 // pred_region
          %s497 = sand.u32 %s25, 1
          %s498 = scalar_lea.sflag [#allocation5], %s497
          %s499 = sand.u32 %s187, 1
          %s500 = smul.addr %s499, 16
          %s501 = scalar_lea.vmem [#allocation16], %s500
          %s503 = ssub.s32 256, 256
          %504 = vsyncadd %s498, %s503
          %s505 = smul.addr %s25, 4
          %s506 = smul.addr %s505, 64
          %s507 = scalar_lea.hbm %s7, %s506
          %s509 = sshll.u32 %s501, 4
          %s510 = int_to_ptr.vmem [resolvable:$true] %s509
          %512 = dma.hbm_to_vmem [thread:$0]  %s507, 256, %s510, %s498
        $region48: #{paraformer_decoder_san_forward.2} parent=39 // pred_fallthru
          _
        // Predicated region
        $region49: #{paraformer_decoder_san_forward.2} parent=39 // pred_check
          %p513 = pneg %p223
        $region50: #{paraformer_decoder_san_forward.2} parent=39 // pred_check_branch
          %515 = sbr.rel (%p513) target = $region52
        $region51: #{paraformer_decoder_san_forward.2} parent=39 // pred_region
          %s516 = sand.u32 %s25, 1
          %s517 = scalar_lea.sflag [#allocation5], %s516
          %s518 = sand.u32 %s213, 1
          %s519 = smul.addr %s518, 32
          %s520 = scalar_lea.vmem [#allocation17], %s519
          %s522 = ssub.s32 512, 512
          %523 = vsyncadd %s517, %s522
          %s524 = smul.addr %s25, 4
          %s525 = smul.addr %s524, 128
          %s526 = scalar_lea.hbm %s8, %s525
          %s527 = sshll.u32 %s520, 4
          %s528 = int_to_ptr.vmem [resolvable:$true] %s527
          %533 = dma.hbm_to_vmem [thread:$0]  %s526, 512, %s528, %s517, 256, 256, 16
        $region52: #{paraformer_decoder_san_forward.2} parent=39 // pred_fallthru
          _
        // Predicated region
        $region53: #{paraformer_decoder_san_forward.2} parent=39 // pred_check
          %p534 = pneg %p249
        $region54: #{paraformer_decoder_san_forward.2} parent=39 // pred_check_branch
          %536 = sbr.rel (%p534) target = $region56
        $region55: #{paraformer_decoder_san_forward.2} parent=39 // pred_region
          %s537 = sand.u32 %s25, 1
          %s538 = scalar_lea.sflag [#allocation5], %s537
          %s539 = sand.u32 %s239, 1
          %s540 = smul.addr %s539, 512
          %s541 = scalar_lea.vmem [#allocation18], %s540
          %s543 = ssub.s32 8192, 8192
          %544 = vsyncadd %s538, %s543
          %s545 = smul.addr %s25, 128
          %s546 = smul.addr %s545, 64
          %s547 = scalar_lea.hbm %s9, %s546
          %s548 = sshll.u32 %s541, 4
          %s549 = int_to_ptr.vmem [resolvable:$true] %s548
          %554 = dma.hbm_to_vmem [thread:$0]  %s547, 8192, %s549, %s538, 256, 256, 16
        $region56: #{paraformer_decoder_san_forward.2} parent=39 // pred_fallthru
          _
        // Predicated region
        $region57: #{paraformer_decoder_san_forward.2} parent=39 // pred_check
          %p555 = pneg %p275
        $region58: #{paraformer_decoder_san_forward.2} parent=39 // pred_check_branch
          %557 = sbr.rel (%p555) target = $region60
        $region59: #{paraformer_decoder_san_forward.2} parent=39 // pred_region
          %s558 = sand.u32 %s25, 1
          %s559 = scalar_lea.sflag [#allocation5], %s558
          %s560 = sand.u32 %s265, 1
          %s561 = smul.addr %s560, 512
          %s562 = scalar_lea.vmem [#allocation19], %s561
          %s564 = ssub.s32 8192, 8192
          %565 = vsyncadd %s559, %s564
          %s566 = smul.addr %s25, 128
          %s567 = smul.addr %s566, 64
          %s568 = scalar_lea.hbm %s10, %s567
          %s569 = sshll.u32 %s562, 4
          %s570 = int_to_ptr.vmem [resolvable:$true] %s569
          %575 = dma.hbm_to_vmem [thread:$0]  %s568, 8192, %s570, %s559, 128, 128, 8
        $region60: #{paraformer_decoder_san_forward.2} parent=39 // pred_fallthru
          _
        // Predicated region
        $region61: #{paraformer_decoder_san_forward.2} parent=39 // pred_check
          %p576 = pneg %p301
        $region62: #{paraformer_decoder_san_forward.2} parent=39 // pred_check_branch
          %578 = sbr.rel (%p576) target = $region64
        $region63: #{paraformer_decoder_san_forward.2} parent=39 // pred_region
          %s579 = sand.u32 %s25, 1
          %s580 = scalar_lea.sflag [#allocation5], %s579
          %s581 = sand.u32 %s291, 1
          %s582 = smul.addr %s581, 256
          %s583 = scalar_lea.vmem [#allocation20], %s582
          %s585 = ssub.s32 4096, 4096
          %586 = vsyncadd %s580, %s585
          %s587 = smul.addr %s25, 64
          %s588 = smul.addr %s587, 64
          %s589 = scalar_lea.hbm %s11, %s588
          %s590 = sshll.u32 %s583, 4
          %s591 = int_to_ptr.vmem [resolvable:$true] %s590
          %596 = dma.hbm_to_vmem [thread:$0]  %s589, 4096, %s591, %s580, 128, 128, 8
        $region64: #{paraformer_decoder_san_forward.2} parent=39 // pred_fallthru
          _
        // Predicated region
        $region65: #{paraformer_decoder_san_forward.2} parent=39 // pred_check
          %p597 = pneg %p327
        $region66: #{paraformer_decoder_san_forward.2} parent=39 // pred_check_branch
          %599 = sbr.rel (%p597) target = $region68
        $region67: #{paraformer_decoder_san_forward.2} parent=39 // pred_region
          %s600 = sand.u32 %s25, 1
          %s601 = scalar_lea.sflag [#allocation5], %s600
          %s602 = sand.u32 %s317, 1
          %s603 = smul.addr %s602, 512
          %s604 = scalar_lea.vmem [#allocation21], %s603
          %s606 = ssub.s32 8192, 8192
          %607 = vsyncadd %s601, %s606
          %s608 = smul.addr %s25, 128
          %s609 = smul.addr %s608, 64
          %s610 = scalar_lea.hbm %s12, %s609
          %s611 = sshll.u32 %s604, 4
          %s612 = int_to_ptr.vmem [resolvable:$true] %s611
          %617 = dma.hbm_to_vmem [thread:$0]  %s610, 8192, %s612, %s601, 256, 256, 16
        $region68: #{paraformer_decoder_san_forward.2} parent=39 // pred_fallthru
          _
        // Predicated region
        $region69: #{paraformer_decoder_san_forward.2} parent=39 // pred_check
          %p618 = pneg %p353
        $region70: #{paraformer_decoder_san_forward.2} parent=39 // pred_check_branch
          %620 = sbr.rel (%p618) target = $region72
        $region71: #{paraformer_decoder_san_forward.2} parent=39 // pred_region
          %s621 = sand.u32 %s25, 1
          %s622 = scalar_lea.sflag [#allocation5], %s621
          %s623 = sand.u32 %s343, 1
          %s624 = smul.addr %s623, 256
          %s625 = scalar_lea.vmem [#allocation22], %s624
          %s627 = ssub.s32 4096, 4096
          %628 = vsyncadd %s622, %s627
          %s629 = smul.addr %s25, 64
          %s630 = smul.addr %s629, 64
          %s631 = scalar_lea.hbm %s13, %s630
          %s632 = sshll.u32 %s625, 4
          %s633 = int_to_ptr.vmem [resolvable:$true] %s632
          %638 = dma.hbm_to_vmem [thread:$0]  %s631, 4096, %s633, %s622, 128, 128, 8
        $region72: #{paraformer_decoder_san_forward.2} parent=39 // pred_fallthru
          _
      $region40: #{paraformer_decoder_san_forward.2} parent=5 // pred_fallthru
        _
      %p639 = scmp.le.s32.totalorder 1, %s25
      %p640 = scmp.lt.s32.totalorder %s25, 3
      %p641 = pnand %p639, %p640
      %p642 = pneg %p641
      // Predicated region
      $region73: #{paraformer_decoder_san_forward.2} parent=5 // pred_check
        _
      $region74: #{paraformer_decoder_san_forward.2} parent=5 // pred_check_branch
        %644 = sbr.rel (%p641) target = $region76
      $region75: #{paraformer_decoder_san_forward.2} parent=5 // pred_region
        %s645 = ssub.s32 %s25, 1
        // Predicated region
        $region77: #{paraformer_decoder_san_forward.2} parent=75 // pred_check
          %p646 = pneg %p46
        $region78: #{paraformer_decoder_san_forward.2} parent=75 // pred_check_branch
          %648 = sbr.rel (%p646) target = $region80
        $region79: #{paraformer_decoder_san_forward.2} parent=75 // pred_region
          %649 = dma.done [#allocation5], 1024
        $region80: #{paraformer_decoder_san_forward.2} parent=75 // pred_fallthru
          _
        // Predicated region
        $region81: #{paraformer_decoder_san_forward.2} parent=75 // pred_check
          %p650 = pneg %p67
        $region82: #{paraformer_decoder_san_forward.2} parent=75 // pred_check_branch
          %652 = sbr.rel (%p650) target = $region84
        $region83: #{paraformer_decoder_san_forward.2} parent=75 // pred_region
          %653 = dma.done [#allocation8], 512
        $region84: #{paraformer_decoder_san_forward.2} parent=75 // pred_fallthru
          _
        // Predicated region
        $region85: #{paraformer_decoder_san_forward.2} parent=75 // pred_check
          %p654 = pneg %p88
        $region86: #{paraformer_decoder_san_forward.2} parent=75 // pred_check_branch
          %656 = sbr.rel (%p654) target = $region88
        $region87: #{paraformer_decoder_san_forward.2} parent=75 // pred_region
          %657 = dma.done [#allocation8], 1024
        $region88: #{paraformer_decoder_san_forward.2} parent=75 // pred_fallthru
          _
        // Predicated region
        $region89: #{paraformer_decoder_san_forward.2} parent=75 // pred_check
          %p658 = pneg %p109
        $region90: #{paraformer_decoder_san_forward.2} parent=75 // pred_check_branch
          %660 = sbr.rel (%p658) target = $region92
        $region91: #{paraformer_decoder_san_forward.2} parent=75 // pred_region
          %661 = dma.done [#allocation11], 32
        $region92: #{paraformer_decoder_san_forward.2} parent=75 // pred_fallthru
          _
        // Predicated region
        $region93: #{paraformer_decoder_san_forward.2} parent=75 // pred_check
          %p662 = pneg %p130
        $region94: #{paraformer_decoder_san_forward.2} parent=75 // pred_check_branch
          %664 = sbr.rel (%p662) target = $region96
        $region95: #{paraformer_decoder_san_forward.2} parent=75 // pred_region
          %665 = dma.done [#allocation11], 32
        $region96: #{paraformer_decoder_san_forward.2} parent=75 // pred_fallthru
          _
        // Predicated region
        $region97: #{paraformer_decoder_san_forward.2} parent=75 // pred_check
          %p666 = pneg %p151
        $region98: #{paraformer_decoder_san_forward.2} parent=75 // pred_check_branch
          %668 = sbr.rel (%p666) target = $region100
        $region99: #{paraformer_decoder_san_forward.2} parent=75 // pred_region
          %669 = dma.done [#allocation14], 32
        $region100: #{paraformer_decoder_san_forward.2} parent=75 // pred_fallthru
          _
        %s670 = sand.u32 %s30, 1
        %s671 = scalar_lea.sflag [#allocation5], %s670
        %s672 = sand.u32 %s164, 1
        %s673 = smul.addr %s672, 32
        %s674 = scalar_lea.vmem [#allocation15], %s673
        // Predicated region
        $region101: #{paraformer_decoder_san_forward.2} parent=75 // pred_check
          %p675 = pneg %p177
        $region102: #{paraformer_decoder_san_forward.2} parent=75 // pred_check_branch
          %677 = sbr.rel (%p675) target = $region104
        $region103: #{paraformer_decoder_san_forward.2} parent=75 // pred_region
          %678 = dma.done %s671, 512
        $region104: #{paraformer_decoder_san_forward.2} parent=75 // pred_fallthru
          _
        %s679 = sand.u32 %s30, 1
        %s680 = scalar_lea.sflag [#allocation5], %s679
        %s681 = sand.u32 %s190, 1
        %s682 = smul.addr %s681, 16
        %s683 = scalar_lea.vmem [#allocation16], %s682
        // Predicated region
        $region105: #{paraformer_decoder_san_forward.2} parent=75 // pred_check
          %p684 = pneg %p203
        $region106: #{paraformer_decoder_san_forward.2} parent=75 // pred_check_branch
          %686 = sbr.rel (%p684) target = $region108
        $region107: #{paraformer_decoder_san_forward.2} parent=75 // pred_region
          %687 = dma.done %s680, 256
        $region108: #{paraformer_decoder_san_forward.2} parent=75 // pred_fallthru
          _
        %s688 = sand.u32 %s30, 1
        %s689 = scalar_lea.sflag [#allocation5], %s688
        %s690 = sand.u32 %s216, 1
        %s691 = smul.addr %s690, 32
        %s692 = scalar_lea.vmem [#allocation17], %s691
        // Predicated region
        $region109: #{paraformer_decoder_san_forward.2} parent=75 // pred_check
          %p693 = pneg %p229
        $region110: #{paraformer_decoder_san_forward.2} parent=75 // pred_check_branch
          %695 = sbr.rel (%p693) target = $region112
        $region111: #{paraformer_decoder_san_forward.2} parent=75 // pred_region
          %696 = dma.done %s689, 512
        $region112: #{paraformer_decoder_san_forward.2} parent=75 // pred_fallthru
          _
        %s697 = sand.u32 %s30, 1
        %s698 = scalar_lea.sflag [#allocation5], %s697
        %s699 = sand.u32 %s242, 1
        %s700 = smul.addr %s699, 512
        %s701 = scalar_lea.vmem [#allocation18], %s700
        // Predicated region
        $region113: #{paraformer_decoder_san_forward.2} parent=75 // pred_check
          %p702 = pneg %p255
        $region114: #{paraformer_decoder_san_forward.2} parent=75 // pred_check_branch
          %704 = sbr.rel (%p702) target = $region116
        $region115: #{paraformer_decoder_san_forward.2} parent=75 // pred_region
          %705 = dma.done %s698, 8192
        $region116: #{paraformer_decoder_san_forward.2} parent=75 // pred_fallthru
          _
        %s706 = sand.u32 %s30, 1
        %s707 = scalar_lea.sflag [#allocation5], %s706
        %s708 = sand.u32 %s268, 1
        %s709 = smul.addr %s708, 512
        %s710 = scalar_lea.vmem [#allocation19], %s709
        // Predicated region
        $region117: #{paraformer_decoder_san_forward.2} parent=75 // pred_check
          %p711 = pneg %p281
        $region118: #{paraformer_decoder_san_forward.2} parent=75 // pred_check_branch
          %713 = sbr.rel (%p711) target = $region120
        $region119: #{paraformer_decoder_san_forward.2} parent=75 // pred_region
          %714 = dma.done %s707, 8192
        $region120: #{paraformer_decoder_san_forward.2} parent=75 // pred_fallthru
          _
        %s715 = sand.u32 %s30, 1
        %s716 = scalar_lea.sflag [#allocation5], %s715
        %s717 = sand.u32 %s294, 1
        %s718 = smul.addr %s717, 256
        %s719 = scalar_lea.vmem [#allocation20], %s718
        // Predicated region
        $region121: #{paraformer_decoder_san_forward.2} parent=75 // pred_check
          %p720 = pneg %p307
        $region122: #{paraformer_decoder_san_forward.2} parent=75 // pred_check_branch
          %722 = sbr.rel (%p720) target = $region124
        $region123: #{paraformer_decoder_san_forward.2} parent=75 // pred_region
          %723 = dma.done %s716, 4096
        $region124: #{paraformer_decoder_san_forward.2} parent=75 // pred_fallthru
          _
        %s724 = sand.u32 %s30, 1
        %s725 = scalar_lea.sflag [#allocation5], %s724
        %s726 = sand.u32 %s320, 1
        %s727 = smul.addr %s726, 512
        %s728 = scalar_lea.vmem [#allocation21], %s727
        // Predicated region
        $region125: #{paraformer_decoder_san_forward.2} parent=75 // pred_check
          %p729 = pneg %p333
        $region126: #{paraformer_decoder_san_forward.2} parent=75 // pred_check_branch
          %731 = sbr.rel (%p729) target = $region128
        $region127: #{paraformer_decoder_san_forward.2} parent=75 // pred_region
          %732 = dma.done %s725, 8192
        $region128: #{paraformer_decoder_san_forward.2} parent=75 // pred_fallthru
          _
        %s733 = sand.u32 %s30, 1
        %s734 = scalar_lea.sflag [#allocation5], %s733
        %s735 = sand.u32 %s346, 1
        %s736 = smul.addr %s735, 256
        %s737 = scalar_lea.vmem [#allocation22], %s736
        // Predicated region
        $region129: #{paraformer_decoder_san_forward.2} parent=75 // pred_check
          %p738 = pneg %p359
        $region130: #{paraformer_decoder_san_forward.2} parent=75 // pred_check_branch
          %740 = sbr.rel (%p738) target = $region132
        $region131: #{paraformer_decoder_san_forward.2} parent=75 // pred_region
          %741 = dma.done %s734, 4096
        $region132: #{paraformer_decoder_san_forward.2} parent=75 // pred_fallthru
          _
        %p742 = pneg %p46
        %p743 = pneg %p43
        %p744 = pneg %p67
        %p745 = pneg %p64
        %p746 = pneg %p88
        %p747 = pneg %p85
        %p748 = pneg %p109
        %p749 = pneg %p106
        %p750 = pneg %p130
        %p751 = pneg %p127
        %p752 = pneg %p151
        %p753 = pneg %p148
        %s754 = sand.u32 %s30, 1
        %s755 = scalar_lea.sflag [#allocation5], %s754
        %s756 = sand.u32 %s164, 1
        %s757 = smul.addr %s756, 32
        %s758 = scalar_lea.vmem [#allocation15], %s757
        %p759 = pneg %p177
        %p760 = pneg %p174
        %s761 = sand.u32 %s30, 1
        %s762 = scalar_lea.sflag [#allocation5], %s761
        %s763 = sand.u32 %s190, 1
        %s764 = smul.addr %s763, 16
        %s765 = scalar_lea.vmem [#allocation16], %s764
        %p766 = pneg %p203
        %p767 = pneg %p200
        %s768 = sand.u32 %s30, 1
        %s769 = scalar_lea.sflag [#allocation5], %s768
        %s770 = sand.u32 %s216, 1
        %s771 = smul.addr %s770, 32
        %s772 = scalar_lea.vmem [#allocation17], %s771
        %p773 = pneg %p229
        %p774 = pneg %p226
        %s775 = sand.u32 %s30, 1
        %s776 = scalar_lea.sflag [#allocation5], %s775
        %s777 = sand.u32 %s242, 1
        %s778 = smul.addr %s777, 512
        %s779 = scalar_lea.vmem [#allocation18], %s778
        %p780 = pneg %p255
        %p781 = pneg %p252
        %s782 = sand.u32 %s30, 1
        %s783 = scalar_lea.sflag [#allocation5], %s782
        %s784 = sand.u32 %s268, 1
        %s785 = smul.addr %s784, 512
        %s786 = scalar_lea.vmem [#allocation19], %s785
        %p787 = pneg %p281
        %p788 = pneg %p278
        %s789 = sand.u32 %s30, 1
        %s790 = scalar_lea.sflag [#allocation5], %s789
        %s791 = sand.u32 %s294, 1
        %s792 = smul.addr %s791, 256
        %s793 = scalar_lea.vmem [#allocation20], %s792
        %p794 = pneg %p307
        %p795 = pneg %p304
        %s796 = sand.u32 %s30, 1
        %s797 = scalar_lea.sflag [#allocation5], %s796
        %s798 = sand.u32 %s320, 1
        %s799 = smul.addr %s798, 512
        %s800 = scalar_lea.vmem [#allocation21], %s799
        %p801 = pneg %p333
        %p802 = pneg %p330
        %s803 = sand.u32 %s30, 1
        %s804 = scalar_lea.sflag [#allocation5], %s803
        %s805 = sand.u32 %s346, 1
        %s806 = smul.addr %s805, 256
        %s807 = scalar_lea.vmem [#allocation22], %s806
        %p808 = pneg %p359
        %p809 = pneg %p356
        %p810 = pneg %p380
        %p811 = pneg %p377
        %p813 = scmp.eq.s32.totalorder %s30, 0
        // Predicated region
        $region133: #{paraformer_decoder_san_forward.2} parent=75 // pred_check
          %p814 = pneg %p813
        $region134: #{paraformer_decoder_san_forward.2} parent=75 // pred_check_branch
          %816 = sbr.rel (%p814) target = $region136
        $region135: #{paraformer_decoder_san_forward.2} parent=75 // pred_region
          %v817 = vld [vmem:[#allocation4] sm:$0xff]
          %v818 = vld [vmem:[#allocation4 + $0x8] sm:$0xff]
          %v819 = vld [vmem:[#allocation4 + $0x10] sm:$0xff]
          %v820 = vld [vmem:[#allocation4 + $0x18] sm:$0xff]
          %v821 = vld [vmem:[#allocation4 + $0x20] sm:$0xff]
          %v822 = vld [vmem:[#allocation4 + $0x28] sm:$0xff]
          %v823 = vld [vmem:[#allocation4 + $0x30] sm:$0xff]
          %v824 = vld [vmem:[#allocation4 + $0x38] sm:$0xff]
          %825 = vst [vmem:[#allocation2] sm:$0xff] %v817
          %826 = vst [vmem:[#allocation2 + $0x8] sm:$0xff] %v818
          %827 = vst [vmem:[#allocation2 + $0x10] sm:$0xff] %v819
          %828 = vst [vmem:[#allocation2 + $0x18] sm:$0xff] %v820
          %829 = vst [vmem:[#allocation2 + $0x20] sm:$0xff] %v821
          %830 = vst [vmem:[#allocation2 + $0x28] sm:$0xff] %v822
          %831 = vst [vmem:[#allocation2 + $0x30] sm:$0xff] %v823
          %832 = vst [vmem:[#allocation2 + $0x38] sm:$0xff] %v824
          %833 = vst [vmem:[#allocation3] sm:$0xff] 0.0
          %834 = vst [vmem:[#allocation3 + $0x8] sm:$0xff] 0.0
          %835 = vst [vmem:[#allocation3 + $0x10] sm:$0xff] 0.0
          %836 = vst [vmem:[#allocation3 + $0x18] sm:$0xff] 0.0
          %837 = vst [vmem:[#allocation3 + $0x20] sm:$0xff] 0.0
          %838 = vst [vmem:[#allocation3 + $0x28] sm:$0xff] 0.0
          %839 = vst [vmem:[#allocation3 + $0x30] sm:$0x1f] 0.0
          %840 = vst [vmem:[#allocation3 + $0x38] sm:$0x1f] 0.0
          %841 = vst [vmem:[#allocation3 + $0x40] sm:$0xff] 0.0
          %842 = vst [vmem:[#allocation3 + $0x48] sm:$0xff] 0.0
          %843 = vst [vmem:[#allocation3 + $0x50] sm:$0xff] 0.0
          %844 = vst [vmem:[#allocation3 + $0x58] sm:$0xff] 0.0
          %845 = vst [vmem:[#allocation3 + $0x60] sm:$0xff] 0.0
          %846 = vst [vmem:[#allocation3 + $0x68] sm:$0xff] 0.0
          %847 = vst [vmem:[#allocation3 + $0x70] sm:$0x1f] 0.0
          %848 = vst [vmem:[#allocation3 + $0x78] sm:$0x1f] 0.0
        $region136: #{paraformer_decoder_san_forward.2} parent=75 // pred_fallthru
          _
        %v849 = vld [vmem:[#allocation2] sm:$0xff]
        %v850 = vld [vmem:[#allocation2 + $0x8] sm:$0xff]
        %v851 = vld [vmem:[#allocation2 + $0x10] sm:$0xff]
        %v852 = vld [vmem:[#allocation2 + $0x18] sm:$0xff]
        %v853 = vld [vmem:[#allocation2 + $0x20] sm:$0xff]
        %v854 = vld [vmem:[#allocation2 + $0x28] sm:$0xff]
        %v855 = vld [vmem:[#allocation2 + $0x30] sm:$0xff]
        %v856 = vld [vmem:[#allocation2 + $0x38] sm:$0xff]
        %v857 = vld [vmem:[#allocation7] sm:$0xff]
        %v858 = vld [vmem:[#allocation7 + $0x8] sm:$0xff]
        %v859 = vld [vmem:[#allocation7 + $0x10] sm:$0xff]
        %v860 = vld [vmem:[#allocation7 + $0x18] sm:$0xff]
        %v861 = vld [vmem:[#allocation10] sm:$0x1]
        %v862 = vld [vmem:[#allocation10 + $0x1] sm:$0x1]
        %v863 = vld [vmem:[%s674] sm:$0xff]
        %v864 = vld [vmem:[%s674 + $0x8] sm:$0xff]
        %v865 = vld [vmem:[%s674 + $0x10] sm:$0x3]
        %v866 = vld [vmem:[%s674 + $0x18] sm:$0x3]
        %v867 = vld [vmem:[%s683] sm:$0x77]
        %v868 = vld [vmem:[%s683 + $0x8] sm:$0x77]
        %v869 = vadd.f32 %v849, %v850
        %870 = vadd.xlane.f32.xlu0 %v869
        %v871 = vpop.xlane.xlu0 %870
        %v872 = vadd.f32 %v851, %v852
        %873 = vadd.xlane.f32.xlu0 %v872
        %v874 = vpop.xlane.xlu0 %873
        %v875 = vadd.f32 %v853, %v854
        %876 = vadd.xlane.f32.xlu0 %v875
        %v877 = vpop.xlane.xlu0 %876
        %v878 = vadd.f32 %v855, %v856
        %879 = vadd.xlane.f32.xlu0 %v878
        %v880 = vpop.xlane.xlu0 %879
        %v881 = vrcp.pop 256.0
        %v882 = vmul.f32 %v871, %v881
        %v883 = vmul.f32 %v874, %v881
        %v884 = vmul.f32 %v877, %v881
        %v885 = vmul.f32 %v880, %v881
        %v886 = vsub.f32 %v849, %v882
        %v887 = vsub.f32 %v850, %v882
        %v888 = vsub.f32 %v851, %v883
        %v889 = vsub.f32 %v852, %v883
        %v890 = vsub.f32 %v853, %v884
        %v891 = vsub.f32 %v854, %v884
        %v892 = vsub.f32 %v855, %v885
        %v893 = vsub.f32 %v856, %v885
        %v894 = vmul.f32 %v886, %v886
        %v895 = vmul.f32 %v887, %v887
        %v896 = vmul.f32 %v888, %v888
        %v897 = vmul.f32 %v889, %v889
        %v898 = vmul.f32 %v890, %v890
        %v899 = vmul.f32 %v891, %v891
        %v900 = vmul.f32 %v892, %v892
        %v901 = vmul.f32 %v893, %v893
        %v902 = vadd.f32 %v894, %v895
        %903 = vadd.xlane.f32.xlu0 %v902
        %v904 = vpop.xlane.xlu0 %903
        %v905 = vadd.f32 %v896, %v897
        %906 = vadd.xlane.f32.xlu0 %v905
        %v907 = vpop.xlane.xlu0 %906
        %v908 = vadd.f32 %v898, %v899
        %909 = vadd.xlane.f32.xlu0 %v908
        %v910 = vpop.xlane.xlu0 %909
        %v911 = vadd.f32 %v900, %v901
        %912 = vadd.xlane.f32.xlu0 %v911
        %v913 = vpop.xlane.xlu0 %912
        %v914 = vmul.f32 %v904, %v881
        %v915 = vmul.f32 %v907, %v881
        %v916 = vmul.f32 %v910, %v881
        %v917 = vmul.f32 %v913, %v881
        %v918 = vadd.f32 %v914, 1e-05
        %v919 = vadd.f32 %v915, 1e-05
        %v920 = vadd.f32 %v916, 1e-05
        %v921 = vadd.f32 %v917, 1e-05
        %v922 = vrsqrt.pop %v918
        %v923 = vrsqrt.pop %v919
        %v924 = vrsqrt.pop %v920
        %v925 = vrsqrt.pop %v921
        %v926 = vmul.f32 %v886, %v922
        %v927 = vmul.f32 %v887, %v922
        %v928 = vmul.f32 %v888, %v923
        %v929 = vmul.f32 %v889, %v923
        %v930 = vmul.f32 %v890, %v924
        %v931 = vmul.f32 %v891, %v924
        %v932 = vmul.f32 %v892, %v925
        %v933 = vmul.f32 %v893, %v925
        %v934 = vlaneseq
        %v935 = vshrl.u32 %v934, 7
        %v936 = vsub.s32 0, %v935
        %v937 = vrot.slane %v863, %v936
        %v938 = vlaneseq
        %v939 = vshrl.u32 %v938, 7
        %v940 = vsub.s32 0, %v939
        %v941 = vrot.slane %v864, %v940
        %v942 = vmul.f32 %v926, %v937
        %v943 = vmul.f32 %v927, %v941
        %v944 = vmul.f32 %v928, %v937
        %v945 = vmul.f32 %v929, %v941
        %v946 = vmul.f32 %v930, %v937
        %v947 = vmul.f32 %v931, %v941
        %v948 = vmul.f32 %v932, %v937
        %v949 = vmul.f32 %v933, %v941
        %v950 = vlaneseq
        %v951 = vshrl.u32 %v950, 7
        %v952 = vsub.s32 1, %v951
        %v953 = vrot.slane %v863, %v952
        %v954 = vlaneseq
        %v955 = vshrl.u32 %v954, 7
        %v956 = vsub.s32 1, %v955
        %v957 = vrot.slane %v864, %v956
        %v958 = vadd.f32 %v942, %v953
        %v959 = vadd.f32 %v943, %v957
        %v960 = vadd.f32 %v944, %v953
        %v961 = vadd.f32 %v945, %v957
        %v962 = vadd.f32 %v946, %v953
        %v963 = vadd.f32 %v947, %v957
        %v964 = vadd.f32 %v948, %v953
        %v965 = vadd.f32 %v949, %v957
        %v966 = vpack.c.bf16 %v960, %v958
        %v967 = vpack.c.bf16 %v961, %v959
        %v968 = vpack.c.bf16 %v964, %v962
        %v969 = vpack.c.bf16 %v965, %v963
        %v970 = vld [vmem:[%s701] sm:$0xff]
        %v971 = vld [vmem:[%s701 + $0x8] sm:$0xff]
        %v972 = vld [vmem:[%s701 + $0x10] sm:$0xff]
        %v973 = vld [vmem:[%s701 + $0x18] sm:$0xff]
        %v974 = vld [vmem:[%s701 + $0x20] sm:$0xff]
        %v975 = vld [vmem:[%s701 + $0x28] sm:$0xff]
        %v976 = vld [vmem:[%s701 + $0x30] sm:$0xff]
        %v977 = vld [vmem:[%s701 + $0x38] sm:$0xff]
        %v978 = vld [vmem:[%s701 + $0x40] sm:$0xff]
        %v979 = vld [vmem:[%s701 + $0x48] sm:$0xff]
        %v980 = vld [vmem:[%s701 + $0x50] sm:$0xff]
        %v981 = vld [vmem:[%s701 + $0x58] sm:$0xff]
        %v982 = vld [vmem:[%s701 + $0x60] sm:$0xff]
        %v983 = vld [vmem:[%s701 + $0x68] sm:$0xff]
        %v984 = vld [vmem:[%s701 + $0x70] sm:$0xff]
        %v985 = vld [vmem:[%s701 + $0x78] sm:$0xff]
        %v986 = vld [vmem:[%s701 + $0x80] sm:$0xff]
        %v987 = vld [vmem:[%s701 + $0x88] sm:$0xff]
        %v988 = vld [vmem:[%s701 + $0x90] sm:$0xff]
        %v989 = vld [vmem:[%s701 + $0x98] sm:$0xff]
        %v990 = vld [vmem:[%s701 + $0xa0] sm:$0xff]
        %v991 = vld [vmem:[%s701 + $0xa8] sm:$0xff]
        %v992 = vld [vmem:[%s701 + $0xb0] sm:$0xff]
        %v993 = vld [vmem:[%s701 + $0xb8] sm:$0xff]
        %v994 = vld [vmem:[%s701 + $0xc0] sm:$0xff]
        %v995 = vld [vmem:[%s701 + $0xc8] sm:$0xff]
        %v996 = vld [vmem:[%s701 + $0xd0] sm:$0xff]
        %v997 = vld [vmem:[%s701 + $0xd8] sm:$0xff]
        %v998 = vld [vmem:[%s701 + $0xe0] sm:$0xff]
        %v999 = vld [vmem:[%s701 + $0xe8] sm:$0xff]
        %v1000 = vld [vmem:[%s701 + $0xf0] sm:$0xff]
        %v1001 = vld [vmem:[%s701 + $0xf8] sm:$0xff]
        %v1002 = vld [vmem:[%s701 + $0x100] sm:$0xff]
        %v1003 = vld [vmem:[%s701 + $0x108] sm:$0xff]
        %v1004 = vld [vmem:[%s701 + $0x110] sm:$0xff]
        %v1005 = vld [vmem:[%s701 + $0x118] sm:$0xff]
        %v1006 = vld [vmem:[%s701 + $0x120] sm:$0xff]
        %v1007 = vld [vmem:[%s701 + $0x128] sm:$0xff]
        %v1008 = vld [vmem:[%s701 + $0x130] sm:$0xff]
        %v1009 = vld [vmem:[%s701 + $0x138] sm:$0xff]
        %v1010 = vld [vmem:[%s701 + $0x140] sm:$0xff]
        %v1011 = vld [vmem:[%s701 + $0x148] sm:$0xff]
        %v1012 = vld [vmem:[%s701 + $0x150] sm:$0xff]
        %v1013 = vld [vmem:[%s701 + $0x158] sm:$0xff]
        %v1014 = vld [vmem:[%s701 + $0x160] sm:$0xff]
        %v1015 = vld [vmem:[%s701 + $0x168] sm:$0xff]
        %v1016 = vld [vmem:[%s701 + $0x170] sm:$0xff]
        %v1017 = vld [vmem:[%s701 + $0x178] sm:$0xff]
        %v1018 = vld [vmem:[%s701 + $0x180] sm:$0xff]
        %v1019 = vld [vmem:[%s701 + $0x188] sm:$0xff]
        %v1020 = vld [vmem:[%s701 + $0x190] sm:$0xff]
        %v1021 = vld [vmem:[%s701 + $0x198] sm:$0xff]
        %v1022 = vld [vmem:[%s701 + $0x1a0] sm:$0xff]
        %v1023 = vld [vmem:[%s701 + $0x1a8] sm:$0xff]
        %v1024 = vld [vmem:[%s701 + $0x1b0] sm:$0xff]
        %v1025 = vld [vmem:[%s701 + $0x1b8] sm:$0xff]
        %v1026 = vld [vmem:[%s701 + $0x1c0] sm:$0xff]
        %v1027 = vld [vmem:[%s701 + $0x1c8] sm:$0xff]
        %v1028 = vld [vmem:[%s701 + $0x1d0] sm:$0xff]
        %v1029 = vld [vmem:[%s701 + $0x1d8] sm:$0xff]
        %v1030 = vld [vmem:[%s701 + $0x1e0] sm:$0xff]
        %v1031 = vld [vmem:[%s701 + $0x1e8] sm:$0xff]
        %v1032 = vld [vmem:[%s701 + $0x1f0] sm:$0xff]
        %v1033 = vld [vmem:[%s701 + $0x1f8] sm:$0xff]
        %v1036 = vlaneseq
        %v1037 = vshrl.u32 %v1036, 7
        %v1038 = vsub.s32 0, %v1037
        %v1039 = vrot.slane %v867, %v1038
        %v1040 = vlaneseq
        %v1041 = vshrl.u32 %v1040, 7
        %v1042 = vsub.s32 4, %v1041
        %v1043 = vrot.slane %v867, %v1042
        %v1044 = vlaneseq
        %v1045 = vshrl.u32 %v1044, 7
        %v1046 = vsub.s32 0, %v1045
        %v1047 = vrot.slane %v868, %v1046
        %v1048 = vlaneseq
        %v1049 = vshrl.u32 %v1048, 7
        %v1050 = vsub.s32 4, %v1049
        %v1051 = vrot.slane %v868, %v1050
        %v1056 = vlaneseq
        %v1057 = vshrl.u32 %v1056, 7
        %v1058 = vsub.s32 0, %v1057
        %v1059 = vrot.slane %v1039, %v1058
        %v1060 = vlaneseq
        %v1061 = vshrl.u32 %v1060, 7
        %v1062 = vsub.s32 0, %v1061
        %v1063 = vrot.slane %v1043, %v1062
        %v1064 = vlaneseq
        %v1065 = vshrl.u32 %v1064, 7
        %v1066 = vsub.s32 0, %v1065
        %v1067 = vrot.slane %v1047, %v1066
        %v1068 = vlaneseq
        %v1069 = vshrl.u32 %v1068, 7
        %v1070 = vsub.s32 0, %v1069
        %v1071 = vrot.slane %v1051, %v1070
        %v1136 = vunpack.c.l.b16 %v970
        %v1137 = vunpack.c.h.b16 %v970
        %v1138 = vunpack.c.l.b16 %v971
        %v1139 = vunpack.c.h.b16 %v971
        %v1140 = vunpack.c.l.b16 %v972
        %v1141 = vunpack.c.h.b16 %v972
        %v1142 = vunpack.c.l.b16 %v973
        %v1143 = vunpack.c.h.b16 %v973
        %v1144 = vunpack.c.l.b16 %v974
        %v1145 = vunpack.c.h.b16 %v974
        %v1146 = vunpack.c.l.b16 %v975
        %v1147 = vunpack.c.h.b16 %v975
        %v1148 = vunpack.c.l.b16 %v976
        %v1149 = vunpack.c.h.b16 %v976
        %v1150 = vunpack.c.l.b16 %v977
        %v1151 = vunpack.c.h.b16 %v977
        %v1152 = vunpack.c.l.b16 %v978
        %v1153 = vunpack.c.h.b16 %v978
        %v1154 = vunpack.c.l.b16 %v979
        %v1155 = vunpack.c.h.b16 %v979
        %v1156 = vunpack.c.l.b16 %v980
        %v1157 = vunpack.c.h.b16 %v980
        %v1158 = vunpack.c.l.b16 %v981
        %v1159 = vunpack.c.h.b16 %v981
        %v1160 = vunpack.c.l.b16 %v982
        %v1161 = vunpack.c.h.b16 %v982
        %v1162 = vunpack.c.l.b16 %v983
        %v1163 = vunpack.c.h.b16 %v983
        %v1164 = vunpack.c.l.b16 %v984
        %v1165 = vunpack.c.h.b16 %v984
        %v1166 = vunpack.c.l.b16 %v985
        %v1167 = vunpack.c.h.b16 %v985
        %v1168 = vunpack.c.l.b16 %v986
        %v1169 = vunpack.c.h.b16 %v986
        %v1170 = vunpack.c.l.b16 %v987
        %v1171 = vunpack.c.h.b16 %v987
        %v1172 = vunpack.c.l.b16 %v988
        %v1173 = vunpack.c.h.b16 %v988
        %v1174 = vunpack.c.l.b16 %v989
        %v1175 = vunpack.c.h.b16 %v989
        %v1176 = vunpack.c.l.b16 %v990
        %v1177 = vunpack.c.h.b16 %v990
        %v1178 = vunpack.c.l.b16 %v991
        %v1179 = vunpack.c.h.b16 %v991
        %v1180 = vunpack.c.l.b16 %v992
        %v1181 = vunpack.c.h.b16 %v992
        %v1182 = vunpack.c.l.b16 %v993
        %v1183 = vunpack.c.h.b16 %v993
        %v1184 = vunpack.c.l.b16 %v994
        %v1185 = vunpack.c.h.b16 %v994
        %v1186 = vunpack.c.l.b16 %v995
        %v1187 = vunpack.c.h.b16 %v995
        %v1188 = vunpack.c.l.b16 %v996
        %v1189 = vunpack.c.h.b16 %v996
        %v1190 = vunpack.c.l.b16 %v997
        %v1191 = vunpack.c.h.b16 %v997
        %v1192 = vunpack.c.l.b16 %v998
        %v1193 = vunpack.c.h.b16 %v998
        %v1194 = vunpack.c.l.b16 %v999
        %v1195 = vunpack.c.h.b16 %v999
        %v1196 = vunpack.c.l.b16 %v1000
        %v1197 = vunpack.c.h.b16 %v1000
        %v1198 = vunpack.c.l.b16 %v1001
        %v1199 = vunpack.c.h.b16 %v1001
        %v1200 = vunpack.c.l.b16 %v1002
        %v1201 = vunpack.c.h.b16 %v1002
        %v1202 = vunpack.c.l.b16 %v1003
        %v1203 = vunpack.c.h.b16 %v1003
        %v1204 = vunpack.c.l.b16 %v1004
        %v1205 = vunpack.c.h.b16 %v1004
        %v1206 = vunpack.c.l.b16 %v1005
        %v1207 = vunpack.c.h.b16 %v1005
        %v1208 = vunpack.c.l.b16 %v1006
        %v1209 = vunpack.c.h.b16 %v1006
        %v1210 = vunpack.c.l.b16 %v1007
        %v1211 = vunpack.c.h.b16 %v1007
        %v1212 = vunpack.c.l.b16 %v1008
        %v1213 = vunpack.c.h.b16 %v1008
        %v1214 = vunpack.c.l.b16 %v1009
        %v1215 = vunpack.c.h.b16 %v1009
        %v1216 = vunpack.c.l.b16 %v1010
        %v1217 = vunpack.c.h.b16 %v1010
        %v1218 = vunpack.c.l.b16 %v1011
        %v1219 = vunpack.c.h.b16 %v1011
        %v1220 = vunpack.c.l.b16 %v1012
        %v1221 = vunpack.c.h.b16 %v1012
        %v1222 = vunpack.c.l.b16 %v1013
        %v1223 = vunpack.c.h.b16 %v1013
        %v1224 = vunpack.c.l.b16 %v1014
        %v1225 = vunpack.c.h.b16 %v1014
        %v1226 = vunpack.c.l.b16 %v1015
        %v1227 = vunpack.c.h.b16 %v1015
        %v1228 = vunpack.c.l.b16 %v1016
        %v1229 = vunpack.c.h.b16 %v1016
        %v1230 = vunpack.c.l.b16 %v1017
        %v1231 = vunpack.c.h.b16 %v1017
        %v1232 = vunpack.c.l.b16 %v1018
        %v1233 = vunpack.c.h.b16 %v1018
        %v1234 = vunpack.c.l.b16 %v1019
        %v1235 = vunpack.c.h.b16 %v1019
        %v1236 = vunpack.c.l.b16 %v1020
        %v1237 = vunpack.c.h.b16 %v1020
        %v1238 = vunpack.c.l.b16 %v1021
        %v1239 = vunpack.c.h.b16 %v1021
        %v1240 = vunpack.c.l.b16 %v1022
        %v1241 = vunpack.c.h.b16 %v1022
        %v1242 = vunpack.c.l.b16 %v1023
        %v1243 = vunpack.c.h.b16 %v1023
        %v1244 = vunpack.c.l.b16 %v1024
        %v1245 = vunpack.c.h.b16 %v1024
        %v1246 = vunpack.c.l.b16 %v1025
        %v1247 = vunpack.c.h.b16 %v1025
        %v1248 = vunpack.c.l.b16 %v1026
        %v1249 = vunpack.c.h.b16 %v1026
        %v1250 = vunpack.c.l.b16 %v1027
        %v1251 = vunpack.c.h.b16 %v1027
        %v1252 = vunpack.c.l.b16 %v1028
        %v1253 = vunpack.c.h.b16 %v1028
        %v1254 = vunpack.c.l.b16 %v1029
        %v1255 = vunpack.c.h.b16 %v1029
        %v1256 = vunpack.c.l.b16 %v1030
        %v1257 = vunpack.c.h.b16 %v1030
        %v1258 = vunpack.c.l.b16 %v1031
        %v1259 = vunpack.c.h.b16 %v1031
        %v1260 = vunpack.c.l.b16 %v1032
        %v1261 = vunpack.c.h.b16 %v1032
        %v1262 = vunpack.c.l.b16 %v1033
        %v1263 = vunpack.c.h.b16 %v1033
        %v1264 = vpack.c.b16 %v1140, %v1136
        %v1265 = vpack.c.b16 %v1141, %v1137
        %v1266 = vpack.c.b16 %v1142, %v1138
        %v1267 = vpack.c.b16 %v1143, %v1139
        %v1268 = vpack.c.b16 %v1148, %v1144
        %v1269 = vpack.c.b16 %v1149, %v1145
        %v1270 = vpack.c.b16 %v1150, %v1146
        %v1271 = vpack.c.b16 %v1151, %v1147
        %v1272 = vpack.c.b16 %v1156, %v1152
        %v1273 = vpack.c.b16 %v1157, %v1153
        %v1274 = vpack.c.b16 %v1158, %v1154
        %v1275 = vpack.c.b16 %v1159, %v1155
        %v1276 = vpack.c.b16 %v1164, %v1160
        %v1277 = vpack.c.b16 %v1165, %v1161
        %v1278 = vpack.c.b16 %v1166, %v1162
        %v1279 = vpack.c.b16 %v1167, %v1163
        %v1280 = vpack.c.b16 %v1172, %v1168
        %v1281 = vpack.c.b16 %v1173, %v1169
        %v1282 = vpack.c.b16 %v1174, %v1170
        %v1283 = vpack.c.b16 %v1175, %v1171
        %v1284 = vpack.c.b16 %v1180, %v1176
        %v1285 = vpack.c.b16 %v1181, %v1177
        %v1286 = vpack.c.b16 %v1182, %v1178
        %v1287 = vpack.c.b16 %v1183, %v1179
        %v1288 = vpack.c.b16 %v1188, %v1184
        %v1289 = vpack.c.b16 %v1189, %v1185
        %v1290 = vpack.c.b16 %v1190, %v1186
        %v1291 = vpack.c.b16 %v1191, %v1187
        %v1292 = vpack.c.b16 %v1196, %v1192
        %v1293 = vpack.c.b16 %v1197, %v1193
        %v1294 = vpack.c.b16 %v1198, %v1194
        %v1295 = vpack.c.b16 %v1199, %v1195
        %v1296 = vpack.c.b16 %v1204, %v1200
        %v1297 = vpack.c.b16 %v1205, %v1201
        %v1298 = vpack.c.b16 %v1206, %v1202
        %v1299 = vpack.c.b16 %v1207, %v1203
        %v1300 = vpack.c.b16 %v1212, %v1208
        %v1301 = vpack.c.b16 %v1213, %v1209
        %v1302 = vpack.c.b16 %v1214, %v1210
        %v1303 = vpack.c.b16 %v1215, %v1211
        %v1304 = vpack.c.b16 %v1220, %v1216
        %v1305 = vpack.c.b16 %v1221, %v1217
        %v1306 = vpack.c.b16 %v1222, %v1218
        %v1307 = vpack.c.b16 %v1223, %v1219
        %v1308 = vpack.c.b16 %v1228, %v1224
        %v1309 = vpack.c.b16 %v1229, %v1225
        %v1310 = vpack.c.b16 %v1230, %v1226
        %v1311 = vpack.c.b16 %v1231, %v1227
        %v1312 = vpack.c.b16 %v1236, %v1232
        %v1313 = vpack.c.b16 %v1237, %v1233
        %v1314 = vpack.c.b16 %v1238, %v1234
        %v1315 = vpack.c.b16 %v1239, %v1235
        %v1316 = vpack.c.b16 %v1244, %v1240
        %v1317 = vpack.c.b16 %v1245, %v1241
        %v1318 = vpack.c.b16 %v1246, %v1242
        %v1319 = vpack.c.b16 %v1247, %v1243
        %v1320 = vpack.c.b16 %v1252, %v1248
        %v1321 = vpack.c.b16 %v1253, %v1249
        %v1322 = vpack.c.b16 %v1254, %v1250
        %v1323 = vpack.c.b16 %v1255, %v1251
        %v1324 = vpack.c.b16 %v1260, %v1256
        %v1325 = vpack.c.b16 %v1261, %v1257
        %v1326 = vpack.c.b16 %v1262, %v1258
        %v1327 = vpack.c.b16 %v1263, %v1259
        %1392 = vmatprep.subr.bf16.mxu0 %v1265
        %1393 = vmatpush1.bf16.msra.mxu0 %v1264
        %1394 = vmatprep.subr.bf16.mxu0 %v1269
        %1395 = vmatpush1.bf16.msra.mxu0 %v1268
        %1396 = vmatprep.subr.bf16.mxu0 %v1273
        %1397 = vmatpush1.bf16.msra.mxu0 %v1272
        %1398 = vmatprep.subr.bf16.mxu0 %v1277
        %1399 = vmatpush1.bf16.msra.mxu0 %v1276
        %1400 = vmatprep.subr.bf16.mxu0 %v1281
        %1401 = vmatpush1.bf16.msra.mxu0 %v1280
        %1402 = vmatprep.subr.bf16.mxu0 %v1285
        %1403 = vmatpush1.bf16.msra.mxu0 %v1284
        %1404 = vmatprep.subr.bf16.mxu0 %v1289
        %1405 = vmatpush1.bf16.msra.mxu0 %v1288
        %1406 = vmatprep.subr.bf16.mxu0 %v1293
        %1407 = vmatpush1.bf16.msra.mxu0 %v1292
        %1408 = vmatprep.subr.bf16.mxu0 %v1297
        %1409 = vmatpush1.bf16.msra.mxu0 %v1296
        %1410 = vmatprep.subr.bf16.mxu0 %v1301
        %1411 = vmatpush1.bf16.msra.mxu0 %v1300
        %1412 = vmatprep.subr.bf16.mxu0 %v1305
        %1413 = vmatpush1.bf16.msra.mxu0 %v1304
        %1414 = vmatprep.subr.bf16.mxu0 %v1309
        %1415 = vmatpush1.bf16.msra.mxu0 %v1308
        %1416 = vmatprep.subr.bf16.mxu0 %v1313
        %1417 = vmatpush1.bf16.msra.mxu0 %v1312
        %1418 = vmatprep.subr.bf16.mxu0 %v1317
        %1419 = vmatpush1.bf16.msra.mxu0 %v1316
        %1420 = vmatprep.subr.bf16.mxu0 %v1321
        %1421 = vmatpush1.bf16.msra.mxu0 %v1320
        %1422 = vmatprep.subr.bf16.mxu0 %v1325
        %1423 = vmatpush1.bf16.msra.mxu0 %v1324
        %1424 = vmatprep.mubr.bf16.mxu0 %v967
        %1425 = vmatmul.mubr.bf16.gmra.mrb[0].mxu0 %v966
        %v1426 = vpop.f32.mrb[0].mxu0
        %v1427 = vadd.f32 %v1059, %v1426
        %v1428 = vpop.f32.mrb[0].mxu0
        %v1429 = vadd.f32 %v1063, %v1428
        %v1430 = vpop.f32.mrb[0].mxu0
        %v1431 = vadd.f32 %v1059, %v1430
        %v1432 = vpop.f32.mrb[0].mxu0
        %v1433 = vadd.f32 %v1063, %v1432
        %1434 = vmatprep.mubr.bf16.mxu0 %v969
        %1435 = vmatmul.mubr.bf16.gmra.mrb[0].mxu0 %v968
        %v1436 = vpop.f32.mrb[0].mxu0
        %v1437 = vadd.f32 %v1059, %v1436
        %v1438 = vpop.f32.mrb[0].mxu0
        %v1439 = vadd.f32 %v1063, %v1438
        %v1440 = vpop.f32.mrb[0].mxu0
        %v1441 = vadd.f32 %v1059, %v1440
        %v1442 = vpop.f32.mrb[0].mxu0
        %v1443 = vadd.f32 %v1063, %v1442
        %1444 = vdwg.mxu0
        %1445 = vmatprep.subr.bf16.mxu0 %v1267
        %1446 = vmatpush1.bf16.msra.mxu0 %v1266
        %1447 = vmatprep.subr.bf16.mxu0 %v1271
        %1448 = vmatpush1.bf16.msra.mxu0 %v1270
        %1449 = vmatprep.subr.bf16.mxu0 %v1275
        %1450 = vmatpush1.bf16.msra.mxu0 %v1274
        %1451 = vmatprep.subr.bf16.mxu0 %v1279
        %1452 = vmatpush1.bf16.msra.mxu0 %v1278
        %1453 = vmatprep.subr.bf16.mxu0 %v1283
        %1454 = vmatpush1.bf16.msra.mxu0 %v1282
        %1455 = vmatprep.subr.bf16.mxu0 %v1287
        %1456 = vmatpush1.bf16.msra.mxu0 %v1286
        %1457 = vmatprep.subr.bf16.mxu0 %v1291
        %1458 = vmatpush1.bf16.msra.mxu0 %v1290
        %1459 = vmatprep.subr.bf16.mxu0 %v1295
        %1460 = vmatpush1.bf16.msra.mxu0 %v1294
        %1461 = vmatprep.subr.bf16.mxu0 %v1299
        %1462 = vmatpush1.bf16.msra.mxu0 %v1298
        %1463 = vmatprep.subr.bf16.mxu0 %v1303
        %1464 = vmatpush1.bf16.msra.mxu0 %v1302
        %1465 = vmatprep.subr.bf16.mxu0 %v1307
        %1466 = vmatpush1.bf16.msra.mxu0 %v1306
        %1467 = vmatprep.subr.bf16.mxu0 %v1311
        %1468 = vmatpush1.bf16.msra.mxu0 %v1310
        %1469 = vmatprep.subr.bf16.mxu0 %v1315
        %1470 = vmatpush1.bf16.msra.mxu0 %v1314
        %1471 = vmatprep.subr.bf16.mxu0 %v1319
        %1472 = vmatpush1.bf16.msra.mxu0 %v1318
        %1473 = vmatprep.subr.bf16.mxu0 %v1323
        %1474 = vmatpush1.bf16.msra.mxu0 %v1322
        %1475 = vmatprep.subr.bf16.mxu0 %v1327
        %1476 = vmatpush1.bf16.msra.mxu0 %v1326
        %1477 = vmatprep.mubr.bf16.mxu0 %v967
        %1478 = vmatmul.mubr.bf16.gmra.mrb[0].mxu0 %v966
        %v1479 = vpop.f32.mrb[0].mxu0
        %v1480 = vadd.f32 %v1067, %v1479
        %v1481 = vpop.f32.mrb[0].mxu0
        %v1482 = vadd.f32 %v1071, %v1481
        %v1483 = vpop.f32.mrb[0].mxu0
        %v1484 = vadd.f32 %v1067, %v1483
        %v1485 = vpop.f32.mrb[0].mxu0
        %v1486 = vadd.f32 %v1071, %v1485
        %1487 = vmatprep.mubr.bf16.mxu0 %v969
        %1488 = vmatmul.mubr.bf16.gmra.mrb[0].mxu0 %v968
        %v1489 = vpop.f32.mrb[0].mxu0
        %v1490 = vadd.f32 %v1067, %v1489
        %v1491 = vpop.f32.mrb[0].mxu0
        %v1492 = vadd.f32 %v1071, %v1491
        %v1493 = vpop.f32.mrb[0].mxu0
        %v1494 = vadd.f32 %v1067, %v1493
        %v1495 = vpop.f32.mrb[0].mxu0
        %v1496 = vadd.f32 %v1071, %v1495
        %1497 = vdwg.mxu0
        %v1498 = vmax.f32 %v1427, 0.0
        %v1499 = vmax.f32 %v1429, 0.0
        %v1500 = vmax.f32 %v1480, 0.0
        %v1501 = vmax.f32 %v1482, 0.0
        %v1502 = vmax.f32 %v1431, 0.0
        %v1503 = vmax.f32 %v1433, 0.0
        %v1504 = vmax.f32 %v1484, 0.0
        %v1505 = vmax.f32 %v1486, 0.0
        %v1506 = vmax.f32 %v1437, 0.0
        %v1507 = vmax.f32 %v1439, 0.0
        %v1508 = vmax.f32 %v1490, 0.0
        %v1509 = vmax.f32 %v1492, 0.0
        %v1510 = vmax.f32 %v1441, 0.0
        %v1511 = vmax.f32 %v1443, 0.0
        %v1512 = vmax.f32 %v1494, 0.0
        %v1513 = vmax.f32 %v1496, 0.0
        %v1514 = vadd.f32 %v1498, %v1499
        %v1515 = vadd.f32 %v1514, %v1500
        %v1516 = vadd.f32 %v1515, %v1501
        %1517 = vadd.xlane.f32.xlu0 %v1516
        %v1518 = vpop.xlane.xlu0 %1517
        %v1519 = vadd.f32 %v1502, %v1503
        %v1520 = vadd.f32 %v1519, %v1504
        %v1521 = vadd.f32 %v1520, %v1505
        %1522 = vadd.xlane.f32.xlu0 %v1521
        %v1523 = vpop.xlane.xlu0 %1522
        %v1524 = vadd.f32 %v1506, %v1507
        %v1525 = vadd.f32 %v1524, %v1508
        %v1526 = vadd.f32 %v1525, %v1509
        %1527 = vadd.xlane.f32.xlu0 %v1526
        %v1528 = vpop.xlane.xlu0 %1527
        %v1529 = vadd.f32 %v1510, %v1511
        %v1530 = vadd.f32 %v1529, %v1512
        %v1531 = vadd.f32 %v1530, %v1513
        %1532 = vadd.xlane.f32.xlu0 %v1531
        %v1533 = vpop.xlane.xlu0 %1532
        %v1534 = vrcp.pop 512.0
        %v1535 = vmul.f32 %v1518, %v1534
        %v1536 = vmul.f32 %v1523, %v1534
        %v1537 = vmul.f32 %v1528, %v1534
        %v1538 = vmul.f32 %v1533, %v1534
        %v1539 = vsub.f32 %v1498, %v1535
        %v1540 = vsub.f32 %v1499, %v1535
        %v1541 = vsub.f32 %v1500, %v1535
        %v1542 = vsub.f32 %v1501, %v1535
        %v1543 = vsub.f32 %v1502, %v1536
        %v1544 = vsub.f32 %v1503, %v1536
        %v1545 = vsub.f32 %v1504, %v1536
        %v1546 = vsub.f32 %v1505, %v1536
        %v1547 = vsub.f32 %v1506, %v1537
        %v1548 = vsub.f32 %v1507, %v1537
        %v1549 = vsub.f32 %v1508, %v1537
        %v1550 = vsub.f32 %v1509, %v1537
        %v1551 = vsub.f32 %v1510, %v1538
        %v1552 = vsub.f32 %v1511, %v1538
        %v1553 = vsub.f32 %v1512, %v1538
        %v1554 = vsub.f32 %v1513, %v1538
        %v1555 = vmul.f32 %v1539, %v1539
        %v1556 = vmul.f32 %v1540, %v1540
        %v1557 = vmul.f32 %v1541, %v1541
        %v1558 = vmul.f32 %v1542, %v1542
        %v1559 = vmul.f32 %v1543, %v1543
        %v1560 = vmul.f32 %v1544, %v1544
        %v1561 = vmul.f32 %v1545, %v1545
        %v1562 = vmul.f32 %v1546, %v1546
        %v1563 = vmul.f32 %v1547, %v1547
        %v1564 = vmul.f32 %v1548, %v1548
        %v1565 = vmul.f32 %v1549, %v1549
        %v1566 = vmul.f32 %v1550, %v1550
        %v1567 = vmul.f32 %v1551, %v1551
        %v1568 = vmul.f32 %v1552, %v1552
        %v1569 = vmul.f32 %v1553, %v1553
        %v1570 = vmul.f32 %v1554, %v1554
        %v1571 = vadd.f32 %v1555, %v1556
        %v1572 = vadd.f32 %v1571, %v1557
        %v1573 = vadd.f32 %v1572, %v1558
        %1574 = vadd.xlane.f32.xlu0 %v1573
        %v1575 = vpop.xlane.xlu0 %1574
        %v1576 = vadd.f32 %v1559, %v1560
        %v1577 = vadd.f32 %v1576, %v1561
        %v1578 = vadd.f32 %v1577, %v1562
        %1579 = vadd.xlane.f32.xlu0 %v1578
        %v1580 = vpop.xlane.xlu0 %1579
        %v1581 = vadd.f32 %v1563, %v1564
        %v1582 = vadd.f32 %v1581, %v1565
        %v1583 = vadd.f32 %v1582, %v1566
        %1584 = vadd.xlane.f32.xlu0 %v1583
        %v1585 = vpop.xlane.xlu0 %1584
        %v1586 = vadd.f32 %v1567, %v1568
        %v1587 = vadd.f32 %v1586, %v1569
        %v1588 = vadd.f32 %v1587, %v1570
        %1589 = vadd.xlane.f32.xlu0 %v1588
        %v1590 = vpop.xlane.xlu0 %1589
        %v1591 = vmul.f32 %v1575, %v1534
        %v1592 = vmul.f32 %v1580, %v1534
        %v1593 = vmul.f32 %v1585, %v1534
        %v1594 = vmul.f32 %v1590, %v1534
        %v1595 = vadd.f32 %v1591, 1e-05
        %v1596 = vadd.f32 %v1592, 1e-05
        %v1597 = vadd.f32 %v1593, 1e-05
        %v1598 = vadd.f32 %v1594, 1e-05
        %v1599 = vrsqrt.pop %v1595
        %v1600 = vrsqrt.pop %v1596
        %v1601 = vrsqrt.pop %v1597
        %v1602 = vrsqrt.pop %v1598
        %v1603 = vmul.f32 %v1539, %v1599
        %v1604 = vmul.f32 %v1540, %v1599
        %v1605 = vmul.f32 %v1541, %v1599
        %v1606 = vmul.f32 %v1542, %v1599
        %v1607 = vmul.f32 %v1543, %v1600
        %v1608 = vmul.f32 %v1544, %v1600
        %v1609 = vmul.f32 %v1545, %v1600
        %v1610 = vmul.f32 %v1546, %v1600
        %v1611 = vmul.f32 %v1547, %v1601
        %v1612 = vmul.f32 %v1548, %v1601
        %v1613 = vmul.f32 %v1549, %v1601
        %v1614 = vmul.f32 %v1550, %v1601
        %v1615 = vmul.f32 %v1551, %v1602
        %v1616 = vmul.f32 %v1552, %v1602
        %v1617 = vmul.f32 %v1553, %v1602
        %v1618 = vmul.f32 %v1554, %v1602
        %v1619 = vlaneseq
        %v1620 = vshrl.u32 %v1619, 7
        %v1621 = vsub.s32 1, %v1620
        %v1622 = vrot.slane %v867, %v1621
        %v1623 = vlaneseq
        %v1624 = vshrl.u32 %v1623, 7
        %v1625 = vsub.s32 5, %v1624
        %v1626 = vrot.slane %v867, %v1625
        %v1627 = vlaneseq
        %v1628 = vshrl.u32 %v1627, 7
        %v1629 = vsub.s32 1, %v1628
        %v1630 = vrot.slane %v868, %v1629
        %v1631 = vlaneseq
        %v1632 = vshrl.u32 %v1631, 7
        %v1633 = vsub.s32 5, %v1632
        %v1634 = vrot.slane %v868, %v1633
        %v1639 = vlaneseq
        %v1640 = vshrl.u32 %v1639, 7
        %v1641 = vsub.s32 1, %v1640
        %v1642 = vrot.slane %v1622, %v1641
        %v1643 = vlaneseq
        %v1644 = vshrl.u32 %v1643, 7
        %v1645 = vsub.s32 1, %v1644
        %v1646 = vrot.slane %v1626, %v1645
        %v1647 = vlaneseq
        %v1648 = vshrl.u32 %v1647, 7
        %v1649 = vsub.s32 1, %v1648
        %v1650 = vrot.slane %v1630, %v1649
        %v1651 = vlaneseq
        %v1652 = vshrl.u32 %v1651, 7
        %v1653 = vsub.s32 1, %v1652
        %v1654 = vrot.slane %v1634, %v1653
        %v1655 = vmul.f32 %v1603, %v1642
        %v1656 = vmul.f32 %v1604, %v1646
        %v1657 = vmul.f32 %v1605, %v1650
        %v1658 = vmul.f32 %v1606, %v1654
        %v1659 = vmul.f32 %v1607, %v1642
        %v1660 = vmul.f32 %v1608, %v1646
        %v1661 = vmul.f32 %v1609, %v1650
        %v1662 = vmul.f32 %v1610, %v1654
        %v1663 = vmul.f32 %v1611, %v1642
        %v1664 = vmul.f32 %v1612, %v1646
        %v1665 = vmul.f32 %v1613, %v1650
        %v1666 = vmul.f32 %v1614, %v1654
        %v1667 = vmul.f32 %v1615, %v1642
        %v1668 = vmul.f32 %v1616, %v1646
        %v1669 = vmul.f32 %v1617, %v1650
        %v1670 = vmul.f32 %v1618, %v1654
        %v1671 = vlaneseq
        %v1672 = vshrl.u32 %v1671, 7
        %v1673 = vsub.s32 2, %v1672
        %v1674 = vrot.slane %v867, %v1673
        %v1675 = vlaneseq
        %v1676 = vshrl.u32 %v1675, 7
        %v1677 = vsub.s32 6, %v1676
        %v1678 = vrot.slane %v867, %v1677
        %v1679 = vlaneseq
        %v1680 = vshrl.u32 %v1679, 7
        %v1681 = vsub.s32 2, %v1680
        %v1682 = vrot.slane %v868, %v1681
        %v1683 = vlaneseq
        %v1684 = vshrl.u32 %v1683, 7
        %v1685 = vsub.s32 6, %v1684
        %v1686 = vrot.slane %v868, %v1685
        %v1691 = vlaneseq
        %v1692 = vshrl.u32 %v1691, 7
        %v1693 = vsub.s32 2, %v1692
        %v1694 = vrot.slane %v1674, %v1693
        %v1695 = vlaneseq
        %v1696 = vshrl.u32 %v1695, 7
        %v1697 = vsub.s32 2, %v1696
        %v1698 = vrot.slane %v1678, %v1697
        %v1699 = vlaneseq
        %v1700 = vshrl.u32 %v1699, 7
        %v1701 = vsub.s32 2, %v1700
        %v1702 = vrot.slane %v1682, %v1701
        %v1703 = vlaneseq
        %v1704 = vshrl.u32 %v1703, 7
        %v1705 = vsub.s32 2, %v1704
        %v1706 = vrot.slane %v1686, %v1705
        %v1707 = vadd.f32 %v1655, %v1694
        %v1708 = vadd.f32 %v1656, %v1698
        %v1709 = vadd.f32 %v1657, %v1702
        %v1710 = vadd.f32 %v1658, %v1706
        %v1711 = vadd.f32 %v1659, %v1694
        %v1712 = vadd.f32 %v1660, %v1698
        %v1713 = vadd.f32 %v1661, %v1702
        %v1714 = vadd.f32 %v1662, %v1706
        %v1715 = vadd.f32 %v1663, %v1694
        %v1716 = vadd.f32 %v1664, %v1698
        %v1717 = vadd.f32 %v1665, %v1702
        %v1718 = vadd.f32 %v1666, %v1706
        %v1719 = vadd.f32 %v1667, %v1694
        %v1720 = vadd.f32 %v1668, %v1698
        %v1721 = vadd.f32 %v1669, %v1702
        %v1722 = vadd.f32 %v1670, %v1706
        %v1723 = vpack.c.bf16 %v1711, %v1707
        %v1724 = vpack.c.bf16 %v1712, %v1708
        %v1725 = vpack.c.bf16 %v1713, %v1709
        %v1726 = vpack.c.bf16 %v1714, %v1710
        %v1727 = vpack.c.bf16 %v1719, %v1715
        %v1728 = vpack.c.bf16 %v1720, %v1716
        %v1729 = vpack.c.bf16 %v1721, %v1717
        %v1730 = vpack.c.bf16 %v1722, %v1718
        %v1731 = vld [vmem:[%s710] sm:$0xff]
        %v1732 = vld [vmem:[%s710 + $0x8] sm:$0xff]
        %v1733 = vld [vmem:[%s710 + $0x10] sm:$0xff]
        %v1734 = vld [vmem:[%s710 + $0x18] sm:$0xff]
        %v1735 = vld [vmem:[%s710 + $0x20] sm:$0xff]
        %v1736 = vld [vmem:[%s710 + $0x28] sm:$0xff]
        %v1737 = vld [vmem:[%s710 + $0x30] sm:$0xff]
        %v1738 = vld [vmem:[%s710 + $0x38] sm:$0xff]
        %v1739 = vld [vmem:[%s710 + $0x40] sm:$0xff]
        %v1740 = vld [vmem:[%s710 + $0x48] sm:$0xff]
        %v1741 = vld [vmem:[%s710 + $0x50] sm:$0xff]
        %v1742 = vld [vmem:[%s710 + $0x58] sm:$0xff]
        %v1743 = vld [vmem:[%s710 + $0x60] sm:$0xff]
        %v1744 = vld [vmem:[%s710 + $0x68] sm:$0xff]
        %v1745 = vld [vmem:[%s710 + $0x70] sm:$0xff]
        %v1746 = vld [vmem:[%s710 + $0x78] sm:$0xff]
        %v1747 = vld [vmem:[%s710 + $0x80] sm:$0xff]
        %v1748 = vld [vmem:[%s710 + $0x88] sm:$0xff]
        %v1749 = vld [vmem:[%s710 + $0x90] sm:$0xff]
        %v1750 = vld [vmem:[%s710 + $0x98] sm:$0xff]
        %v1751 = vld [vmem:[%s710 + $0xa0] sm:$0xff]
        %v1752 = vld [vmem:[%s710 + $0xa8] sm:$0xff]
        %v1753 = vld [vmem:[%s710 + $0xb0] sm:$0xff]
        %v1754 = vld [vmem:[%s710 + $0xb8] sm:$0xff]
        %v1755 = vld [vmem:[%s710 + $0xc0] sm:$0xff]
        %v1756 = vld [vmem:[%s710 + $0xc8] sm:$0xff]
        %v1757 = vld [vmem:[%s710 + $0xd0] sm:$0xff]
        %v1758 = vld [vmem:[%s710 + $0xd8] sm:$0xff]
        %v1759 = vld [vmem:[%s710 + $0xe0] sm:$0xff]
        %v1760 = vld [vmem:[%s710 + $0xe8] sm:$0xff]
        %v1761 = vld [vmem:[%s710 + $0xf0] sm:$0xff]
        %v1762 = vld [vmem:[%s710 + $0xf8] sm:$0xff]
        %v1763 = vld [vmem:[%s710 + $0x100] sm:$0xff]
        %v1764 = vld [vmem:[%s710 + $0x108] sm:$0xff]
        %v1765 = vld [vmem:[%s710 + $0x110] sm:$0xff]
        %v1766 = vld [vmem:[%s710 + $0x118] sm:$0xff]
        %v1767 = vld [vmem:[%s710 + $0x120] sm:$0xff]
        %v1768 = vld [vmem:[%s710 + $0x128] sm:$0xff]
        %v1769 = vld [vmem:[%s710 + $0x130] sm:$0xff]
        %v1770 = vld [vmem:[%s710 + $0x138] sm:$0xff]
        %v1771 = vld [vmem:[%s710 + $0x140] sm:$0xff]
        %v1772 = vld [vmem:[%s710 + $0x148] sm:$0xff]
        %v1773 = vld [vmem:[%s710 + $0x150] sm:$0xff]
        %v1774 = vld [vmem:[%s710 + $0x158] sm:$0xff]
        %v1775 = vld [vmem:[%s710 + $0x160] sm:$0xff]
        %v1776 = vld [vmem:[%s710 + $0x168] sm:$0xff]
        %v1777 = vld [vmem:[%s710 + $0x170] sm:$0xff]
        %v1778 = vld [vmem:[%s710 + $0x178] sm:$0xff]
        %v1779 = vld [vmem:[%s710 + $0x180] sm:$0xff]
        %v1780 = vld [vmem:[%s710 + $0x188] sm:$0xff]
        %v1781 = vld [vmem:[%s710 + $0x190] sm:$0xff]
        %v1782 = vld [vmem:[%s710 + $0x198] sm:$0xff]
        %v1783 = vld [vmem:[%s710 + $0x1a0] sm:$0xff]
        %v1784 = vld [vmem:[%s710 + $0x1a8] sm:$0xff]
        %v1785 = vld [vmem:[%s710 + $0x1b0] sm:$0xff]
        %v1786 = vld [vmem:[%s710 + $0x1b8] sm:$0xff]
        %v1787 = vld [vmem:[%s710 + $0x1c0] sm:$0xff]
        %v1788 = vld [vmem:[%s710 + $0x1c8] sm:$0xff]
        %v1789 = vld [vmem:[%s710 + $0x1d0] sm:$0xff]
        %v1790 = vld [vmem:[%s710 + $0x1d8] sm:$0xff]
        %v1791 = vld [vmem:[%s710 + $0x1e0] sm:$0xff]
        %v1792 = vld [vmem:[%s710 + $0x1e8] sm:$0xff]
        %v1793 = vld [vmem:[%s710 + $0x1f0] sm:$0xff]
        %v1794 = vld [vmem:[%s710 + $0x1f8] sm:$0xff]
        %v1859 = vunpack.c.l.b16 %v1731
        %v1860 = vunpack.c.h.b16 %v1731
        %v1861 = vunpack.c.l.b16 %v1732
        %v1862 = vunpack.c.h.b16 %v1732
        %v1863 = vunpack.c.l.b16 %v1733
        %v1864 = vunpack.c.h.b16 %v1733
        %v1865 = vunpack.c.l.b16 %v1734
        %v1866 = vunpack.c.h.b16 %v1734
        %v1867 = vunpack.c.l.b16 %v1735
        %v1868 = vunpack.c.h.b16 %v1735
        %v1869 = vunpack.c.l.b16 %v1736
        %v1870 = vunpack.c.h.b16 %v1736
        %v1871 = vunpack.c.l.b16 %v1737
        %v1872 = vunpack.c.h.b16 %v1737
        %v1873 = vunpack.c.l.b16 %v1738
        %v1874 = vunpack.c.h.b16 %v1738
        %v1875 = vunpack.c.l.b16 %v1739
        %v1876 = vunpack.c.h.b16 %v1739
        %v1877 = vunpack.c.l.b16 %v1740
        %v1878 = vunpack.c.h.b16 %v1740
        %v1879 = vunpack.c.l.b16 %v1741
        %v1880 = vunpack.c.h.b16 %v1741
        %v1881 = vunpack.c.l.b16 %v1742
        %v1882 = vunpack.c.h.b16 %v1742
        %v1883 = vunpack.c.l.b16 %v1743
        %v1884 = vunpack.c.h.b16 %v1743
        %v1885 = vunpack.c.l.b16 %v1744
        %v1886 = vunpack.c.h.b16 %v1744
        %v1887 = vunpack.c.l.b16 %v1745
        %v1888 = vunpack.c.h.b16 %v1745
        %v1889 = vunpack.c.l.b16 %v1746
        %v1890 = vunpack.c.h.b16 %v1746
        %v1891 = vunpack.c.l.b16 %v1747
        %v1892 = vunpack.c.h.b16 %v1747
        %v1893 = vunpack.c.l.b16 %v1748
        %v1894 = vunpack.c.h.b16 %v1748
        %v1895 = vunpack.c.l.b16 %v1749
        %v1896 = vunpack.c.h.b16 %v1749
        %v1897 = vunpack.c.l.b16 %v1750
        %v1898 = vunpack.c.h.b16 %v1750
        %v1899 = vunpack.c.l.b16 %v1751
        %v1900 = vunpack.c.h.b16 %v1751
        %v1901 = vunpack.c.l.b16 %v1752
        %v1902 = vunpack.c.h.b16 %v1752
        %v1903 = vunpack.c.l.b16 %v1753
        %v1904 = vunpack.c.h.b16 %v1753
        %v1905 = vunpack.c.l.b16 %v1754
        %v1906 = vunpack.c.h.b16 %v1754
        %v1907 = vunpack.c.l.b16 %v1755
        %v1908 = vunpack.c.h.b16 %v1755
        %v1909 = vunpack.c.l.b16 %v1756
        %v1910 = vunpack.c.h.b16 %v1756
        %v1911 = vunpack.c.l.b16 %v1757
        %v1912 = vunpack.c.h.b16 %v1757
        %v1913 = vunpack.c.l.b16 %v1758
        %v1914 = vunpack.c.h.b16 %v1758
        %v1915 = vunpack.c.l.b16 %v1759
        %v1916 = vunpack.c.h.b16 %v1759
        %v1917 = vunpack.c.l.b16 %v1760
        %v1918 = vunpack.c.h.b16 %v1760
        %v1919 = vunpack.c.l.b16 %v1761
        %v1920 = vunpack.c.h.b16 %v1761
        %v1921 = vunpack.c.l.b16 %v1762
        %v1922 = vunpack.c.h.b16 %v1762
        %v1923 = vunpack.c.l.b16 %v1763
        %v1924 = vunpack.c.h.b16 %v1763
        %v1925 = vunpack.c.l.b16 %v1764
        %v1926 = vunpack.c.h.b16 %v1764
        %v1927 = vunpack.c.l.b16 %v1765
        %v1928 = vunpack.c.h.b16 %v1765
        %v1929 = vunpack.c.l.b16 %v1766
        %v1930 = vunpack.c.h.b16 %v1766
        %v1931 = vunpack.c.l.b16 %v1767
        %v1932 = vunpack.c.h.b16 %v1767
        %v1933 = vunpack.c.l.b16 %v1768
        %v1934 = vunpack.c.h.b16 %v1768
        %v1935 = vunpack.c.l.b16 %v1769
        %v1936 = vunpack.c.h.b16 %v1769
        %v1937 = vunpack.c.l.b16 %v1770
        %v1938 = vunpack.c.h.b16 %v1770
        %v1939 = vunpack.c.l.b16 %v1771
        %v1940 = vunpack.c.h.b16 %v1771
        %v1941 = vunpack.c.l.b16 %v1772
        %v1942 = vunpack.c.h.b16 %v1772
        %v1943 = vunpack.c.l.b16 %v1773
        %v1944 = vunpack.c.h.b16 %v1773
        %v1945 = vunpack.c.l.b16 %v1774
        %v1946 = vunpack.c.h.b16 %v1774
        %v1947 = vunpack.c.l.b16 %v1775
        %v1948 = vunpack.c.h.b16 %v1775
        %v1949 = vunpack.c.l.b16 %v1776
        %v1950 = vunpack.c.h.b16 %v1776
        %v1951 = vunpack.c.l.b16 %v1777
        %v1952 = vunpack.c.h.b16 %v1777
        %v1953 = vunpack.c.l.b16 %v1778
        %v1954 = vunpack.c.h.b16 %v1778
        %v1955 = vunpack.c.l.b16 %v1779
        %v1956 = vunpack.c.h.b16 %v1779
        %v1957 = vunpack.c.l.b16 %v1780
        %v1958 = vunpack.c.h.b16 %v1780
        %v1959 = vunpack.c.l.b16 %v1781
        %v1960 = vunpack.c.h.b16 %v1781
        %v1961 = vunpack.c.l.b16 %v1782
        %v1962 = vunpack.c.h.b16 %v1782
        %v1963 = vunpack.c.l.b16 %v1783
        %v1964 = vunpack.c.h.b16 %v1783
        %v1965 = vunpack.c.l.b16 %v1784
        %v1966 = vunpack.c.h.b16 %v1784
        %v1967 = vunpack.c.l.b16 %v1785
        %v1968 = vunpack.c.h.b16 %v1785
        %v1969 = vunpack.c.l.b16 %v1786
        %v1970 = vunpack.c.h.b16 %v1786
        %v1971 = vunpack.c.l.b16 %v1787
        %v1972 = vunpack.c.h.b16 %v1787
        %v1973 = vunpack.c.l.b16 %v1788
        %v1974 = vunpack.c.h.b16 %v1788
        %v1975 = vunpack.c.l.b16 %v1789
        %v1976 = vunpack.c.h.b16 %v1789
        %v1977 = vunpack.c.l.b16 %v1790
        %v1978 = vunpack.c.h.b16 %v1790
        %v1979 = vunpack.c.l.b16 %v1791
        %v1980 = vunpack.c.h.b16 %v1791
        %v1981 = vunpack.c.l.b16 %v1792
        %v1982 = vunpack.c.h.b16 %v1792
        %v1983 = vunpack.c.l.b16 %v1793
        %v1984 = vunpack.c.h.b16 %v1793
        %v1985 = vunpack.c.l.b16 %v1794
        %v1986 = vunpack.c.h.b16 %v1794
        %v1987 = vpack.c.b16 %v1861, %v1859
        %v1988 = vpack.c.b16 %v1862, %v1860
        %v1989 = vpack.c.b16 %v1865, %v1863
        %v1990 = vpack.c.b16 %v1866, %v1864
        %v1991 = vpack.c.b16 %v1869, %v1867
        %v1992 = vpack.c.b16 %v1870, %v1868
        %v1993 = vpack.c.b16 %v1873, %v1871
        %v1994 = vpack.c.b16 %v1874, %v1872
        %v1995 = vpack.c.b16 %v1877, %v1875
        %v1996 = vpack.c.b16 %v1878, %v1876
        %v1997 = vpack.c.b16 %v1881, %v1879
        %v1998 = vpack.c.b16 %v1882, %v1880
        %v1999 = vpack.c.b16 %v1885, %v1883
        %v2000 = vpack.c.b16 %v1886, %v1884
        %v2001 = vpack.c.b16 %v1889, %v1887
        %v2002 = vpack.c.b16 %v1890, %v1888
        %v2003 = vpack.c.b16 %v1893, %v1891
        %v2004 = vpack.c.b16 %v1894, %v1892
        %v2005 = vpack.c.b16 %v1897, %v1895
        %v2006 = vpack.c.b16 %v1898, %v1896
        %v2007 = vpack.c.b16 %v1901, %v1899
        %v2008 = vpack.c.b16 %v1902, %v1900
        %v2009 = vpack.c.b16 %v1905, %v1903
        %v2010 = vpack.c.b16 %v1906, %v1904
        %v2011 = vpack.c.b16 %v1909, %v1907
        %v2012 = vpack.c.b16 %v1910, %v1908
        %v2013 = vpack.c.b16 %v1913, %v1911
        %v2014 = vpack.c.b16 %v1914, %v1912
        %v2015 = vpack.c.b16 %v1917, %v1915
        %v2016 = vpack.c.b16 %v1918, %v1916
        %v2017 = vpack.c.b16 %v1921, %v1919
        %v2018 = vpack.c.b16 %v1922, %v1920
        %v2019 = vpack.c.b16 %v1925, %v1923
        %v2020 = vpack.c.b16 %v1926, %v1924
        %v2021 = vpack.c.b16 %v1929, %v1927
        %v2022 = vpack.c.b16 %v1930, %v1928
        %v2023 = vpack.c.b16 %v1933, %v1931
        %v2024 = vpack.c.b16 %v1934, %v1932
        %v2025 = vpack.c.b16 %v1937, %v1935
        %v2026 = vpack.c.b16 %v1938, %v1936
        %v2027 = vpack.c.b16 %v1941, %v1939
        %v2028 = vpack.c.b16 %v1942, %v1940
        %v2029 = vpack.c.b16 %v1945, %v1943
        %v2030 = vpack.c.b16 %v1946, %v1944
        %v2031 = vpack.c.b16 %v1949, %v1947
        %v2032 = vpack.c.b16 %v1950, %v1948
        %v2033 = vpack.c.b16 %v1953, %v1951
        %v2034 = vpack.c.b16 %v1954, %v1952
        %v2035 = vpack.c.b16 %v1957, %v1955
        %v2036 = vpack.c.b16 %v1958, %v1956
        %v2037 = vpack.c.b16 %v1961, %v1959
        %v2038 = vpack.c.b16 %v1962, %v1960
        %v2039 = vpack.c.b16 %v1965, %v1963
        %v2040 = vpack.c.b16 %v1966, %v1964
        %v2041 = vpack.c.b16 %v1969, %v1967
        %v2042 = vpack.c.b16 %v1970, %v1968
        %v2043 = vpack.c.b16 %v1973, %v1971
        %v2044 = vpack.c.b16 %v1974, %v1972
        %v2045 = vpack.c.b16 %v1977, %v1975
        %v2046 = vpack.c.b16 %v1978, %v1976
        %v2047 = vpack.c.b16 %v1981, %v1979
        %v2048 = vpack.c.b16 %v1982, %v1980
        %v2049 = vpack.c.b16 %v1985, %v1983
        %v2050 = vpack.c.b16 %v1986, %v1984
        %2115 = vmatprep.subr.bf16.mxu0 %v1988
        %2116 = vmatpush1.bf16.msra.mxu0 %v1987
        %2117 = vmatprep.subr.bf16.mxu0 %v1990
        %2118 = vmatpush1.bf16.msra.mxu0 %v1989
        %2119 = vmatprep.subr.bf16.mxu0 %v1992
        %2120 = vmatpush1.bf16.msra.mxu0 %v1991
        %2121 = vmatprep.subr.bf16.mxu0 %v1994
        %2122 = vmatpush1.bf16.msra.mxu0 %v1993
        %2123 = vmatprep.subr.bf16.mxu0 %v1996
        %2124 = vmatpush1.bf16.msra.mxu0 %v1995
        %2125 = vmatprep.subr.bf16.mxu0 %v1998
        %2126 = vmatpush1.bf16.msra.mxu0 %v1997
        %2127 = vmatprep.subr.bf16.mxu0 %v2000
        %2128 = vmatpush1.bf16.msra.mxu0 %v1999
        %2129 = vmatprep.subr.bf16.mxu0 %v2002
        %2130 = vmatpush1.bf16.msra.mxu0 %v2001
        %2131 = vmatprep.subr.bf16.mxu0 %v2004
        %2132 = vmatpush1.bf16.msra.mxu0 %v2003
        %2133 = vmatprep.subr.bf16.mxu0 %v2006
        %2134 = vmatpush1.bf16.msra.mxu0 %v2005
        %2135 = vmatprep.subr.bf16.mxu0 %v2008
        %2136 = vmatpush1.bf16.msra.mxu0 %v2007
        %2137 = vmatprep.subr.bf16.mxu0 %v2010
        %2138 = vmatpush1.bf16.msra.mxu0 %v2009
        %2139 = vmatprep.subr.bf16.mxu0 %v2012
        %2140 = vmatpush1.bf16.msra.mxu0 %v2011
        %2141 = vmatprep.subr.bf16.mxu0 %v2014
        %2142 = vmatpush1.bf16.msra.mxu0 %v2013
        %2143 = vmatprep.subr.bf16.mxu0 %v2016
        %2144 = vmatpush1.bf16.msra.mxu0 %v2015
        %2145 = vmatprep.subr.bf16.mxu0 %v2018
        %2146 = vmatpush1.bf16.msra.mxu0 %v2017
        %2147 = vmatprep.mubr.bf16.mxu0 %v1724
        %2148 = vmatmul.mubr.bf16.gmra.mrb[0].mxu0 %v1723
        %v2149 = vpop.f32.mrb[0].mxu0
        %v2150 = vadd.f32 0.0, %v2149
        %v2151 = vpop.f32.mrb[0].mxu0
        %v2152 = vadd.f32 0.0, %v2151
        %v2153 = vpop.f32.mrb[0].mxu0
        %v2154 = vadd.f32 0.0, %v2153
        %v2155 = vpop.f32.mrb[0].mxu0
        %v2156 = vadd.f32 0.0, %v2155
        %2157 = vmatprep.mubr.bf16.mxu0 %v1728
        %2158 = vmatmul.mubr.bf16.gmra.mrb[0].mxu0 %v1727
        %v2159 = vpop.f32.mrb[0].mxu0
        %v2160 = vadd.f32 0.0, %v2159
        %v2161 = vpop.f32.mrb[0].mxu0
        %v2162 = vadd.f32 0.0, %v2161
        %v2163 = vpop.f32.mrb[0].mxu0
        %v2164 = vadd.f32 0.0, %v2163
        %v2165 = vpop.f32.mrb[0].mxu0
        %v2166 = vadd.f32 0.0, %v2165
        %2167 = vdwg.mxu0
        %2168 = vmatprep.subr.bf16.mxu0 %v2020
        %2169 = vmatpush1.bf16.msra.mxu0 %v2019
        %2170 = vmatprep.subr.bf16.mxu0 %v2022
        %2171 = vmatpush1.bf16.msra.mxu0 %v2021
        %2172 = vmatprep.subr.bf16.mxu0 %v2024
        %2173 = vmatpush1.bf16.msra.mxu0 %v2023
        %2174 = vmatprep.subr.bf16.mxu0 %v2026
        %2175 = vmatpush1.bf16.msra.mxu0 %v2025
        %2176 = vmatprep.subr.bf16.mxu0 %v2028
        %2177 = vmatpush1.bf16.msra.mxu0 %v2027
        %2178 = vmatprep.subr.bf16.mxu0 %v2030
        %2179 = vmatpush1.bf16.msra.mxu0 %v2029
        %2180 = vmatprep.subr.bf16.mxu0 %v2032
        %2181 = vmatpush1.bf16.msra.mxu0 %v2031
        %2182 = vmatprep.subr.bf16.mxu0 %v2034
        %2183 = vmatpush1.bf16.msra.mxu0 %v2033
        %2184 = vmatprep.subr.bf16.mxu0 %v2036
        %2185 = vmatpush1.bf16.msra.mxu0 %v2035
        %2186 = vmatprep.subr.bf16.mxu0 %v2038
        %2187 = vmatpush1.bf16.msra.mxu0 %v2037
        %2188 = vmatprep.subr.bf16.mxu0 %v2040
        %2189 = vmatpush1.bf16.msra.mxu0 %v2039
        %2190 = vmatprep.subr.bf16.mxu0 %v2042
        %2191 = vmatpush1.bf16.msra.mxu0 %v2041
        %2192 = vmatprep.subr.bf16.mxu0 %v2044
        %2193 = vmatpush1.bf16.msra.mxu0 %v2043
        %2194 = vmatprep.subr.bf16.mxu0 %v2046
        %2195 = vmatpush1.bf16.msra.mxu0 %v2045
        %2196 = vmatprep.subr.bf16.mxu0 %v2048
        %2197 = vmatpush1.bf16.msra.mxu0 %v2047
        %2198 = vmatprep.subr.bf16.mxu0 %v2050
        %2199 = vmatpush1.bf16.msra.mxu0 %v2049
        %2200 = vmatprep.mubr.bf16.mxu0 %v1726
        %2201 = vmatmul.mubr.bf16.gmra.mrb[0].mxu0 %v1725
        %v2202 = vpop.f32.mrb[0].mxu0
        %v2203 = vadd.f32 %v2150, %v2202
        %v2204 = vpop.f32.mrb[0].mxu0
        %v2205 = vadd.f32 %v2152, %v2204
        %v2206 = vpop.f32.mrb[0].mxu0
        %v2207 = vadd.f32 %v2154, %v2206
        %v2208 = vpop.f32.mrb[0].mxu0
        %v2209 = vadd.f32 %v2156, %v2208
        %2210 = vmatprep.mubr.bf16.mxu0 %v1730
        %2211 = vmatmul.mubr.bf16.gmra.mrb[0].mxu0 %v1729
        %v2212 = vpop.f32.mrb[0].mxu0
        %v2213 = vadd.f32 %v2160, %v2212
        %v2214 = vpop.f32.mrb[0].mxu0
        %v2215 = vadd.f32 %v2162, %v2214
        %v2216 = vpop.f32.mrb[0].mxu0
        %v2217 = vadd.f32 %v2164, %v2216
        %v2218 = vpop.f32.mrb[0].mxu0
        %v2219 = vadd.f32 %v2166, %v2218
        %2220 = vdwg.mxu0
        %v2221 = vadd.f32 %v2203, %v2205
        %2222 = vadd.xlane.f32.xlu0 %v2221
        %v2223 = vpop.xlane.xlu0 %2222
        %v2224 = vadd.f32 %v2207, %v2209
        %2225 = vadd.xlane.f32.xlu0 %v2224
        %v2226 = vpop.xlane.xlu0 %2225
        %v2227 = vadd.f32 %v2213, %v2215
        %2228 = vadd.xlane.f32.xlu0 %v2227
        %v2229 = vpop.xlane.xlu0 %2228
        %v2230 = vadd.f32 %v2217, %v2219
        %2231 = vadd.xlane.f32.xlu0 %v2230
        %v2232 = vpop.xlane.xlu0 %2231
        %v2233 = vmul.f32 %v2223, %v881
        %v2234 = vmul.f32 %v2226, %v881
        %v2235 = vmul.f32 %v2229, %v881
        %v2236 = vmul.f32 %v2232, %v881
        %v2237 = vsub.f32 %v2203, %v2233
        %v2238 = vsub.f32 %v2205, %v2233
        %v2239 = vsub.f32 %v2207, %v2234
        %v2240 = vsub.f32 %v2209, %v2234
        %v2241 = vsub.f32 %v2213, %v2235
        %v2242 = vsub.f32 %v2215, %v2235
        %v2243 = vsub.f32 %v2217, %v2236
        %v2244 = vsub.f32 %v2219, %v2236
        %v2245 = vmul.f32 %v2237, %v2237
        %v2246 = vmul.f32 %v2238, %v2238
        %v2247 = vmul.f32 %v2239, %v2239
        %v2248 = vmul.f32 %v2240, %v2240
        %v2249 = vmul.f32 %v2241, %v2241
        %v2250 = vmul.f32 %v2242, %v2242
        %v2251 = vmul.f32 %v2243, %v2243
        %v2252 = vmul.f32 %v2244, %v2244
        %v2253 = vadd.f32 %v2245, %v2246
        %2254 = vadd.xlane.f32.xlu0 %v2253
        %v2255 = vpop.xlane.xlu0 %2254
        %v2256 = vadd.f32 %v2247, %v2248
        %2257 = vadd.xlane.f32.xlu0 %v2256
        %v2258 = vpop.xlane.xlu0 %2257
        %v2259 = vadd.f32 %v2249, %v2250
        %2260 = vadd.xlane.f32.xlu0 %v2259
        %v2261 = vpop.xlane.xlu0 %2260
        %v2262 = vadd.f32 %v2251, %v2252
        %2263 = vadd.xlane.f32.xlu0 %v2262
        %v2264 = vpop.xlane.xlu0 %2263
        %v2265 = vmul.f32 %v2255, %v881
        %v2266 = vmul.f32 %v2258, %v881
        %v2267 = vmul.f32 %v2261, %v881
        %v2268 = vmul.f32 %v2264, %v881
        %v2269 = vadd.f32 %v2265, 1e-05
        %v2270 = vadd.f32 %v2266, 1e-05
        %v2271 = vadd.f32 %v2267, 1e-05
        %v2272 = vadd.f32 %v2268, 1e-05
        %v2273 = vrsqrt.pop %v2269
        %v2274 = vrsqrt.pop %v2270
        %v2275 = vrsqrt.pop %v2271
        %v2276 = vrsqrt.pop %v2272
        %v2277 = vmul.f32 %v2237, %v2273
        %v2278 = vmul.f32 %v2238, %v2273
        %v2279 = vmul.f32 %v2239, %v2274
        %v2280 = vmul.f32 %v2240, %v2274
        %v2281 = vmul.f32 %v2241, %v2275
        %v2282 = vmul.f32 %v2242, %v2275
        %v2283 = vmul.f32 %v2243, %v2276
        %v2284 = vmul.f32 %v2244, %v2276
        %v2285 = vlaneseq
        %v2286 = vshrl.u32 %v2285, 7
        %v2287 = vsub.s32 2, %v2286
        %v2288 = vrot.slane %v863, %v2287
        %v2289 = vlaneseq
        %v2290 = vshrl.u32 %v2289, 7
        %v2291 = vsub.s32 2, %v2290
        %v2292 = vrot.slane %v864, %v2291
        %v2293 = vmul.f32 %v2277, %v2288
        %v2294 = vmul.f32 %v2278, %v2292
        %v2295 = vmul.f32 %v2279, %v2288
        %v2296 = vmul.f32 %v2280, %v2292
        %v2297 = vmul.f32 %v2281, %v2288
        %v2298 = vmul.f32 %v2282, %v2292
        %v2299 = vmul.f32 %v2283, %v2288
        %v2300 = vmul.f32 %v2284, %v2292
        %v2301 = vlaneseq
        %v2302 = vshrl.u32 %v2301, 7
        %v2303 = vsub.s32 3, %v2302
        %v2304 = vrot.slane %v863, %v2303
        %v2305 = vlaneseq
        %v2306 = vshrl.u32 %v2305, 7
        %v2307 = vsub.s32 3, %v2306
        %v2308 = vrot.slane %v864, %v2307
        %v2309 = vadd.f32 %v2293, %v2304
        %v2310 = vadd.f32 %v2294, %v2308
        %v2311 = vadd.f32 %v2295, %v2304
        %v2312 = vadd.f32 %v2296, %v2308
        %v2313 = vadd.f32 %v2297, %v2304
        %v2314 = vadd.f32 %v2298, %v2308
        %v2315 = vadd.f32 %v2299, %v2304
        %v2316 = vadd.f32 %v2300, %v2308
        %2318 = vset.pattern.permute.xlu0 0
        %2319 = vperm.xlu0 %2318, %v857
        %v2320 = vpop.permute.xlu0 %2319
        %2323 = vset.pattern.permute.xlu0 0
        %2324 = vperm.xlu0 %2323, %v858
        %v2325 = vpop.permute.xlu0 %2324
        %2328 = vset.pattern.permute.xlu0 0
        %2329 = vperm.xlu0 %2328, %v859
        %v2330 = vpop.permute.xlu0 %2329
        %2333 = vset.pattern.permute.xlu0 0
        %2334 = vperm.xlu0 %2333, %v860
        %v2335 = vpop.permute.xlu0 %2334
        %v2337 = vmul.f32 %v2309, %v2320
        %v2338 = vmul.f32 %v2310, %v2320
        %v2339 = vmul.f32 %v2311, %v2325
        %v2340 = vmul.f32 %v2312, %v2325
        %v2341 = vmul.f32 %v2313, %v2330
        %v2342 = vmul.f32 %v2314, %v2330
        %v2343 = vmul.f32 %v2315, %v2335
        %v2344 = vmul.f32 %v2316, %v2335
        %2345 = vst [vmem:[#allocation3 + $0x10] sm:$0xff] %v2337
        %2346 = vst [vmem:[#allocation3 + $0x18] sm:$0xff] %v2338
        %2347 = vst [vmem:[#allocation3 + $0x20] sm:$0xff] %v2339
        %2348 = vst [vmem:[#allocation3 + $0x28] sm:$0xff] %v2340
        %2349 = vst [vmem:[#allocation3 + $0x50] sm:$0xff] %v2341
        %2350 = vst [vmem:[#allocation3 + $0x58] sm:$0xff] %v2342
        %2351 = vst [vmem:[#allocation3 + $0x60] sm:$0xff] %v2343
        %2352 = vst [vmem:[#allocation3 + $0x68] sm:$0xff] %v2344
        %v2353 = vld [vmem:[%s692] sm:$0xff]
        %v2354 = vld [vmem:[%s692 + $0x8] sm:$0xff]
        %v2355 = vld [vmem:[%s692 + $0x10] sm:$0x7]
        %v2356 = vld [vmem:[%s692 + $0x18] sm:$0x7]
        %v2357 = vld [vmem:[#allocation3] sm:$0xf8]
        %v2358 = vld [vmem:[#allocation3 + $0x8] sm:$0xf8]
        %v2359 = vld [vmem:[#allocation3 + $0x10] sm:$0xff]
        %v2360 = vld [vmem:[#allocation3 + $0x18] sm:$0xff]
        %v2361 = vld [vmem:[#allocation3 + $0x20] sm:$0x7]
        %v2362 = vld [vmem:[#allocation3 + $0x28] sm:$0x7]
        %v2363 = vld [vmem:[#allocation3 + $0x40] sm:$0xf8]
        %v2364 = vld [vmem:[#allocation3 + $0x48] sm:$0xf8]
        %v2365 = vld [vmem:[#allocation3 + $0x50] sm:$0xff]
        %v2366 = vld [vmem:[#allocation3 + $0x58] sm:$0xff]
        %v2367 = vld [vmem:[#allocation3 + $0x60] sm:$0x7]
        %v2368 = vld [vmem:[#allocation3 + $0x68] sm:$0x7]
        %v2369 = vlaneseq
        %v2370 = vshrl.u32 %v2369, 7
        %v2371 = vsub.s32 0, %v2370
        %v2372 = vrot.slane %v2353, %v2371
        %v2373 = vlaneseq
        %v2374 = vshrl.u32 %v2373, 7
        %v2375 = vsub.s32 0, %v2374
        %v2376 = vrot.slane %v2354, %v2375
        %v2377 = vmul.f32 %v2357, %v2372
        %v2378 = vmul.f32 %v2358, %v2376
        %v2379 = vmul.f32 %v2359, %v2372
        %v2380 = vmul.f32 %v2360, %v2376
        %v2381 = vmul.f32 %v2361, %v2372
        %v2382 = vmul.f32 %v2362, %v2376
        %v2383 = vmul.f32 %v2363, %v2372
        %v2384 = vmul.f32 %v2364, %v2376
        %v2385 = vmul.f32 %v2365, %v2372
        %v2386 = vmul.f32 %v2366, %v2376
        %v2387 = vmul.f32 %v2367, %v2372
        %v2388 = vmul.f32 %v2368, %v2376
        %v2389 = vadd.f32 %v2377, 0.0
        %v2390 = vadd.f32 %v2378, 0.0
        %v2391 = vadd.f32 %v2379, 0.0
        %v2392 = vadd.f32 %v2380, 0.0
        %v2393 = vadd.f32 %v2381, 0.0
        %v2394 = vadd.f32 %v2382, 0.0
        %v2395 = vadd.f32 %v2383, 0.0
        %v2396 = vadd.f32 %v2384, 0.0
        %v2397 = vadd.f32 %v2385, 0.0
        %v2398 = vadd.f32 %v2386, 0.0
        %v2399 = vadd.f32 %v2387, 0.0
        %v2400 = vadd.f32 %v2388, 0.0
        %v2401 = vld [vmem:[#allocation3] sm:$0xf0]
        %v2402 = vld [vmem:[#allocation3 + $0x8] sm:$0xf0]
        %v2403 = vld [vmem:[#allocation3 + $0x20] sm:$0xf]
        %v2404 = vld [vmem:[#allocation3 + $0x28] sm:$0xf]
        %v2405 = vld [vmem:[#allocation3 + $0x40] sm:$0xf0]
        %v2406 = vld [vmem:[#allocation3 + $0x48] sm:$0xf0]
        %v2407 = vld [vmem:[#allocation3 + $0x60] sm:$0xf]
        %v2408 = vld [vmem:[#allocation3 + $0x68] sm:$0xf]
        %v2409 = vlaneseq
        %v2410 = vshrl.u32 %v2409, 7
        %v2411 = vsub.s32 1, %v2410
        %v2412 = vrot.slane %v2353, %v2411
        %v2413 = vlaneseq
        %v2414 = vshrl.u32 %v2413, 7
        %v2415 = vsub.s32 1, %v2414
        %v2416 = vrot.slane %v2354, %v2415
        %v2417 = vmul.f32 %v2401, %v2412
        %v2418 = vmul.f32 %v2402, %v2416
        %v2419 = vmul.f32 %v2359, %v2412
        %v2420 = vmul.f32 %v2360, %v2416
        %v2421 = vmul.f32 %v2403, %v2412
        %v2422 = vmul.f32 %v2404, %v2416
        %v2423 = vmul.f32 %v2405, %v2412
        %v2424 = vmul.f32 %v2406, %v2416
        %v2425 = vmul.f32 %v2365, %v2412
        %v2426 = vmul.f32 %v2366, %v2416
        %v2427 = vmul.f32 %v2407, %v2412
        %v2428 = vmul.f32 %v2408, %v2416
        %vm2441 = vcmask 1046528
        %v2442 = vrot.slane %v2417, 1
        %v2443 = vrot.slane %v2419, 1
        %v2444 = vsel %vm2441, %v2442, %v2443
        %v2445 = vrot.slane %v2418, 1
        %v2446 = vrot.slane %v2420, 1
        %v2447 = vsel %vm2441, %v2445, %v2446
        %v2448 = vrot.slane %v2421, 1
        %v2449 = vsel %vm2441, %v2443, %v2448
        %v2450 = vrot.slane %v2422, 1
        %v2451 = vsel %vm2441, %v2446, %v2450
        %v2452 = vrot.slane %v2423, 1
        %v2453 = vrot.slane %v2425, 1
        %v2454 = vsel %vm2441, %v2452, %v2453
        %v2455 = vrot.slane %v2424, 1
        %v2456 = vrot.slane %v2426, 1
        %v2457 = vsel %vm2441, %v2455, %v2456
        %v2458 = vrot.slane %v2427, 1
        %v2459 = vsel %vm2441, %v2453, %v2458
        %v2460 = vrot.slane %v2428, 1
        %v2461 = vsel %vm2441, %v2456, %v2460
        %v2474 = vadd.f32 %v2389, %v2444
        %v2475 = vadd.f32 %v2390, %v2447
        %v2476 = vadd.f32 %v2391, %v2449
        %v2477 = vadd.f32 %v2392, %v2451
        %v2478 = vadd.f32 %v2393, %v2448
        %v2479 = vadd.f32 %v2394, %v2450
        %v2480 = vadd.f32 %v2395, %v2454
        %v2481 = vadd.f32 %v2396, %v2457
        %v2482 = vadd.f32 %v2397, %v2459
        %v2483 = vadd.f32 %v2398, %v2461
        %v2484 = vadd.f32 %v2399, %v2458
        %v2485 = vadd.f32 %v2400, %v2460
        %v2486 = vld [vmem:[#allocation3] sm:$0xe0]
        %v2487 = vld [vmem:[#allocation3 + $0x8] sm:$0xe0]
        %v2488 = vld [vmem:[#allocation3 + $0x20] sm:$0x1f]
        %v2489 = vld [vmem:[#allocation3 + $0x28] sm:$0x1f]
        %v2490 = vld [vmem:[#allocation3 + $0x40] sm:$0xe0]
        %v2491 = vld [vmem:[#allocation3 + $0x48] sm:$0xe0]
        %v2492 = vld [vmem:[#allocation3 + $0x60] sm:$0x1f]
        %v2493 = vld [vmem:[#allocation3 + $0x68] sm:$0x1f]
        %v2494 = vlaneseq
        %v2495 = vshrl.u32 %v2494, 7
        %v2496 = vsub.s32 2, %v2495
        %v2497 = vrot.slane %v2353, %v2496
        %v2498 = vlaneseq
        %v2499 = vshrl.u32 %v2498, 7
        %v2500 = vsub.s32 2, %v2499
        %v2501 = vrot.slane %v2354, %v2500
        %v2502 = vmul.f32 %v2486, %v2497
        %v2503 = vmul.f32 %v2487, %v2501
        %v2504 = vmul.f32 %v2359, %v2497
        %v2505 = vmul.f32 %v2360, %v2501
        %v2506 = vmul.f32 %v2488, %v2497
        %v2507 = vmul.f32 %v2489, %v2501
        %v2508 = vmul.f32 %v2490, %v2497
        %v2509 = vmul.f32 %v2491, %v2501
        %v2510 = vmul.f32 %v2365, %v2497
        %v2511 = vmul.f32 %v2366, %v2501
        %v2512 = vmul.f32 %v2492, %v2497
        %v2513 = vmul.f32 %v2493, %v2501
        %vm2526 = vcmask 1045504
        %v2527 = vrot.slane %v2502, 2
        %v2528 = vrot.slane %v2504, 2
        %v2529 = vsel %vm2526, %v2527, %v2528
        %v2530 = vrot.slane %v2503, 2
        %v2531 = vrot.slane %v2505, 2
        %v2532 = vsel %vm2526, %v2530, %v2531
        %v2533 = vrot.slane %v2506, 2
        %v2534 = vsel %vm2526, %v2528, %v2533
        %v2535 = vrot.slane %v2507, 2
        %v2536 = vsel %vm2526, %v2531, %v2535
        %v2537 = vrot.slane %v2508, 2
        %v2538 = vrot.slane %v2510, 2
        %v2539 = vsel %vm2526, %v2537, %v2538
        %v2540 = vrot.slane %v2509, 2
        %v2541 = vrot.slane %v2511, 2
        %v2542 = vsel %vm2526, %v2540, %v2541
        %v2543 = vrot.slane %v2512, 2
        %v2544 = vsel %vm2526, %v2538, %v2543
        %v2545 = vrot.slane %v2513, 2
        %v2546 = vsel %vm2526, %v2541, %v2545
        %v2559 = vadd.f32 %v2474, %v2529
        %v2560 = vadd.f32 %v2475, %v2532
        %v2561 = vadd.f32 %v2476, %v2534
        %v2562 = vadd.f32 %v2477, %v2536
        %v2563 = vadd.f32 %v2478, %v2533
        %v2564 = vadd.f32 %v2479, %v2535
        %v2565 = vadd.f32 %v2480, %v2539
        %v2566 = vadd.f32 %v2481, %v2542
        %v2567 = vadd.f32 %v2482, %v2544
        %v2568 = vadd.f32 %v2483, %v2546
        %v2569 = vadd.f32 %v2484, %v2543
        %v2570 = vadd.f32 %v2485, %v2545
        %v2571 = vld [vmem:[#allocation3] sm:$0xc0]
        %v2572 = vld [vmem:[#allocation3 + $0x8] sm:$0xc0]
        %v2573 = vld [vmem:[#allocation3 + $0x20] sm:$0x3f]
        %v2574 = vld [vmem:[#allocation3 + $0x28] sm:$0x3f]
        %v2575 = vld [vmem:[#allocation3 + $0x40] sm:$0xc0]
        %v2576 = vld [vmem:[#allocation3 + $0x48] sm:$0xc0]
        %v2577 = vld [vmem:[#allocation3 + $0x60] sm:$0x3f]
        %v2578 = vld [vmem:[#allocation3 + $0x68] sm:$0x3f]
        %v2579 = vlaneseq
        %v2580 = vshrl.u32 %v2579, 7
        %v2581 = vsub.s32 3, %v2580
        %v2582 = vrot.slane %v2353, %v2581
        %v2583 = vlaneseq
        %v2584 = vshrl.u32 %v2583, 7
        %v2585 = vsub.s32 3, %v2584
        %v2586 = vrot.slane %v2354, %v2585
        %v2587 = vmul.f32 %v2571, %v2582
        %v2588 = vmul.f32 %v2572, %v2586
        %v2589 = vmul.f32 %v2359, %v2582
        %v2590 = vmul.f32 %v2360, %v2586
        %v2591 = vmul.f32 %v2573, %v2582
        %v2592 = vmul.f32 %v2574, %v2586
        %v2593 = vmul.f32 %v2575, %v2582
        %v2594 = vmul.f32 %v2576, %v2586
        %v2595 = vmul.f32 %v2365, %v2582
        %v2596 = vmul.f32 %v2366, %v2586
        %v2597 = vmul.f32 %v2577, %v2582
        %v2598 = vmul.f32 %v2578, %v2586
        %vm2611 = vcmask 1044480
        %v2612 = vrot.slane %v2587, 3
        %v2613 = vrot.slane %v2589, 3
        %v2614 = vsel %vm2611, %v2612, %v2613
        %v2615 = vrot.slane %v2588, 3
        %v2616 = vrot.slane %v2590, 3
        %v2617 = vsel %vm2611, %v2615, %v2616
        %v2618 = vrot.slane %v2591, 3
        %v2619 = vsel %vm2611, %v2613, %v2618
        %v2620 = vrot.slane %v2592, 3
        %v2621 = vsel %vm2611, %v2616, %v2620
        %v2622 = vrot.slane %v2593, 3
        %v2623 = vrot.slane %v2595, 3
        %v2624 = vsel %vm2611, %v2622, %v2623
        %v2625 = vrot.slane %v2594, 3
        %v2626 = vrot.slane %v2596, 3
        %v2627 = vsel %vm2611, %v2625, %v2626
        %v2628 = vrot.slane %v2597, 3
        %v2629 = vsel %vm2611, %v2623, %v2628
        %v2630 = vrot.slane %v2598, 3
        %v2631 = vsel %vm2611, %v2626, %v2630
        %v2644 = vadd.f32 %v2559, %v2614
        %v2645 = vadd.f32 %v2560, %v2617
        %v2646 = vadd.f32 %v2561, %v2619
        %v2647 = vadd.f32 %v2562, %v2621
        %v2648 = vadd.f32 %v2563, %v2618
        %v2649 = vadd.f32 %v2564, %v2620
        %v2650 = vadd.f32 %v2565, %v2624
        %v2651 = vadd.f32 %v2566, %v2627
        %v2652 = vadd.f32 %v2567, %v2629
        %v2653 = vadd.f32 %v2568, %v2631
        %v2654 = vadd.f32 %v2569, %v2628
        %v2655 = vadd.f32 %v2570, %v2630
        %v2656 = vld [vmem:[#allocation3] sm:$0x80]
        %v2657 = vld [vmem:[#allocation3 + $0x8] sm:$0x80]
        %v2658 = vld [vmem:[#allocation3 + $0x20] sm:$0x7f]
        %v2659 = vld [vmem:[#allocation3 + $0x28] sm:$0x7f]
        %v2660 = vld [vmem:[#allocation3 + $0x40] sm:$0x80]
        %v2661 = vld [vmem:[#allocation3 + $0x48] sm:$0x80]
        %v2662 = vld [vmem:[#allocation3 + $0x60] sm:$0x7f]
        %v2663 = vld [vmem:[#allocation3 + $0x68] sm:$0x7f]
        %v2664 = vlaneseq
        %v2665 = vshrl.u32 %v2664, 7
        %v2666 = vsub.s32 4, %v2665
        %v2667 = vrot.slane %v2353, %v2666
        %v2668 = vlaneseq
        %v2669 = vshrl.u32 %v2668, 7
        %v2670 = vsub.s32 4, %v2669
        %v2671 = vrot.slane %v2354, %v2670
        %v2672 = vmul.f32 %v2656, %v2667
        %v2673 = vmul.f32 %v2657, %v2671
        %v2674 = vmul.f32 %v2359, %v2667
        %v2675 = vmul.f32 %v2360, %v2671
        %v2676 = vmul.f32 %v2658, %v2667
        %v2677 = vmul.f32 %v2659, %v2671
        %v2678 = vmul.f32 %v2660, %v2667
        %v2679 = vmul.f32 %v2661, %v2671
        %v2680 = vmul.f32 %v2365, %v2667
        %v2681 = vmul.f32 %v2366, %v2671
        %v2682 = vmul.f32 %v2662, %v2667
        %v2683 = vmul.f32 %v2663, %v2671
        %vm2696 = vcmask 1043456
        %v2697 = vrot.slane %v2672, 4
        %v2698 = vrot.slane %v2674, 4
        %v2699 = vsel %vm2696, %v2697, %v2698
        %v2700 = vrot.slane %v2673, 4
        %v2701 = vrot.slane %v2675, 4
        %v2702 = vsel %vm2696, %v2700, %v2701
        %v2703 = vrot.slane %v2676, 4
        %v2704 = vsel %vm2696, %v2698, %v2703
        %v2705 = vrot.slane %v2677, 4
        %v2706 = vsel %vm2696, %v2701, %v2705
        %v2707 = vrot.slane %v2678, 4
        %v2708 = vrot.slane %v2680, 4
        %v2709 = vsel %vm2696, %v2707, %v2708
        %v2710 = vrot.slane %v2679, 4
        %v2711 = vrot.slane %v2681, 4
        %v2712 = vsel %vm2696, %v2710, %v2711
        %v2713 = vrot.slane %v2682, 4
        %v2714 = vsel %vm2696, %v2708, %v2713
        %v2715 = vrot.slane %v2683, 4
        %v2716 = vsel %vm2696, %v2711, %v2715
        %v2729 = vadd.f32 %v2644, %v2699
        %v2730 = vadd.f32 %v2645, %v2702
        %v2731 = vadd.f32 %v2646, %v2704
        %v2732 = vadd.f32 %v2647, %v2706
        %v2733 = vadd.f32 %v2648, %v2703
        %v2734 = vadd.f32 %v2649, %v2705
        %v2735 = vadd.f32 %v2650, %v2709
        %v2736 = vadd.f32 %v2651, %v2712
        %v2737 = vadd.f32 %v2652, %v2714
        %v2738 = vadd.f32 %v2653, %v2716
        %v2739 = vadd.f32 %v2654, %v2713
        %v2740 = vadd.f32 %v2655, %v2715
        %v2741 = vld [vmem:[#allocation3 + $0x20] sm:$0xff]
        %v2742 = vld [vmem:[#allocation3 + $0x28] sm:$0xff]
        %v2743 = vld [vmem:[#allocation3 + $0x60] sm:$0xff]
        %v2744 = vld [vmem:[#allocation3 + $0x68] sm:$0xff]
        %v2745 = vlaneseq
        %v2746 = vshrl.u32 %v2745, 7
        %v2747 = vsub.s32 5, %v2746
        %v2748 = vrot.slane %v2353, %v2747
        %v2749 = vlaneseq
        %v2750 = vshrl.u32 %v2749, 7
        %v2751 = vsub.s32 5, %v2750
        %v2752 = vrot.slane %v2354, %v2751
        %v2753 = vmul.f32 %v2359, %v2748
        %v2754 = vmul.f32 %v2360, %v2752
        %v2755 = vmul.f32 %v2741, %v2748
        %v2756 = vmul.f32 %v2742, %v2752
        %v2757 = vmul.f32 %v2365, %v2748
        %v2758 = vmul.f32 %v2366, %v2752
        %v2759 = vmul.f32 %v2743, %v2748
        %v2760 = vmul.f32 %v2744, %v2752
        %vm2769 = vcmask 1042432
        %v2770 = vrot.slane %v2753, 5
        %v2771 = vrot.slane %v2754, 5
        %v2772 = vrot.slane %v2755, 5
        %v2773 = vsel %vm2769, %v2770, %v2772
        %v2774 = vrot.slane %v2756, 5
        %v2775 = vsel %vm2769, %v2771, %v2774
        %v2776 = vrot.slane %v2757, 5
        %v2777 = vrot.slane %v2758, 5
        %v2778 = vrot.slane %v2759, 5
        %v2779 = vsel %vm2769, %v2776, %v2778
        %v2780 = vrot.slane %v2760, 5
        %v2781 = vsel %vm2769, %v2777, %v2780
        %v2794 = vadd.f32 %v2729, %v2770
        %v2795 = vadd.f32 %v2730, %v2771
        %v2796 = vadd.f32 %v2731, %v2773
        %v2797 = vadd.f32 %v2732, %v2775
        %v2798 = vadd.f32 %v2733, %v2772
        %v2799 = vadd.f32 %v2734, %v2774
        %v2800 = vadd.f32 %v2735, %v2776
        %v2801 = vadd.f32 %v2736, %v2777
        %v2802 = vadd.f32 %v2737, %v2779
        %v2803 = vadd.f32 %v2738, %v2781
        %v2804 = vadd.f32 %v2739, %v2778
        %v2805 = vadd.f32 %v2740, %v2780
        %v2806 = vld [vmem:[#allocation3 + $0x10] sm:$0xfe]
        %v2807 = vld [vmem:[#allocation3 + $0x18] sm:$0xfe]
        %v2808 = vld [vmem:[#allocation3 + $0x30] sm:$0x1]
        %v2809 = vld [vmem:[#allocation3 + $0x38] sm:$0x1]
        %v2810 = vld [vmem:[#allocation3 + $0x50] sm:$0xfe]
        %v2811 = vld [vmem:[#allocation3 + $0x58] sm:$0xfe]
        %v2812 = vld [vmem:[#allocation3 + $0x70] sm:$0x1]
        %v2813 = vld [vmem:[#allocation3 + $0x78] sm:$0x1]
        %v2814 = vlaneseq
        %v2815 = vshrl.u32 %v2814, 7
        %v2816 = vsub.s32 6, %v2815
        %v2817 = vrot.slane %v2353, %v2816
        %v2818 = vlaneseq
        %v2819 = vshrl.u32 %v2818, 7
        %v2820 = vsub.s32 6, %v2819
        %v2821 = vrot.slane %v2354, %v2820
        %v2822 = vmul.f32 %v2806, %v2817
        %v2823 = vmul.f32 %v2807, %v2821
        %v2824 = vmul.f32 %v2741, %v2817
        %v2825 = vmul.f32 %v2742, %v2821
        %v2826 = vmul.f32 %v2808, %v2817
        %v2827 = vmul.f32 %v2809, %v2821
        %v2828 = vmul.f32 %v2810, %v2817
        %v2829 = vmul.f32 %v2811, %v2821
        %v2830 = vmul.f32 %v2743, %v2817
        %v2831 = vmul.f32 %v2744, %v2821
        %v2832 = vmul.f32 %v2812, %v2817
        %v2833 = vmul.f32 %v2813, %v2821
        %vm2846 = vcmask 1041408
        %v2847 = vrot.slane %v2822, 6
        %v2848 = vrot.slane %v2823, 6
        %v2849 = vrot.slane %v2824, 6
        %v2850 = vsel %vm2846, %v2847, %v2849
        %v2851 = vrot.slane %v2825, 6
        %v2852 = vsel %vm2846, %v2848, %v2851
        %v2853 = vrot.slane %v2826, 6
        %v2854 = vsel %vm2846, %v2849, %v2853
        %v2855 = vrot.slane %v2827, 6
        %v2856 = vsel %vm2846, %v2851, %v2855
        %v2857 = vrot.slane %v2828, 6
        %v2858 = vrot.slane %v2829, 6
        %v2859 = vrot.slane %v2830, 6
        %v2860 = vsel %vm2846, %v2857, %v2859
        %v2861 = vrot.slane %v2831, 6
        %v2862 = vsel %vm2846, %v2858, %v2861
        %v2863 = vrot.slane %v2832, 6
        %v2864 = vsel %vm2846, %v2859, %v2863
        %v2865 = vrot.slane %v2833, 6
        %v2866 = vsel %vm2846, %v2861, %v2865
        %v2879 = vadd.f32 %v2794, %v2847
        %v2880 = vadd.f32 %v2795, %v2848
        %v2881 = vadd.f32 %v2796, %v2850
        %v2882 = vadd.f32 %v2797, %v2852
        %v2883 = vadd.f32 %v2798, %v2854
        %v2884 = vadd.f32 %v2799, %v2856
        %v2885 = vadd.f32 %v2800, %v2857
        %v2886 = vadd.f32 %v2801, %v2858
        %v2887 = vadd.f32 %v2802, %v2860
        %v2888 = vadd.f32 %v2803, %v2862
        %v2889 = vadd.f32 %v2804, %v2864
        %v2890 = vadd.f32 %v2805, %v2866
        %v2891 = vld [vmem:[#allocation3 + $0x10] sm:$0xfc]
        %v2892 = vld [vmem:[#allocation3 + $0x18] sm:$0xfc]
        %v2893 = vld [vmem:[#allocation3 + $0x30] sm:$0x3]
        %v2894 = vld [vmem:[#allocation3 + $0x38] sm:$0x3]
        %v2895 = vld [vmem:[#allocation3 + $0x50] sm:$0xfc]
        %v2896 = vld [vmem:[#allocation3 + $0x58] sm:$0xfc]
        %v2897 = vld [vmem:[#allocation3 + $0x70] sm:$0x3]
        %v2898 = vld [vmem:[#allocation3 + $0x78] sm:$0x3]
        %v2899 = vlaneseq
        %v2900 = vshrl.u32 %v2899, 7
        %v2901 = vsub.s32 7, %v2900
        %v2902 = vrot.slane %v2353, %v2901
        %v2903 = vlaneseq
        %v2904 = vshrl.u32 %v2903, 7
        %v2905 = vsub.s32 7, %v2904
        %v2906 = vrot.slane %v2354, %v2905
        %v2907 = vmul.f32 %v2891, %v2902
        %v2908 = vmul.f32 %v2892, %v2906
        %v2909 = vmul.f32 %v2741, %v2902
        %v2910 = vmul.f32 %v2742, %v2906
        %v2911 = vmul.f32 %v2893, %v2902
        %v2912 = vmul.f32 %v2894, %v2906
        %v2913 = vmul.f32 %v2895, %v2902
        %v2914 = vmul.f32 %v2896, %v2906
        %v2915 = vmul.f32 %v2743, %v2902
        %v2916 = vmul.f32 %v2744, %v2906
        %v2917 = vmul.f32 %v2897, %v2902
        %v2918 = vmul.f32 %v2898, %v2906
        %vm2931 = vcmask 1040384
        %v2932 = vrot.slane %v2907, 7
        %v2933 = vrot.slane %v2908, 7
        %v2934 = vrot.slane %v2909, 7
        %v2935 = vsel %vm2931, %v2932, %v2934
        %v2936 = vrot.slane %v2910, 7
        %v2937 = vsel %vm2931, %v2933, %v2936
        %v2938 = vrot.slane %v2911, 7
        %v2939 = vsel %vm2931, %v2934, %v2938
        %v2940 = vrot.slane %v2912, 7
        %v2941 = vsel %vm2931, %v2936, %v2940
        %v2942 = vrot.slane %v2913, 7
        %v2943 = vrot.slane %v2914, 7
        %v2944 = vrot.slane %v2915, 7
        %v2945 = vsel %vm2931, %v2942, %v2944
        %v2946 = vrot.slane %v2916, 7
        %v2947 = vsel %vm2931, %v2943, %v2946
        %v2948 = vrot.slane %v2917, 7
        %v2949 = vsel %vm2931, %v2944, %v2948
        %v2950 = vrot.slane %v2918, 7
        %v2951 = vsel %vm2931, %v2946, %v2950
        %v2964 = vadd.f32 %v2879, %v2932
        %v2965 = vadd.f32 %v2880, %v2933
        %v2966 = vadd.f32 %v2881, %v2935
        %v2967 = vadd.f32 %v2882, %v2937
        %v2968 = vadd.f32 %v2883, %v2939
        %v2969 = vadd.f32 %v2884, %v2941
        %v2970 = vadd.f32 %v2885, %v2942
        %v2971 = vadd.f32 %v2886, %v2943
        %v2972 = vadd.f32 %v2887, %v2945
        %v2973 = vadd.f32 %v2888, %v2947
        %v2974 = vadd.f32 %v2889, %v2949
        %v2975 = vadd.f32 %v2890, %v2951
        %v2976 = vld [vmem:[#allocation3 + $0x10] sm:$0xf8]
        %v2977 = vld [vmem:[#allocation3 + $0x18] sm:$0xf8]
        %v2978 = vld [vmem:[#allocation3 + $0x30] sm:$0x7]
        %v2979 = vld [vmem:[#allocation3 + $0x38] sm:$0x7]
        %v2980 = vld [vmem:[#allocation3 + $0x50] sm:$0xf8]
        %v2981 = vld [vmem:[#allocation3 + $0x58] sm:$0xf8]
        %v2982 = vld [vmem:[#allocation3 + $0x70] sm:$0x7]
        %v2983 = vld [vmem:[#allocation3 + $0x78] sm:$0x7]
        %v2984 = vlaneseq
        %v2985 = vshrl.u32 %v2984, 7
        %v2986 = vsub.s32 0, %v2985
        %v2987 = vrot.slane %v2355, %v2986
        %v2988 = vlaneseq
        %v2989 = vshrl.u32 %v2988, 7
        %v2990 = vsub.s32 0, %v2989
        %v2991 = vrot.slane %v2356, %v2990
        %v2992 = vmul.f32 %v2976, %v2987
        %v2993 = vmul.f32 %v2977, %v2991
        %v2994 = vmul.f32 %v2741, %v2987
        %v2995 = vmul.f32 %v2742, %v2991
        %v2996 = vmul.f32 %v2978, %v2987
        %v2997 = vmul.f32 %v2979, %v2991
        %v2998 = vmul.f32 %v2980, %v2987
        %v2999 = vmul.f32 %v2981, %v2991
        %v3000 = vmul.f32 %v2743, %v2987
        %v3001 = vmul.f32 %v2744, %v2991
        %v3002 = vmul.f32 %v2982, %v2987
        %v3003 = vmul.f32 %v2983, %v2991
        %v3004 = vadd.f32 %v2964, %v2992
        %v3005 = vadd.f32 %v2965, %v2993
        %v3006 = vadd.f32 %v2966, %v2994
        %v3007 = vadd.f32 %v2967, %v2995
        %v3008 = vadd.f32 %v2968, %v2996
        %v3009 = vadd.f32 %v2969, %v2997
        %v3010 = vadd.f32 %v2970, %v2998
        %v3011 = vadd.f32 %v2971, %v2999
        %v3012 = vadd.f32 %v2972, %v3000
        %v3013 = vadd.f32 %v2973, %v3001
        %v3014 = vadd.f32 %v2974, %v3002
        %v3015 = vadd.f32 %v2975, %v3003
        %v3016 = vld [vmem:[#allocation3 + $0x10] sm:$0xf0]
        %v3017 = vld [vmem:[#allocation3 + $0x18] sm:$0xf0]
        %v3018 = vld [vmem:[#allocation3 + $0x30] sm:$0xf]
        %v3019 = vld [vmem:[#allocation3 + $0x38] sm:$0xf]
        %v3020 = vld [vmem:[#allocation3 + $0x50] sm:$0xf0]
        %v3021 = vld [vmem:[#allocation3 + $0x58] sm:$0xf0]
        %v3022 = vld [vmem:[#allocation3 + $0x70] sm:$0xf]
        %v3023 = vld [vmem:[#allocation3 + $0x78] sm:$0xf]
        %v3024 = vlaneseq
        %v3025 = vshrl.u32 %v3024, 7
        %v3026 = vsub.s32 1, %v3025
        %v3027 = vrot.slane %v2355, %v3026
        %v3028 = vlaneseq
        %v3029 = vshrl.u32 %v3028, 7
        %v3030 = vsub.s32 1, %v3029
        %v3031 = vrot.slane %v2356, %v3030
        %v3032 = vmul.f32 %v3016, %v3027
        %v3033 = vmul.f32 %v3017, %v3031
        %v3034 = vmul.f32 %v2741, %v3027
        %v3035 = vmul.f32 %v2742, %v3031
        %v3036 = vmul.f32 %v3018, %v3027
        %v3037 = vmul.f32 %v3019, %v3031
        %v3038 = vmul.f32 %v3020, %v3027
        %v3039 = vmul.f32 %v3021, %v3031
        %v3040 = vmul.f32 %v2743, %v3027
        %v3041 = vmul.f32 %v2744, %v3031
        %v3042 = vmul.f32 %v3022, %v3027
        %v3043 = vmul.f32 %v3023, %v3031
        %v3056 = vrot.slane %v3032, 1
        %v3057 = vrot.slane %v3034, 1
        %v3058 = vsel %vm2441, %v3056, %v3057
        %v3059 = vrot.slane %v3033, 1
        %v3060 = vrot.slane %v3035, 1
        %v3061 = vsel %vm2441, %v3059, %v3060
        %v3062 = vrot.slane %v3036, 1
        %v3063 = vsel %vm2441, %v3057, %v3062
        %v3064 = vrot.slane %v3037, 1
        %v3065 = vsel %vm2441, %v3060, %v3064
        %v3066 = vrot.slane %v3038, 1
        %v3067 = vrot.slane %v3040, 1
        %v3068 = vsel %vm2441, %v3066, %v3067
        %v3069 = vrot.slane %v3039, 1
        %v3070 = vrot.slane %v3041, 1
        %v3071 = vsel %vm2441, %v3069, %v3070
        %v3072 = vrot.slane %v3042, 1
        %v3073 = vsel %vm2441, %v3067, %v3072
        %v3074 = vrot.slane %v3043, 1
        %v3075 = vsel %vm2441, %v3070, %v3074
        %v3088 = vadd.f32 %v3004, %v3058
        %v3089 = vadd.f32 %v3005, %v3061
        %v3090 = vadd.f32 %v3006, %v3063
        %v3091 = vadd.f32 %v3007, %v3065
        %v3092 = vadd.f32 %v3008, %v3062
        %v3093 = vadd.f32 %v3009, %v3064
        %v3094 = vadd.f32 %v3010, %v3068
        %v3095 = vadd.f32 %v3011, %v3071
        %v3096 = vadd.f32 %v3012, %v3073
        %v3097 = vadd.f32 %v3013, %v3075
        %v3098 = vadd.f32 %v3014, %v3072
        %v3099 = vadd.f32 %v3015, %v3074
        %v3100 = vld [vmem:[#allocation3 + $0x10] sm:$0xe0]
        %v3101 = vld [vmem:[#allocation3 + $0x18] sm:$0xe0]
        %v3102 = vld [vmem:[#allocation3 + $0x30] sm:$0x1f]
        %v3103 = vld [vmem:[#allocation3 + $0x38] sm:$0x1f]
        %v3104 = vld [vmem:[#allocation3 + $0x50] sm:$0xe0]
        %v3105 = vld [vmem:[#allocation3 + $0x58] sm:$0xe0]
        %v3106 = vld [vmem:[#allocation3 + $0x70] sm:$0x1f]
        %v3107 = vld [vmem:[#allocation3 + $0x78] sm:$0x1f]
        %v3108 = vlaneseq
        %v3109 = vshrl.u32 %v3108, 7
        %v3110 = vsub.s32 2, %v3109
        %v3111 = vrot.slane %v2355, %v3110
        %v3112 = vlaneseq
        %v3113 = vshrl.u32 %v3112, 7
        %v3114 = vsub.s32 2, %v3113
        %v3115 = vrot.slane %v2356, %v3114
        %v3116 = vmul.f32 %v3100, %v3111
        %v3117 = vmul.f32 %v3101, %v3115
        %v3118 = vmul.f32 %v2741, %v3111
        %v3119 = vmul.f32 %v2742, %v3115
        %v3120 = vmul.f32 %v3102, %v3111
        %v3121 = vmul.f32 %v3103, %v3115
        %v3122 = vmul.f32 %v3104, %v3111
        %v3123 = vmul.f32 %v3105, %v3115
        %v3124 = vmul.f32 %v2743, %v3111
        %v3125 = vmul.f32 %v2744, %v3115
        %v3126 = vmul.f32 %v3106, %v3111
        %v3127 = vmul.f32 %v3107, %v3115
        %v3140 = vrot.slane %v3116, 2
        %v3141 = vrot.slane %v3118, 2
        %v3142 = vsel %vm2526, %v3140, %v3141
        %v3143 = vrot.slane %v3117, 2
        %v3144 = vrot.slane %v3119, 2
        %v3145 = vsel %vm2526, %v3143, %v3144
        %v3146 = vrot.slane %v3120, 2
        %v3147 = vsel %vm2526, %v3141, %v3146
        %v3148 = vrot.slane %v3121, 2
        %v3149 = vsel %vm2526, %v3144, %v3148
        %v3150 = vrot.slane %v3122, 2
        %v3151 = vrot.slane %v3124, 2
        %v3152 = vsel %vm2526, %v3150, %v3151
        %v3153 = vrot.slane %v3123, 2
        %v3154 = vrot.slane %v3125, 2
        %v3155 = vsel %vm2526, %v3153, %v3154
        %v3156 = vrot.slane %v3126, 2
        %v3157 = vsel %vm2526, %v3151, %v3156
        %v3158 = vrot.slane %v3127, 2
        %v3159 = vsel %vm2526, %v3154, %v3158
        %v3172 = vadd.f32 %v3088, %v3142
        %v3173 = vadd.f32 %v3089, %v3145
        %v3174 = vadd.f32 %v3090, %v3147
        %v3175 = vadd.f32 %v3091, %v3149
        %v3176 = vadd.f32 %v3092, %v3146
        %v3177 = vadd.f32 %v3093, %v3148
        %v3178 = vadd.f32 %v3094, %v3152
        %v3179 = vadd.f32 %v3095, %v3155
        %v3180 = vadd.f32 %v3096, %v3157
        %v3181 = vadd.f32 %v3097, %v3159
        %v3182 = vadd.f32 %v3098, %v3156
        %v3183 = vadd.f32 %v3099, %v3158
        %v3196 = vrot.slane %v3172, 3
        %v3197 = vrot.slane %v3174, 3
        %v3198 = vsel %vm2611, %v3196, %v3197
        %v3199 = vrot.slane %v3173, 3
        %v3200 = vrot.slane %v3175, 3
        %v3201 = vsel %vm2611, %v3199, %v3200
        %v3202 = vrot.slane %v3176, 3
        %v3203 = vsel %vm2611, %v3197, %v3202
        %v3204 = vrot.slane %v3177, 3
        %v3205 = vsel %vm2611, %v3200, %v3204
        %v3206 = vrot.slane %v3178, 3
        %v3207 = vrot.slane %v3180, 3
        %v3208 = vsel %vm2611, %v3206, %v3207
        %v3209 = vrot.slane %v3179, 3
        %v3210 = vrot.slane %v3181, 3
        %v3211 = vsel %vm2611, %v3209, %v3210
        %v3212 = vrot.slane %v3182, 3
        %v3213 = vsel %vm2611, %v3207, %v3212
        %v3214 = vrot.slane %v3183, 3
        %v3215 = vsel %vm2611, %v3210, %v3214
        %v3224 = vadd.f32 %v3198, %v2337
        %v3225 = vadd.f32 %v3201, %v2338
        %v3226 = vadd.f32 %v3203, %v2339
        %v3227 = vadd.f32 %v3205, %v2340
        %v3228 = vadd.f32 %v3208, %v2341
        %v3229 = vadd.f32 %v3211, %v2342
        %v3230 = vadd.f32 %v3213, %v2343
        %v3231 = vadd.f32 %v3215, %v2344
        %v3232 = vmul.f32 %v3224, %v2320
        %v3233 = vmul.f32 %v3225, %v2320
        %v3234 = vmul.f32 %v3226, %v2325
        %v3235 = vmul.f32 %v3227, %v2325
        %v3236 = vmul.f32 %v3228, %v2330
        %v3237 = vmul.f32 %v3229, %v2330
        %v3238 = vmul.f32 %v3230, %v2335
        %v3239 = vmul.f32 %v3231, %v2335
        %v3240 = vadd.f32 %v849, %v3232
        %v3241 = vadd.f32 %v850, %v3233
        %v3242 = vadd.f32 %v851, %v3234
        %v3243 = vadd.f32 %v852, %v3235
        %v3244 = vadd.f32 %v853, %v3236
        %v3245 = vadd.f32 %v854, %v3237
        %v3246 = vadd.f32 %v855, %v3238
        %v3247 = vadd.f32 %v856, %v3239
        %v3248 = vadd.f32 %v3240, %v3241
        %3249 = vadd.xlane.f32.xlu0 %v3248
        %v3250 = vpop.xlane.xlu0 %3249
        %v3251 = vadd.f32 %v3242, %v3243
        %3252 = vadd.xlane.f32.xlu0 %v3251
        %v3253 = vpop.xlane.xlu0 %3252
        %v3254 = vadd.f32 %v3244, %v3245
        %3255 = vadd.xlane.f32.xlu0 %v3254
        %v3256 = vpop.xlane.xlu0 %3255
        %v3257 = vadd.f32 %v3246, %v3247
        %3258 = vadd.xlane.f32.xlu0 %v3257
        %v3259 = vpop.xlane.xlu0 %3258
        %v3260 = vmul.f32 %v3250, %v881
        %v3261 = vmul.f32 %v3253, %v881
        %v3262 = vmul.f32 %v3256, %v881
        %v3263 = vmul.f32 %v3259, %v881
        %v3264 = vsub.f32 %v3240, %v3260
        %v3265 = vsub.f32 %v3241, %v3260
        %v3266 = vsub.f32 %v3242, %v3261
        %v3267 = vsub.f32 %v3243, %v3261
        %v3268 = vsub.f32 %v3244, %v3262
        %v3269 = vsub.f32 %v3245, %v3262
        %v3270 = vsub.f32 %v3246, %v3263
        %v3271 = vsub.f32 %v3247, %v3263
        %v3272 = vmul.f32 %v3264, %v3264
        %v3273 = vmul.f32 %v3265, %v3265
        %v3274 = vmul.f32 %v3266, %v3266
        %v3275 = vmul.f32 %v3267, %v3267
        %v3276 = vmul.f32 %v3268, %v3268
        %v3277 = vmul.f32 %v3269, %v3269
        %v3278 = vmul.f32 %v3270, %v3270
        %v3279 = vmul.f32 %v3271, %v3271
        %v3280 = vadd.f32 %v3272, %v3273
        %3281 = vadd.xlane.f32.xlu0 %v3280
        %v3282 = vpop.xlane.xlu0 %3281
        %v3283 = vadd.f32 %v3274, %v3275
        %3284 = vadd.xlane.f32.xlu0 %v3283
        %v3285 = vpop.xlane.xlu0 %3284
        %v3286 = vadd.f32 %v3276, %v3277
        %3287 = vadd.xlane.f32.xlu0 %v3286
        %v3288 = vpop.xlane.xlu0 %3287
        %v3289 = vadd.f32 %v3278, %v3279
        %3290 = vadd.xlane.f32.xlu0 %v3289
        %v3291 = vpop.xlane.xlu0 %3290
        %v3292 = vmul.f32 %v3282, %v881
        %v3293 = vmul.f32 %v3285, %v881
        %v3294 = vmul.f32 %v3288, %v881
        %v3295 = vmul.f32 %v3291, %v881
        %v3296 = vadd.f32 %v3292, 1e-05
        %v3297 = vadd.f32 %v3293, 1e-05
        %v3298 = vadd.f32 %v3294, 1e-05
        %v3299 = vadd.f32 %v3295, 1e-05
        %v3300 = vrsqrt.pop %v3296
        %v3301 = vrsqrt.pop %v3297
        %v3302 = vrsqrt.pop %v3298
        %v3303 = vrsqrt.pop %v3299
        %v3304 = vmul.f32 %v3264, %v3300
        %v3305 = vmul.f32 %v3265, %v3300
        %v3306 = vmul.f32 %v3266, %v3301
        %v3307 = vmul.f32 %v3267, %v3301
        %v3308 = vmul.f32 %v3268, %v3302
        %v3309 = vmul.f32 %v3269, %v3302
        %v3310 = vmul.f32 %v3270, %v3303
        %v3311 = vmul.f32 %v3271, %v3303
        %v3312 = vlaneseq
        %v3313 = vshrl.u32 %v3312, 7
        %v3314 = vsub.s32 4, %v3313
        %v3315 = vrot.slane %v863, %v3314
        %v3316 = vlaneseq
        %v3317 = vshrl.u32 %v3316, 7
        %v3318 = vsub.s32 4, %v3317
        %v3319 = vrot.slane %v864, %v3318
        %v3320 = vmul.f32 %v3304, %v3315
        %v3321 = vmul.f32 %v3305, %v3319
        %v3322 = vmul.f32 %v3306, %v3315
        %v3323 = vmul.f32 %v3307, %v3319
        %v3324 = vmul.f32 %v3308, %v3315
        %v3325 = vmul.f32 %v3309, %v3319
        %v3326 = vmul.f32 %v3310, %v3315
        %v3327 = vmul.f32 %v3311, %v3319
        %v3328 = vlaneseq
        %v3329 = vshrl.u32 %v3328, 7
        %v3330 = vsub.s32 5, %v3329
        %v3331 = vrot.slane %v863, %v3330
        %v3332 = vlaneseq
        %v3333 = vshrl.u32 %v3332, 7
        %v3334 = vsub.s32 5, %v3333
        %v3335 = vrot.slane %v864, %v3334
        %v3336 = vadd.f32 %v3320, %v3331
        %v3337 = vadd.f32 %v3321, %v3335
        %v3338 = vadd.f32 %v3322, %v3331
        %v3339 = vadd.f32 %v3323, %v3335
        %v3340 = vadd.f32 %v3324, %v3331
        %v3341 = vadd.f32 %v3325, %v3335
        %v3342 = vadd.f32 %v3326, %v3331
        %v3343 = vadd.f32 %v3327, %v3335
        %v3344 = vld [vmem:[#allocation9] sm:$0xff]
        %v3345 = vld [vmem:[#allocation9 + $0x8] sm:$0xff]
        %v3346 = vld [vmem:[#allocation9 + $0x10] sm:$0xff]
        %v3347 = vld [vmem:[#allocation9 + $0x18] sm:$0xff]
        %v3348 = vld [vmem:[#allocation9 + $0x20] sm:$0xff]
        %v3349 = vld [vmem:[#allocation9 + $0x28] sm:$0xff]
        %v3350 = vld [vmem:[#allocation9 + $0x30] sm:$0xff]
        %v3351 = vld [vmem:[#allocation9 + $0x38] sm:$0xff]
        %v3352 = vpack.c.bf16 %v3338, %v3336
        %v3353 = vpack.c.bf16 %v3339, %v3337
        %v3354 = vpack.c.bf16 %v3342, %v3340
        %v3355 = vpack.c.bf16 %v3343, %v3341
        %v3356 = vld [vmem:[%s719] sm:$0xff]
        %v3357 = vld [vmem:[%s719 + $0x8] sm:$0xff]
        %v3358 = vld [vmem:[%s719 + $0x10] sm:$0xff]
        %v3359 = vld [vmem:[%s719 + $0x18] sm:$0xff]
        %v3360 = vld [vmem:[%s719 + $0x20] sm:$0xff]
        %v3361 = vld [vmem:[%s719 + $0x28] sm:$0xff]
        %v3362 = vld [vmem:[%s719 + $0x30] sm:$0xff]
        %v3363 = vld [vmem:[%s719 + $0x38] sm:$0xff]
        %v3364 = vld [vmem:[%s719 + $0x40] sm:$0xff]
        %v3365 = vld [vmem:[%s719 + $0x48] sm:$0xff]
        %v3366 = vld [vmem:[%s719 + $0x50] sm:$0xff]
        %v3367 = vld [vmem:[%s719 + $0x58] sm:$0xff]
        %v3368 = vld [vmem:[%s719 + $0x60] sm:$0xff]
        %v3369 = vld [vmem:[%s719 + $0x68] sm:$0xff]
        %v3370 = vld [vmem:[%s719 + $0x70] sm:$0xff]
        %v3371 = vld [vmem:[%s719 + $0x78] sm:$0xff]
        %v3372 = vld [vmem:[%s719 + $0x80] sm:$0xff]
        %v3373 = vld [vmem:[%s719 + $0x88] sm:$0xff]
        %v3374 = vld [vmem:[%s719 + $0x90] sm:$0xff]
        %v3375 = vld [vmem:[%s719 + $0x98] sm:$0xff]
        %v3376 = vld [vmem:[%s719 + $0xa0] sm:$0xff]
        %v3377 = vld [vmem:[%s719 + $0xa8] sm:$0xff]
        %v3378 = vld [vmem:[%s719 + $0xb0] sm:$0xff]
        %v3379 = vld [vmem:[%s719 + $0xb8] sm:$0xff]
        %v3380 = vld [vmem:[%s719 + $0xc0] sm:$0xff]
        %v3381 = vld [vmem:[%s719 + $0xc8] sm:$0xff]
        %v3382 = vld [vmem:[%s719 + $0xd0] sm:$0xff]
        %v3383 = vld [vmem:[%s719 + $0xd8] sm:$0xff]
        %v3384 = vld [vmem:[%s719 + $0xe0] sm:$0xff]
        %v3385 = vld [vmem:[%s719 + $0xe8] sm:$0xff]
        %v3386 = vld [vmem:[%s719 + $0xf0] sm:$0xff]
        %v3387 = vld [vmem:[%s719 + $0xf8] sm:$0xff]
        %v3388 = vlaneseq
        %v3389 = vshrl.u32 %v3388, 7
        %v3390 = vsub.s32 6, %v3389
        %v3391 = vrot.slane %v863, %v3390
        %v3392 = vlaneseq
        %v3393 = vshrl.u32 %v3392, 7
        %v3394 = vsub.s32 6, %v3393
        %v3395 = vrot.slane %v864, %v3394
        %v3428 = vunpack.c.l.b16 %v3356
        %v3429 = vunpack.c.h.b16 %v3356
        %v3430 = vunpack.c.l.b16 %v3357
        %v3431 = vunpack.c.h.b16 %v3357
        %v3432 = vunpack.c.l.b16 %v3358
        %v3433 = vunpack.c.h.b16 %v3358
        %v3434 = vunpack.c.l.b16 %v3359
        %v3435 = vunpack.c.h.b16 %v3359
        %v3436 = vunpack.c.l.b16 %v3360
        %v3437 = vunpack.c.h.b16 %v3360
        %v3438 = vunpack.c.l.b16 %v3361
        %v3439 = vunpack.c.h.b16 %v3361
        %v3440 = vunpack.c.l.b16 %v3362
        %v3441 = vunpack.c.h.b16 %v3362
        %v3442 = vunpack.c.l.b16 %v3363
        %v3443 = vunpack.c.h.b16 %v3363
        %v3444 = vunpack.c.l.b16 %v3364
        %v3445 = vunpack.c.h.b16 %v3364
        %v3446 = vunpack.c.l.b16 %v3365
        %v3447 = vunpack.c.h.b16 %v3365
        %v3448 = vunpack.c.l.b16 %v3366
        %v3449 = vunpack.c.h.b16 %v3366
        %v3450 = vunpack.c.l.b16 %v3367
        %v3451 = vunpack.c.h.b16 %v3367
        %v3452 = vunpack.c.l.b16 %v3368
        %v3453 = vunpack.c.h.b16 %v3368
        %v3454 = vunpack.c.l.b16 %v3369
        %v3455 = vunpack.c.h.b16 %v3369
        %v3456 = vunpack.c.l.b16 %v3370
        %v3457 = vunpack.c.h.b16 %v3370
        %v3458 = vunpack.c.l.b16 %v3371
        %v3459 = vunpack.c.h.b16 %v3371
        %v3460 = vunpack.c.l.b16 %v3372
        %v3461 = vunpack.c.h.b16 %v3372
        %v3462 = vunpack.c.l.b16 %v3373
        %v3463 = vunpack.c.h.b16 %v3373
        %v3464 = vunpack.c.l.b16 %v3374
        %v3465 = vunpack.c.h.b16 %v3374
        %v3466 = vunpack.c.l.b16 %v3375
        %v3467 = vunpack.c.h.b16 %v3375
        %v3468 = vunpack.c.l.b16 %v3376
        %v3469 = vunpack.c.h.b16 %v3376
        %v3470 = vunpack.c.l.b16 %v3377
        %v3471 = vunpack.c.h.b16 %v3377
        %v3472 = vunpack.c.l.b16 %v3378
        %v3473 = vunpack.c.h.b16 %v3378
        %v3474 = vunpack.c.l.b16 %v3379
        %v3475 = vunpack.c.h.b16 %v3379
        %v3476 = vunpack.c.l.b16 %v3380
        %v3477 = vunpack.c.h.b16 %v3380
        %v3478 = vunpack.c.l.b16 %v3381
        %v3479 = vunpack.c.h.b16 %v3381
        %v3480 = vunpack.c.l.b16 %v3382
        %v3481 = vunpack.c.h.b16 %v3382
        %v3482 = vunpack.c.l.b16 %v3383
        %v3483 = vunpack.c.h.b16 %v3383
        %v3484 = vunpack.c.l.b16 %v3384
        %v3485 = vunpack.c.h.b16 %v3384
        %v3486 = vunpack.c.l.b16 %v3385
        %v3487 = vunpack.c.h.b16 %v3385
        %v3488 = vunpack.c.l.b16 %v3386
        %v3489 = vunpack.c.h.b16 %v3386
        %v3490 = vunpack.c.l.b16 %v3387
        %v3491 = vunpack.c.h.b16 %v3387
        %v3492 = vpack.c.b16 %v3430, %v3428
        %v3493 = vpack.c.b16 %v3431, %v3429
        %v3494 = vpack.c.b16 %v3434, %v3432
        %v3495 = vpack.c.b16 %v3435, %v3433
        %v3496 = vpack.c.b16 %v3438, %v3436
        %v3497 = vpack.c.b16 %v3439, %v3437
        %v3498 = vpack.c.b16 %v3442, %v3440
        %v3499 = vpack.c.b16 %v3443, %v3441
        %v3500 = vpack.c.b16 %v3446, %v3444
        %v3501 = vpack.c.b16 %v3447, %v3445
        %v3502 = vpack.c.b16 %v3450, %v3448
        %v3503 = vpack.c.b16 %v3451, %v3449
        %v3504 = vpack.c.b16 %v3454, %v3452
        %v3505 = vpack.c.b16 %v3455, %v3453
        %v3506 = vpack.c.b16 %v3458, %v3456
        %v3507 = vpack.c.b16 %v3459, %v3457
        %v3508 = vpack.c.b16 %v3462, %v3460
        %v3509 = vpack.c.b16 %v3463, %v3461
        %v3510 = vpack.c.b16 %v3466, %v3464
        %v3511 = vpack.c.b16 %v3467, %v3465
        %v3512 = vpack.c.b16 %v3470, %v3468
        %v3513 = vpack.c.b16 %v3471, %v3469
        %v3514 = vpack.c.b16 %v3474, %v3472
        %v3515 = vpack.c.b16 %v3475, %v3473
        %v3516 = vpack.c.b16 %v3478, %v3476
        %v3517 = vpack.c.b16 %v3479, %v3477
        %v3518 = vpack.c.b16 %v3482, %v3480
        %v3519 = vpack.c.b16 %v3483, %v3481
        %v3520 = vpack.c.b16 %v3486, %v3484
        %v3521 = vpack.c.b16 %v3487, %v3485
        %v3522 = vpack.c.b16 %v3490, %v3488
        %v3523 = vpack.c.b16 %v3491, %v3489
        %3556 = vmatprep.subr.bf16.mxu0 %v3493
        %3557 = vmatpush1.bf16.msra.mxu0 %v3492
        %3558 = vmatprep.subr.bf16.mxu0 %v3495
        %3559 = vmatpush1.bf16.msra.mxu0 %v3494
        %3560 = vmatprep.subr.bf16.mxu0 %v3497
        %3561 = vmatpush1.bf16.msra.mxu0 %v3496
        %3562 = vmatprep.subr.bf16.mxu0 %v3499
        %3563 = vmatpush1.bf16.msra.mxu0 %v3498
        %3564 = vmatprep.subr.bf16.mxu0 %v3501
        %3565 = vmatpush1.bf16.msra.mxu0 %v3500
        %3566 = vmatprep.subr.bf16.mxu0 %v3503
        %3567 = vmatpush1.bf16.msra.mxu0 %v3502
        %3568 = vmatprep.subr.bf16.mxu0 %v3505
        %3569 = vmatpush1.bf16.msra.mxu0 %v3504
        %3570 = vmatprep.subr.bf16.mxu0 %v3507
        %3571 = vmatpush1.bf16.msra.mxu0 %v3506
        %3572 = vmatprep.subr.bf16.mxu0 %v3509
        %3573 = vmatpush1.bf16.msra.mxu0 %v3508
        %3574 = vmatprep.subr.bf16.mxu0 %v3511
        %3575 = vmatpush1.bf16.msra.mxu0 %v3510
        %3576 = vmatprep.subr.bf16.mxu0 %v3513
        %3577 = vmatpush1.bf16.msra.mxu0 %v3512
        %3578 = vmatprep.subr.bf16.mxu0 %v3515
        %3579 = vmatpush1.bf16.msra.mxu0 %v3514
        %3580 = vmatprep.subr.bf16.mxu0 %v3517
        %3581 = vmatpush1.bf16.msra.mxu0 %v3516
        %3582 = vmatprep.subr.bf16.mxu0 %v3519
        %3583 = vmatpush1.bf16.msra.mxu0 %v3518
        %3584 = vmatprep.subr.bf16.mxu0 %v3521
        %3585 = vmatpush1.bf16.msra.mxu0 %v3520
        %3586 = vmatprep.subr.bf16.mxu0 %v3523
        %3587 = vmatpush1.bf16.msra.mxu0 %v3522
        %3588 = vmatprep.mubr.bf16.mxu0 %v3353
        %3589 = vmatmul.mubr.bf16.gmra.mrb[0].mxu0 %v3352
        %v3590 = vpop.f32.mrb[0].mxu0
        %v3591 = vadd.f32 %v3391, %v3590
        %v3592 = vpop.f32.mrb[0].mxu0
        %v3593 = vadd.f32 %v3395, %v3592
        %v3594 = vpop.f32.mrb[0].mxu0
        %v3595 = vadd.f32 %v3391, %v3594
        %v3596 = vpop.f32.mrb[0].mxu0
        %v3597 = vadd.f32 %v3395, %v3596
        %3598 = vmatprep.mubr.bf16.mxu0 %v3355
        %3599 = vmatmul.mubr.bf16.gmra.mrb[0].mxu0 %v3354
        %v3600 = vpop.f32.mrb[0].mxu0
        %v3601 = vadd.f32 %v3391, %v3600
        %v3602 = vpop.f32.mrb[0].mxu0
        %v3603 = vadd.f32 %v3395, %v3602
        %v3604 = vpop.f32.mrb[0].mxu0
        %v3605 = vadd.f32 %v3391, %v3604
        %v3606 = vpop.f32.mrb[0].mxu0
        %v3607 = vadd.f32 %v3395, %v3606
        %3608 = vdwg.mxu0
        %v3609 = vld [vmem:[%s728] sm:$0xff]
        %v3610 = vld [vmem:[%s728 + $0x8] sm:$0xff]
        %v3611 = vld [vmem:[%s728 + $0x10] sm:$0xff]
        %v3612 = vld [vmem:[%s728 + $0x18] sm:$0xff]
        %v3613 = vld [vmem:[%s728 + $0x20] sm:$0xff]
        %v3614 = vld [vmem:[%s728 + $0x28] sm:$0xff]
        %v3615 = vld [vmem:[%s728 + $0x30] sm:$0xff]
        %v3616 = vld [vmem:[%s728 + $0x38] sm:$0xff]
        %v3617 = vld [vmem:[%s728 + $0x40] sm:$0xff]
        %v3618 = vld [vmem:[%s728 + $0x48] sm:$0xff]
        %v3619 = vld [vmem:[%s728 + $0x50] sm:$0xff]
        %v3620 = vld [vmem:[%s728 + $0x58] sm:$0xff]
        %v3621 = vld [vmem:[%s728 + $0x60] sm:$0xff]
        %v3622 = vld [vmem:[%s728 + $0x68] sm:$0xff]
        %v3623 = vld [vmem:[%s728 + $0x70] sm:$0xff]
        %v3624 = vld [vmem:[%s728 + $0x78] sm:$0xff]
        %v3625 = vld [vmem:[%s728 + $0x80] sm:$0xff]
        %v3626 = vld [vmem:[%s728 + $0x88] sm:$0xff]
        %v3627 = vld [vmem:[%s728 + $0x90] sm:$0xff]
        %v3628 = vld [vmem:[%s728 + $0x98] sm:$0xff]
        %v3629 = vld [vmem:[%s728 + $0xa0] sm:$0xff]
        %v3630 = vld [vmem:[%s728 + $0xa8] sm:$0xff]
        %v3631 = vld [vmem:[%s728 + $0xb0] sm:$0xff]
        %v3632 = vld [vmem:[%s728 + $0xb8] sm:$0xff]
        %v3633 = vld [vmem:[%s728 + $0xc0] sm:$0xff]
        %v3634 = vld [vmem:[%s728 + $0xc8] sm:$0xff]
        %v3635 = vld [vmem:[%s728 + $0xd0] sm:$0xff]
        %v3636 = vld [vmem:[%s728 + $0xd8] sm:$0xff]
        %v3637 = vld [vmem:[%s728 + $0xe0] sm:$0xff]
        %v3638 = vld [vmem:[%s728 + $0xe8] sm:$0xff]
        %v3639 = vld [vmem:[%s728 + $0xf0] sm:$0xff]
        %v3640 = vld [vmem:[%s728 + $0xf8] sm:$0xff]
        %v3641 = vld [vmem:[%s728 + $0x100] sm:$0xff]
        %v3642 = vld [vmem:[%s728 + $0x108] sm:$0xff]
        %v3643 = vld [vmem:[%s728 + $0x110] sm:$0xff]
        %v3644 = vld [vmem:[%s728 + $0x118] sm:$0xff]
        %v3645 = vld [vmem:[%s728 + $0x120] sm:$0xff]
        %v3646 = vld [vmem:[%s728 + $0x128] sm:$0xff]
        %v3647 = vld [vmem:[%s728 + $0x130] sm:$0xff]
        %v3648 = vld [vmem:[%s728 + $0x138] sm:$0xff]
        %v3649 = vld [vmem:[%s728 + $0x140] sm:$0xff]
        %v3650 = vld [vmem:[%s728 + $0x148] sm:$0xff]
        %v3651 = vld [vmem:[%s728 + $0x150] sm:$0xff]
        %v3652 = vld [vmem:[%s728 + $0x158] sm:$0xff]
        %v3653 = vld [vmem:[%s728 + $0x160] sm:$0xff]
        %v3654 = vld [vmem:[%s728 + $0x168] sm:$0xff]
        %v3655 = vld [vmem:[%s728 + $0x170] sm:$0xff]
        %v3656 = vld [vmem:[%s728 + $0x178] sm:$0xff]
        %v3657 = vld [vmem:[%s728 + $0x180] sm:$0xff]
        %v3658 = vld [vmem:[%s728 + $0x188] sm:$0xff]
        %v3659 = vld [vmem:[%s728 + $0x190] sm:$0xff]
        %v3660 = vld [vmem:[%s728 + $0x198] sm:$0xff]
        %v3661 = vld [vmem:[%s728 + $0x1a0] sm:$0xff]
        %v3662 = vld [vmem:[%s728 + $0x1a8] sm:$0xff]
        %v3663 = vld [vmem:[%s728 + $0x1b0] sm:$0xff]
        %v3664 = vld [vmem:[%s728 + $0x1b8] sm:$0xff]
        %v3665 = vld [vmem:[%s728 + $0x1c0] sm:$0xff]
        %v3666 = vld [vmem:[%s728 + $0x1c8] sm:$0xff]
        %v3667 = vld [vmem:[%s728 + $0x1d0] sm:$0xff]
        %v3668 = vld [vmem:[%s728 + $0x1d8] sm:$0xff]
        %v3669 = vld [vmem:[%s728 + $0x1e0] sm:$0xff]
        %v3670 = vld [vmem:[%s728 + $0x1e8] sm:$0xff]
        %v3671 = vld [vmem:[%s728 + $0x1f0] sm:$0xff]
        %v3672 = vld [vmem:[%s728 + $0x1f8] sm:$0xff]
        %v3681 = vunpack.c.l.b16 %v3344
        %v3682 = vunpack.c.h.b16 %v3344
        %v3683 = vunpack.c.l.b16 %v3345
        %v3684 = vunpack.c.h.b16 %v3345
        %v3685 = vunpack.c.l.b16 %v3346
        %v3686 = vunpack.c.h.b16 %v3346
        %v3687 = vunpack.c.l.b16 %v3347
        %v3688 = vunpack.c.h.b16 %v3347
        %v3689 = vunpack.c.l.b16 %v3348
        %v3690 = vunpack.c.h.b16 %v3348
        %v3691 = vunpack.c.l.b16 %v3349
        %v3692 = vunpack.c.h.b16 %v3349
        %v3693 = vunpack.c.l.b16 %v3350
        %v3694 = vunpack.c.h.b16 %v3350
        %v3695 = vunpack.c.l.b16 %v3351
        %v3696 = vunpack.c.h.b16 %v3351
        %v3697 = vpack.c.b16 %v3683, %v3681
        %v3698 = vpack.c.b16 %v3684, %v3682
        %v3699 = vpack.c.b16 %v3687, %v3685
        %v3700 = vpack.c.b16 %v3688, %v3686
        %v3701 = vpack.c.b16 %v3691, %v3689
        %v3702 = vpack.c.b16 %v3692, %v3690
        %v3703 = vpack.c.b16 %v3695, %v3693
        %v3704 = vpack.c.b16 %v3696, %v3694
        %v3777 = vunpack.c.l.b16 %v3609
        %v3778 = vunpack.c.h.b16 %v3609
        %v3779 = vunpack.c.l.b16 %v3610
        %v3780 = vunpack.c.h.b16 %v3610
        %v3781 = vunpack.c.l.b16 %v3611
        %v3782 = vunpack.c.h.b16 %v3611
        %v3783 = vunpack.c.l.b16 %v3612
        %v3784 = vunpack.c.h.b16 %v3612
        %v3785 = vunpack.c.l.b16 %v3613
        %v3786 = vunpack.c.h.b16 %v3613
        %v3787 = vunpack.c.l.b16 %v3614
        %v3788 = vunpack.c.h.b16 %v3614
        %v3789 = vunpack.c.l.b16 %v3615
        %v3790 = vunpack.c.h.b16 %v3615
        %v3791 = vunpack.c.l.b16 %v3616
        %v3792 = vunpack.c.h.b16 %v3616
        %v3793 = vunpack.c.l.b16 %v3617
        %v3794 = vunpack.c.h.b16 %v3617
        %v3795 = vunpack.c.l.b16 %v3618
        %v3796 = vunpack.c.h.b16 %v3618
        %v3797 = vunpack.c.l.b16 %v3619
        %v3798 = vunpack.c.h.b16 %v3619
        %v3799 = vunpack.c.l.b16 %v3620
        %v3800 = vunpack.c.h.b16 %v3620
        %v3801 = vunpack.c.l.b16 %v3621
        %v3802 = vunpack.c.h.b16 %v3621
        %v3803 = vunpack.c.l.b16 %v3622
        %v3804 = vunpack.c.h.b16 %v3622
        %v3805 = vunpack.c.l.b16 %v3623
        %v3806 = vunpack.c.h.b16 %v3623
        %v3807 = vunpack.c.l.b16 %v3624
        %v3808 = vunpack.c.h.b16 %v3624
        %v3809 = vunpack.c.l.b16 %v3625
        %v3810 = vunpack.c.h.b16 %v3625
        %v3811 = vunpack.c.l.b16 %v3626
        %v3812 = vunpack.c.h.b16 %v3626
        %v3813 = vunpack.c.l.b16 %v3627
        %v3814 = vunpack.c.h.b16 %v3627
        %v3815 = vunpack.c.l.b16 %v3628
        %v3816 = vunpack.c.h.b16 %v3628
        %v3817 = vunpack.c.l.b16 %v3629
        %v3818 = vunpack.c.h.b16 %v3629
        %v3819 = vunpack.c.l.b16 %v3630
        %v3820 = vunpack.c.h.b16 %v3630
        %v3821 = vunpack.c.l.b16 %v3631
        %v3822 = vunpack.c.h.b16 %v3631
        %v3823 = vunpack.c.l.b16 %v3632
        %v3824 = vunpack.c.h.b16 %v3632
        %v3825 = vunpack.c.l.b16 %v3633
        %v3826 = vunpack.c.h.b16 %v3633
        %v3827 = vunpack.c.l.b16 %v3634
        %v3828 = vunpack.c.h.b16 %v3634
        %v3829 = vunpack.c.l.b16 %v3635
        %v3830 = vunpack.c.h.b16 %v3635
        %v3831 = vunpack.c.l.b16 %v3636
        %v3832 = vunpack.c.h.b16 %v3636
        %v3833 = vunpack.c.l.b16 %v3637
        %v3834 = vunpack.c.h.b16 %v3637
        %v3835 = vunpack.c.l.b16 %v3638
        %v3836 = vunpack.c.h.b16 %v3638
        %v3837 = vunpack.c.l.b16 %v3639
        %v3838 = vunpack.c.h.b16 %v3639
        %v3839 = vunpack.c.l.b16 %v3640
        %v3840 = vunpack.c.h.b16 %v3640
        %v3841 = vunpack.c.l.b16 %v3641
        %v3842 = vunpack.c.h.b16 %v3641
        %v3843 = vunpack.c.l.b16 %v3642
        %v3844 = vunpack.c.h.b16 %v3642
        %v3845 = vunpack.c.l.b16 %v3643
        %v3846 = vunpack.c.h.b16 %v3643
        %v3847 = vunpack.c.l.b16 %v3644
        %v3848 = vunpack.c.h.b16 %v3644
        %v3849 = vunpack.c.l.b16 %v3645
        %v3850 = vunpack.c.h.b16 %v3645
        %v3851 = vunpack.c.l.b16 %v3646
        %v3852 = vunpack.c.h.b16 %v3646
        %v3853 = vunpack.c.l.b16 %v3647
        %v3854 = vunpack.c.h.b16 %v3647
        %v3855 = vunpack.c.l.b16 %v3648
        %v3856 = vunpack.c.h.b16 %v3648
        %v3857 = vunpack.c.l.b16 %v3649
        %v3858 = vunpack.c.h.b16 %v3649
        %v3859 = vunpack.c.l.b16 %v3650
        %v3860 = vunpack.c.h.b16 %v3650
        %v3861 = vunpack.c.l.b16 %v3651
        %v3862 = vunpack.c.h.b16 %v3651
        %v3863 = vunpack.c.l.b16 %v3652
        %v3864 = vunpack.c.h.b16 %v3652
        %v3865 = vunpack.c.l.b16 %v3653
        %v3866 = vunpack.c.h.b16 %v3653
        %v3867 = vunpack.c.l.b16 %v3654
        %v3868 = vunpack.c.h.b16 %v3654
        %v3869 = vunpack.c.l.b16 %v3655
        %v3870 = vunpack.c.h.b16 %v3655
        %v3871 = vunpack.c.l.b16 %v3656
        %v3872 = vunpack.c.h.b16 %v3656
        %v3873 = vunpack.c.l.b16 %v3657
        %v3874 = vunpack.c.h.b16 %v3657
        %v3875 = vunpack.c.l.b16 %v3658
        %v3876 = vunpack.c.h.b16 %v3658
        %v3877 = vunpack.c.l.b16 %v3659
        %v3878 = vunpack.c.h.b16 %v3659
        %v3879 = vunpack.c.l.b16 %v3660
        %v3880 = vunpack.c.h.b16 %v3660
        %v3881 = vunpack.c.l.b16 %v3661
        %v3882 = vunpack.c.h.b16 %v3661
        %v3883 = vunpack.c.l.b16 %v3662
        %v3884 = vunpack.c.h.b16 %v3662
        %v3885 = vunpack.c.l.b16 %v3663
        %v3886 = vunpack.c.h.b16 %v3663
        %v3887 = vunpack.c.l.b16 %v3664
        %v3888 = vunpack.c.h.b16 %v3664
        %v3889 = vunpack.c.l.b16 %v3665
        %v3890 = vunpack.c.h.b16 %v3665
        %v3891 = vunpack.c.l.b16 %v3666
        %v3892 = vunpack.c.h.b16 %v3666
        %v3893 = vunpack.c.l.b16 %v3667
        %v3894 = vunpack.c.h.b16 %v3667
        %v3895 = vunpack.c.l.b16 %v3668
        %v3896 = vunpack.c.h.b16 %v3668
        %v3897 = vunpack.c.l.b16 %v3669
        %v3898 = vunpack.c.h.b16 %v3669
        %v3899 = vunpack.c.l.b16 %v3670
        %v3900 = vunpack.c.h.b16 %v3670
        %v3901 = vunpack.c.l.b16 %v3671
        %v3902 = vunpack.c.h.b16 %v3671
        %v3903 = vunpack.c.l.b16 %v3672
        %v3904 = vunpack.c.h.b16 %v3672
        %v3905 = vpack.c.b16 %v3781, %v3777
        %v3906 = vpack.c.b16 %v3782, %v3778
        %v3907 = vpack.c.b16 %v3783, %v3779
        %v3908 = vpack.c.b16 %v3784, %v3780
        %v3909 = vpack.c.b16 %v3789, %v3785
        %v3910 = vpack.c.b16 %v3790, %v3786
        %v3911 = vpack.c.b16 %v3791, %v3787
        %v3912 = vpack.c.b16 %v3792, %v3788
        %v3913 = vpack.c.b16 %v3797, %v3793
        %v3914 = vpack.c.b16 %v3798, %v3794
        %v3915 = vpack.c.b16 %v3799, %v3795
        %v3916 = vpack.c.b16 %v3800, %v3796
        %v3917 = vpack.c.b16 %v3805, %v3801
        %v3918 = vpack.c.b16 %v3806, %v3802
        %v3919 = vpack.c.b16 %v3807, %v3803
        %v3920 = vpack.c.b16 %v3808, %v3804
        %v3921 = vpack.c.b16 %v3813, %v3809
        %v3922 = vpack.c.b16 %v3814, %v3810
        %v3923 = vpack.c.b16 %v3815, %v3811
        %v3924 = vpack.c.b16 %v3816, %v3812
        %v3925 = vpack.c.b16 %v3821, %v3817
        %v3926 = vpack.c.b16 %v3822, %v3818
        %v3927 = vpack.c.b16 %v3823, %v3819
        %v3928 = vpack.c.b16 %v3824, %v3820
        %v3929 = vpack.c.b16 %v3829, %v3825
        %v3930 = vpack.c.b16 %v3830, %v3826
        %v3931 = vpack.c.b16 %v3831, %v3827
        %v3932 = vpack.c.b16 %v3832, %v3828
        %v3933 = vpack.c.b16 %v3837, %v3833
        %v3934 = vpack.c.b16 %v3838, %v3834
        %v3935 = vpack.c.b16 %v3839, %v3835
        %v3936 = vpack.c.b16 %v3840, %v3836
        %v3937 = vpack.c.b16 %v3845, %v3841
        %v3938 = vpack.c.b16 %v3846, %v3842
        %v3939 = vpack.c.b16 %v3847, %v3843
        %v3940 = vpack.c.b16 %v3848, %v3844
        %v3941 = vpack.c.b16 %v3853, %v3849
        %v3942 = vpack.c.b16 %v3854, %v3850
        %v3943 = vpack.c.b16 %v3855, %v3851
        %v3944 = vpack.c.b16 %v3856, %v3852
        %v3945 = vpack.c.b16 %v3861, %v3857
        %v3946 = vpack.c.b16 %v3862, %v3858
        %v3947 = vpack.c.b16 %v3863, %v3859
        %v3948 = vpack.c.b16 %v3864, %v3860
        %v3949 = vpack.c.b16 %v3869, %v3865
        %v3950 = vpack.c.b16 %v3870, %v3866
        %v3951 = vpack.c.b16 %v3871, %v3867
        %v3952 = vpack.c.b16 %v3872, %v3868
        %v3953 = vpack.c.b16 %v3877, %v3873
        %v3954 = vpack.c.b16 %v3878, %v3874
        %v3955 = vpack.c.b16 %v3879, %v3875
        %v3956 = vpack.c.b16 %v3880, %v3876
        %v3957 = vpack.c.b16 %v3885, %v3881
        %v3958 = vpack.c.b16 %v3886, %v3882
        %v3959 = vpack.c.b16 %v3887, %v3883
        %v3960 = vpack.c.b16 %v3888, %v3884
        %v3961 = vpack.c.b16 %v3893, %v3889
        %v3962 = vpack.c.b16 %v3894, %v3890
        %v3963 = vpack.c.b16 %v3895, %v3891
        %v3964 = vpack.c.b16 %v3896, %v3892
        %v3965 = vpack.c.b16 %v3901, %v3897
        %v3966 = vpack.c.b16 %v3902, %v3898
        %v3967 = vpack.c.b16 %v3903, %v3899
        %v3968 = vpack.c.b16 %v3904, %v3900
        %4033 = vmatprep.subr.bf16.mxu0 %v3906
        %4034 = vmatpush1.bf16.msra.mxu0 %v3905
        %4035 = vmatprep.subr.bf16.mxu0 %v3910
        %4036 = vmatpush1.bf16.msra.mxu0 %v3909
        %4037 = vmatprep.subr.bf16.mxu0 %v3914
        %4038 = vmatpush1.bf16.msra.mxu0 %v3913
        %4039 = vmatprep.subr.bf16.mxu0 %v3918
        %4040 = vmatpush1.bf16.msra.mxu0 %v3917
        %4041 = vmatprep.subr.bf16.mxu0 %v3922
        %4042 = vmatpush1.bf16.msra.mxu0 %v3921
        %4043 = vmatprep.subr.bf16.mxu0 %v3926
        %4044 = vmatpush1.bf16.msra.mxu0 %v3925
        %4045 = vmatprep.subr.bf16.mxu0 %v3930
        %4046 = vmatpush1.bf16.msra.mxu0 %v3929
        %4047 = vmatprep.subr.bf16.mxu0 %v3934
        %4048 = vmatpush1.bf16.msra.mxu0 %v3933
        %4049 = vmatprep.subr.bf16.mxu0 %v3938
        %4050 = vmatpush1.bf16.msra.mxu0 %v3937
        %4051 = vmatprep.subr.bf16.mxu0 %v3942
        %4052 = vmatpush1.bf16.msra.mxu0 %v3941
        %4053 = vmatprep.subr.bf16.mxu0 %v3946
        %4054 = vmatpush1.bf16.msra.mxu0 %v3945
        %4055 = vmatprep.subr.bf16.mxu0 %v3950
        %4056 = vmatpush1.bf16.msra.mxu0 %v3949
        %4057 = vmatprep.subr.bf16.mxu0 %v3954
        %4058 = vmatpush1.bf16.msra.mxu0 %v3953
        %4059 = vmatprep.subr.bf16.mxu0 %v3958
        %4060 = vmatpush1.bf16.msra.mxu0 %v3957
        %4061 = vmatprep.subr.bf16.mxu0 %v3962
        %4062 = vmatpush1.bf16.msra.mxu0 %v3961
        %4063 = vmatprep.subr.bf16.mxu0 %v3966
        %4064 = vmatpush1.bf16.msra.mxu0 %v3965
        %4065 = vmatprep.mubr.bf16.mxu0 %v3698
        %4066 = vmatmul.mubr.bf16.gmra.mrb[0].mxu0 %v3697
        %v4067 = vpop.f32.mrb[0].mxu0
        %v4068 = vadd.f32 0.0, %v4067
        %v4069 = vpop.f32.mrb[0].mxu0
        %v4070 = vadd.f32 0.0, %v4069
        %v4071 = vpop.f32.mrb[0].mxu0
        %v4072 = vadd.f32 0.0, %v4071
        %v4073 = vpop.f32.mrb[0].mxu0
        %v4074 = vadd.f32 0.0, %v4073
        %4075 = vmatprep.mubr.bf16.mxu0 %v3700
        %4076 = vmatmul.mubr.bf16.gmra.mrb[0].mxu0 %v3699
        %v4077 = vpop.f32.mrb[0].mxu0
        %v4078 = vadd.f32 0.0, %v4077
        %v4079 = vpop.f32.mrb[0].mxu0
        %v4080 = vadd.f32 0.0, %v4079
        %v4081 = vpop.f32.mrb[0].mxu0
        %v4082 = vadd.f32 0.0, %v4081
        %v4083 = vpop.f32.mrb[0].mxu0
        %v4084 = vadd.f32 0.0, %v4083
        %4085 = vmatprep.mubr.bf16.mxu0 %v3702
        %4086 = vmatmul.mubr.bf16.gmra.mrb[0].mxu0 %v3701
        %v4087 = vpop.f32.mrb[0].mxu0
        %v4088 = vadd.f32 0.0, %v4087
        %v4089 = vpop.f32.mrb[0].mxu0
        %v4090 = vadd.f32 0.0, %v4089
        %v4091 = vpop.f32.mrb[0].mxu0
        %v4092 = vadd.f32 0.0, %v4091
        %v4093 = vpop.f32.mrb[0].mxu0
        %v4094 = vadd.f32 0.0, %v4093
        %4095 = vmatprep.mubr.bf16.mxu0 %v3704
        %4096 = vmatmul.mubr.bf16.gmra.mrb[0].mxu0 %v3703
        %v4097 = vpop.f32.mrb[0].mxu0
        %v4098 = vadd.f32 0.0, %v4097
        %v4099 = vpop.f32.mrb[0].mxu0
        %v4100 = vadd.f32 0.0, %v4099
        %v4101 = vpop.f32.mrb[0].mxu0
        %v4102 = vadd.f32 0.0, %v4101
        %v4103 = vpop.f32.mrb[0].mxu0
        %v4104 = vadd.f32 0.0, %v4103
        %4105 = vdwg.mxu0
        %4106 = vmatprep.subr.bf16.mxu0 %v3908
        %4107 = vmatpush1.bf16.msra.mxu0 %v3907
        %4108 = vmatprep.subr.bf16.mxu0 %v3912
        %4109 = vmatpush1.bf16.msra.mxu0 %v3911
        %4110 = vmatprep.subr.bf16.mxu0 %v3916
        %4111 = vmatpush1.bf16.msra.mxu0 %v3915
        %4112 = vmatprep.subr.bf16.mxu0 %v3920
        %4113 = vmatpush1.bf16.msra.mxu0 %v3919
        %4114 = vmatprep.subr.bf16.mxu0 %v3924
        %4115 = vmatpush1.bf16.msra.mxu0 %v3923
        %4116 = vmatprep.subr.bf16.mxu0 %v3928
        %4117 = vmatpush1.bf16.msra.mxu0 %v3927
        %4118 = vmatprep.subr.bf16.mxu0 %v3932
        %4119 = vmatpush1.bf16.msra.mxu0 %v3931
        %4120 = vmatprep.subr.bf16.mxu0 %v3936
        %4121 = vmatpush1.bf16.msra.mxu0 %v3935
        %4122 = vmatprep.subr.bf16.mxu0 %v3940
        %4123 = vmatpush1.bf16.msra.mxu0 %v3939
        %4124 = vmatprep.subr.bf16.mxu0 %v3944
        %4125 = vmatpush1.bf16.msra.mxu0 %v3943
        %4126 = vmatprep.subr.bf16.mxu0 %v3948
        %4127 = vmatpush1.bf16.msra.mxu0 %v3947
        %4128 = vmatprep.subr.bf16.mxu0 %v3952
        %4129 = vmatpush1.bf16.msra.mxu0 %v3951
        %4130 = vmatprep.subr.bf16.mxu0 %v3956
        %4131 = vmatpush1.bf16.msra.mxu0 %v3955
        %4132 = vmatprep.subr.bf16.mxu0 %v3960
        %4133 = vmatpush1.bf16.msra.mxu0 %v3959
        %4134 = vmatprep.subr.bf16.mxu0 %v3964
        %4135 = vmatpush1.bf16.msra.mxu0 %v3963
        %4136 = vmatprep.subr.bf16.mxu0 %v3968
        %4137 = vmatpush1.bf16.msra.mxu0 %v3967
        %4138 = vmatprep.mubr.bf16.mxu0 %v3698
        %4139 = vmatmul.mubr.bf16.gmra.mrb[0].mxu0 %v3697
        %v4140 = vpop.f32.mrb[0].mxu0
        %v4141 = vadd.f32 0.0, %v4140
        %v4142 = vpop.f32.mrb[0].mxu0
        %v4143 = vadd.f32 0.0, %v4142
        %v4144 = vpop.f32.mrb[0].mxu0
        %v4145 = vadd.f32 0.0, %v4144
        %v4146 = vpop.f32.mrb[0].mxu0
        %v4147 = vadd.f32 0.0, %v4146
        %4148 = vmatprep.mubr.bf16.mxu0 %v3700
        %4149 = vmatmul.mubr.bf16.gmra.mrb[0].mxu0 %v3699
        %v4150 = vpop.f32.mrb[0].mxu0
        %v4151 = vadd.f32 0.0, %v4150
        %v4152 = vpop.f32.mrb[0].mxu0
        %v4153 = vadd.f32 0.0, %v4152
        %v4154 = vpop.f32.mrb[0].mxu0
        %v4155 = vadd.f32 0.0, %v4154
        %v4156 = vpop.f32.mrb[0].mxu0
        %v4157 = vadd.f32 0.0, %v4156
        %4158 = vmatprep.mubr.bf16.mxu0 %v3702
        %4159 = vmatmul.mubr.bf16.gmra.mrb[0].mxu0 %v3701
        %v4160 = vpop.f32.mrb[0].mxu0
        %v4161 = vadd.f32 0.0, %v4160
        %v4162 = vpop.f32.mrb[0].mxu0
        %v4163 = vadd.f32 0.0, %v4162
        %v4164 = vpop.f32.mrb[0].mxu0
        %v4165 = vadd.f32 0.0, %v4164
        %v4166 = vpop.f32.mrb[0].mxu0
        %v4167 = vadd.f32 0.0, %v4166
        %4168 = vmatprep.mubr.bf16.mxu0 %v3704
        %4169 = vmatmul.mubr.bf16.gmra.mrb[0].mxu0 %v3703
        %v4170 = vpop.f32.mrb[0].mxu0
        %v4171 = vadd.f32 0.0, %v4170
        %v4172 = vpop.f32.mrb[0].mxu0
        %v4173 = vadd.f32 0.0, %v4172
        %v4174 = vpop.f32.mrb[0].mxu0
        %v4175 = vadd.f32 0.0, %v4174
        %v4176 = vpop.f32.mrb[0].mxu0
        %v4177 = vadd.f32 0.0, %v4176
        %4178 = vdwg.mxu0
        %v4179 = vlaneseq
        %v4180 = vshrl.u32 %v4179, 7
        %v4181 = vsub.s32 7, %v4180
        %v4182 = vrot.slane %v863, %v4181
        %v4183 = vlaneseq
        %v4184 = vshrl.u32 %v4183, 7
        %v4185 = vsub.s32 7, %v4184
        %v4186 = vrot.slane %v864, %v4185
        %v4187 = vadd.f32 %v4068, %v4182
        %v4188 = vadd.f32 %v4070, %v4186
        %v4189 = vadd.f32 %v4072, %v4182
        %v4190 = vadd.f32 %v4074, %v4186
        %v4191 = vadd.f32 %v4078, %v4182
        %v4192 = vadd.f32 %v4080, %v4186
        %v4193 = vadd.f32 %v4082, %v4182
        %v4194 = vadd.f32 %v4084, %v4186
        %v4195 = vadd.f32 %v4088, %v4182
        %v4196 = vadd.f32 %v4090, %v4186
        %v4197 = vadd.f32 %v4092, %v4182
        %v4198 = vadd.f32 %v4094, %v4186
        %v4199 = vadd.f32 %v4098, %v4182
        %v4200 = vadd.f32 %v4100, %v4186
        %v4201 = vadd.f32 %v4102, %v4182
        %v4202 = vadd.f32 %v4104, %v4186
        %v4203 = vlaneseq
        %v4204 = vshrl.u32 %v4203, 7
        %v4205 = vsub.s32 0, %v4204
        %v4206 = vrot.slane %v865, %v4205
        %v4207 = vlaneseq
        %v4208 = vshrl.u32 %v4207, 7
        %v4209 = vsub.s32 0, %v4208
        %v4210 = vrot.slane %v866, %v4209
        %v4211 = vadd.f32 %v4141, %v4206
        %v4212 = vadd.f32 %v4143, %v4210
        %v4213 = vadd.f32 %v4145, %v4206
        %v4214 = vadd.f32 %v4147, %v4210
        %v4215 = vadd.f32 %v4151, %v4206
        %v4216 = vadd.f32 %v4153, %v4210
        %v4217 = vadd.f32 %v4155, %v4206
        %v4218 = vadd.f32 %v4157, %v4210
        %v4219 = vadd.f32 %v4161, %v4206
        %v4220 = vadd.f32 %v4163, %v4210
        %v4221 = vadd.f32 %v4165, %v4206
        %v4222 = vadd.f32 %v4167, %v4210
        %v4223 = vadd.f32 %v4171, %v4206
        %v4224 = vadd.f32 %v4173, %v4210
        %v4225 = vadd.f32 %v4175, %v4206
        %v4226 = vadd.f32 %v4177, %v4210
        %v4227 = vpack.c.bf16 %v3595, %v3591
        %v4228 = vpack.c.bf16 %v3597, %v3593
        %v4229 = vpack.c.bf16 %v3605, %v3601
        %v4230 = vpack.c.bf16 %v3607, %v3603
        %v4231 = vpack.c.bf16 %v4189, %v4187
        %v4232 = vpack.c.bf16 %v4193, %v4191
        %v4233 = vpack.c.bf16 %v4190, %v4188
        %v4234 = vpack.c.bf16 %v4194, %v4192
        %v4235 = vpack.c.bf16 %v4197, %v4195
        %v4236 = vpack.c.bf16 %v4201, %v4199
        %v4237 = vpack.c.bf16 %v4198, %v4196
        %v4238 = vpack.c.bf16 %v4202, %v4200
        %v4239 = vpack.c.bf16 %v4213, %v4211
        %v4240 = vpack.c.bf16 %v4217, %v4215
        %v4241 = vpack.c.bf16 %v4214, %v4212
        %v4242 = vpack.c.bf16 %v4218, %v4216
        %v4243 = vpack.c.bf16 %v4221, %v4219
        %v4244 = vpack.c.bf16 %v4225, %v4223
        %v4245 = vpack.c.bf16 %v4222, %v4220
        %v4246 = vpack.c.bf16 %v4226, %v4224
        %4247 = vmatprep.subr.bf16.mxu0 0
        %4248 = vmatpush1.bf16.xpose.msra.mxu0 %v4231
        %4249 = vmatprep.subr.bf16.mxu0 0
        %4250 = vmatpush1.bf16.xpose.msra.mxu0 %v4232
        %4251 = vmatprep.subr.bf16.mxu0 0
        %4252 = vmatpush1.bf16.xpose.msra.mxu0 0
        %4253 = vmatprep.subr.bf16.mxu0 0
        %4254 = vmatpush1.bf16.xpose.msra.mxu0 0
        %4255 = vmatprep.subr.bf16.mxu0 0
        %4256 = vmatpush1.bf16.xpose.msra.mxu0 0
        %4257 = vmatprep.subr.bf16.mxu0 0
        %4258 = vmatpush1.bf16.xpose.msra.mxu0 0
        %4259 = vmatprep.subr.bf16.mxu0 0
        %4260 = vmatpush1.bf16.xpose.msra.mxu0 0
        %4261 = vmatprep.subr.bf16.mxu0 0
        %4262 = vmatpush1.bf16.xpose.msra.mxu0 0
        %4263 = vmatprep.subr.bf16.mxu0 0
        %4264 = vmatpush1.bf16.xpose.msra.mxu0 0
        %4265 = vmatprep.subr.bf16.mxu0 0
        %4266 = vmatpush1.bf16.xpose.msra.mxu0 0
        %4267 = vmatprep.subr.bf16.mxu0 0
        %4268 = vmatpush1.bf16.xpose.msra.mxu0 0
        %4269 = vmatprep.subr.bf16.mxu0 0
        %4270 = vmatpush1.bf16.xpose.msra.mxu0 0
        %4271 = vmatprep.subr.bf16.mxu0 0
        %4272 = vmatpush1.bf16.xpose.msra.mxu0 0
        %4273 = vmatprep.subr.bf16.mxu0 0
        %4274 = vmatpush1.bf16.xpose.msra.mxu0 0
        %4275 = vmatprep.subr.bf16.mxu0 0
        %4276 = vmatpush1.bf16.xpose.msra.mxu0 0
        %4277 = vmatprep.subr.bf16.mxu0 0
        %4278 = vmatpush1.bf16.xpose.msra.mxu0 0
        %4279 = vmatprep.mubr.bf16.mxu0 0
        %4280 = vmatmul.mubr.bf16.gmra.mrb[0].mxu0 %v4227
        %v4281 = vpop.f32.mrb[0].mxu0
        %v4282 = vadd.f32 0.0, %v4281
        %v4283 = vpop.f32.mrb[0].mxu0
        %v4284 = vpop.f32.mrb[0].mxu0
        %v4285 = vadd.f32 0.0, %v4284
        %v4286 = vpop.f32.mrb[0].mxu0
        %4287 = vdwg.mxu0
        %4288 = vmatprep.subr.bf16.mxu0 0
        %4289 = vmatpush1.bf16.xpose.msra.mxu0 %v4233
        %4290 = vmatprep.subr.bf16.mxu0 0
        %4291 = vmatpush1.bf16.xpose.msra.mxu0 %v4234
        %4292 = vmatprep.subr.bf16.mxu0 0
        %4293 = vmatpush1.bf16.xpose.msra.mxu0 0
        %4294 = vmatprep.subr.bf16.mxu0 0
        %4295 = vmatpush1.bf16.xpose.msra.mxu0 0
        %4296 = vmatprep.subr.bf16.mxu0 0
        %4297 = vmatpush1.bf16.xpose.msra.mxu0 0
        %4298 = vmatprep.subr.bf16.mxu0 0
        %4299 = vmatpush1.bf16.xpose.msra.mxu0 0
        %4300 = vmatprep.subr.bf16.mxu0 0
        %4301 = vmatpush1.bf16.xpose.msra.mxu0 0
        %4302 = vmatprep.subr.bf16.mxu0 0
        %4303 = vmatpush1.bf16.xpose.msra.mxu0 0
        %4304 = vmatprep.subr.bf16.mxu0 0
        %4305 = vmatpush1.bf16.xpose.msra.mxu0 0
        %4306 = vmatprep.subr.bf16.mxu0 0
        %4307 = vmatpush1.bf16.xpose.msra.mxu0 0
        %4308 = vmatprep.subr.bf16.mxu0 0
        %4309 = vmatpush1.bf16.xpose.msra.mxu0 0
        %4310 = vmatprep.subr.bf16.mxu0 0
        %4311 = vmatpush1.bf16.xpose.msra.mxu0 0
        %4312 = vmatprep.subr.bf16.mxu0 0
        %4313 = vmatpush1.bf16.xpose.msra.mxu0 0
        %4314 = vmatprep.subr.bf16.mxu0 0
        %4315 = vmatpush1.bf16.xpose.msra.mxu0 0
        %4316 = vmatprep.subr.bf16.mxu0 0
        %4317 = vmatpush1.bf16.xpose.msra.mxu0 0
        %4318 = vmatprep.subr.bf16.mxu0 0
        %4319 = vmatpush1.bf16.xpose.msra.mxu0 0
        %4320 = vmatprep.mubr.bf16.mxu0 0
        %4321 = vmatmul.mubr.bf16.gmra.mrb[0].mxu0 %v4228
        %v4322 = vpop.f32.mrb[0].mxu0
        %v4323 = vadd.f32 0.0, %v4322
        %v4324 = vpop.f32.mrb[0].mxu0
        %v4325 = vpop.f32.mrb[0].mxu0
        %v4326 = vadd.f32 0.0, %v4325
        %v4327 = vpop.f32.mrb[0].mxu0
        %4328 = vdwg.mxu0
        %4329 = vmatprep.subr.bf16.mxu0 0
        %4330 = vmatpush1.bf16.xpose.msra.mxu0 %v4235
        %4331 = vmatprep.subr.bf16.mxu0 0
        %4332 = vmatpush1.bf16.xpose.msra.mxu0 %v4236
        %4333 = vmatprep.subr.bf16.mxu0 0
        %4334 = vmatpush1.bf16.xpose.msra.mxu0 0
        %4335 = vmatprep.subr.bf16.mxu0 0
        %4336 = vmatpush1.bf16.xpose.msra.mxu0 0
        %4337 = vmatprep.subr.bf16.mxu0 0
        %4338 = vmatpush1.bf16.xpose.msra.mxu0 0
        %4339 = vmatprep.subr.bf16.mxu0 0
        %4340 = vmatpush1.bf16.xpose.msra.mxu0 0
        %4341 = vmatprep.subr.bf16.mxu0 0
        %4342 = vmatpush1.bf16.xpose.msra.mxu0 0
        %4343 = vmatprep.subr.bf16.mxu0 0
        %4344 = vmatpush1.bf16.xpose.msra.mxu0 0
        %4345 = vmatprep.subr.bf16.mxu0 0
        %4346 = vmatpush1.bf16.xpose.msra.mxu0 0
        %4347 = vmatprep.subr.bf16.mxu0 0
        %4348 = vmatpush1.bf16.xpose.msra.mxu0 0
        %4349 = vmatprep.subr.bf16.mxu0 0
        %4350 = vmatpush1.bf16.xpose.msra.mxu0 0
        %4351 = vmatprep.subr.bf16.mxu0 0
        %4352 = vmatpush1.bf16.xpose.msra.mxu0 0
        %4353 = vmatprep.subr.bf16.mxu0 0
        %4354 = vmatpush1.bf16.xpose.msra.mxu0 0
        %4355 = vmatprep.subr.bf16.mxu0 0
        %4356 = vmatpush1.bf16.xpose.msra.mxu0 0
        %4357 = vmatprep.subr.bf16.mxu0 0
        %4358 = vmatpush1.bf16.xpose.msra.mxu0 0
        %4359 = vmatprep.subr.bf16.mxu0 0
        %4360 = vmatpush1.bf16.xpose.msra.mxu0 0
        %4361 = vmatprep.mubr.bf16.mxu0 0
        %4362 = vmatmul.mubr.bf16.gmra.mrb[0].mxu0 %v4229
        %v4363 = vpop.f32.mrb[0].mxu0
        %v4364 = vadd.f32 0.0, %v4363
        %v4365 = vpop.f32.mrb[0].mxu0
        %v4366 = vpop.f32.mrb[0].mxu0
        %v4367 = vadd.f32 0.0, %v4366
        %v4368 = vpop.f32.mrb[0].mxu0
        %4369 = vdwg.mxu0
        %4370 = vmatprep.subr.bf16.mxu0 0
        %4371 = vmatpush1.bf16.xpose.msra.mxu0 %v4237
        %4372 = vmatprep.subr.bf16.mxu0 0
        %4373 = vmatpush1.bf16.xpose.msra.mxu0 %v4238
        %4374 = vmatprep.subr.bf16.mxu0 0
        %4375 = vmatpush1.bf16.xpose.msra.mxu0 0
        %4376 = vmatprep.subr.bf16.mxu0 0
        %4377 = vmatpush1.bf16.xpose.msra.mxu0 0
        %4378 = vmatprep.subr.bf16.mxu0 0
        %4379 = vmatpush1.bf16.xpose.msra.mxu0 0
        %4380 = vmatprep.subr.bf16.mxu0 0
        %4381 = vmatpush1.bf16.xpose.msra.mxu0 0
        %4382 = vmatprep.subr.bf16.mxu0 0
        %4383 = vmatpush1.bf16.xpose.msra.mxu0 0
        %4384 = vmatprep.subr.bf16.mxu0 0
        %4385 = vmatpush1.bf16.xpose.msra.mxu0 0
        %4386 = vmatprep.subr.bf16.mxu0 0
        %4387 = vmatpush1.bf16.xpose.msra.mxu0 0
        %4388 = vmatprep.subr.bf16.mxu0 0
        %4389 = vmatpush1.bf16.xpose.msra.mxu0 0
        %4390 = vmatprep.subr.bf16.mxu0 0
        %4391 = vmatpush1.bf16.xpose.msra.mxu0 0
        %4392 = vmatprep.subr.bf16.mxu0 0
        %4393 = vmatpush1.bf16.xpose.msra.mxu0 0
        %4394 = vmatprep.subr.bf16.mxu0 0
        %4395 = vmatpush1.bf16.xpose.msra.mxu0 0
        %4396 = vmatprep.subr.bf16.mxu0 0
        %4397 = vmatpush1.bf16.xpose.msra.mxu0 0
        %4398 = vmatprep.subr.bf16.mxu0 0
        %4399 = vmatpush1.bf16.xpose.msra.mxu0 0
        %4400 = vmatprep.subr.bf16.mxu0 0
        %4401 = vmatpush1.bf16.xpose.msra.mxu0 0
        %4402 = vmatprep.mubr.bf16.mxu0 0
        %4403 = vmatmul.mubr.bf16.gmra.mrb[0].mxu0 %v4230
        %v4404 = vpop.f32.mrb[0].mxu0
        %v4405 = vadd.f32 0.0, %v4404
        %v4406 = vpop.f32.mrb[0].mxu0
        %v4407 = vpop.f32.mrb[0].mxu0
        %v4408 = vadd.f32 0.0, %v4407
        %v4409 = vpop.f32.mrb[0].mxu0
        %4410 = vdwg.mxu0
        %v4411 = vmul.f32 %v4282, 0.088388346
        %v4412 = vmul.f32 %v4285, 0.088388346
        %v4413 = vmul.f32 %v4323, 0.088388346
        %v4414 = vmul.f32 %v4326, 0.088388346
        %v4415 = vmul.f32 %v4364, 0.088388346
        %v4416 = vmul.f32 %v4367, 0.088388346
        %v4417 = vmul.f32 %v4405, 0.088388346
        %v4418 = vmul.f32 %v4408, 0.088388346
        %v4421 = vlaneseq
        %v4422 = vshrl.u32 %v4421, 7
        %v4423 = vsub.s32 0, %v4422
        %v4424 = vrot.slane %v861, %v4423
        %v4425 = vlaneseq
        %v4426 = vshrl.u32 %v4425, 7
        %v4427 = vsub.s32 0, %v4426
        %v4428 = vrot.slane %v862, %v4427
        %v4431 = vadd.f32 %v4411, %v4424
        %v4432 = vadd.f32 %v4412, %v4424
        %v4433 = vadd.f32 %v4413, %v4424
        %v4434 = vadd.f32 %v4414, %v4424
        %v4435 = vadd.f32 %v4415, %v4428
        %v4436 = vadd.f32 %v4416, %v4428
        %v4437 = vadd.f32 %v4417, %v4428
        %v4438 = vadd.f32 %v4418, %v4428
        %vm4439 = vcmask 261120
        %v4440 = vsel %vm4439, %v4431, -inf
        %4441 = vmax.xlane.f32.xlu0 %v4440
        %v4442 = vpop.xlane.xlu0 %4441
        %v4443 = vsel %vm4439, %v4432, -inf
        %4444 = vmax.xlane.f32.xlu0 %v4443
        %v4445 = vpop.xlane.xlu0 %4444
        %v4446 = vsel %vm4439, %v4433, -inf
        %4447 = vmax.xlane.f32.xlu0 %v4446
        %v4448 = vpop.xlane.xlu0 %4447
        %v4449 = vsel %vm4439, %v4434, -inf
        %4450 = vmax.xlane.f32.xlu0 %v4449
        %v4451 = vpop.xlane.xlu0 %4450
        %v4452 = vsel %vm4439, %v4435, -inf
        %4453 = vmax.xlane.f32.xlu0 %v4452
        %v4454 = vpop.xlane.xlu0 %4453
        %v4455 = vsel %vm4439, %v4436, -inf
        %4456 = vmax.xlane.f32.xlu0 %v4455
        %v4457 = vpop.xlane.xlu0 %4456
        %v4458 = vsel %vm4439, %v4437, -inf
        %4459 = vmax.xlane.f32.xlu0 %v4458
        %v4460 = vpop.xlane.xlu0 %4459
        %v4461 = vsel %vm4439, %v4438, -inf
        %4462 = vmax.xlane.f32.xlu0 %v4461
        %v4463 = vpop.xlane.xlu0 %4462
        %v4464 = vsub.f32 %v4431, %v4442
        %v4465 = vsub.f32 %v4432, %v4445
        %v4466 = vsub.f32 %v4433, %v4448
        %v4467 = vsub.f32 %v4434, %v4451
        %v4468 = vsub.f32 %v4435, %v4454
        %v4469 = vsub.f32 %v4436, %v4457
        %v4470 = vsub.f32 %v4437, %v4460
        %v4471 = vsub.f32 %v4438, %v4463
        %v4472 = vmul.f32 %v4464, 1.442695
        %v4473 = vpow.pop %v4472
        %v4474 = vmul.f32 %v4465, 1.442695
        %v4475 = vpow.pop %v4474
        %v4476 = vmul.f32 %v4466, 1.442695
        %v4477 = vpow.pop %v4476
        %v4478 = vmul.f32 %v4467, 1.442695
        %v4479 = vpow.pop %v4478
        %v4480 = vmul.f32 %v4468, 1.442695
        %v4481 = vpow.pop %v4480
        %v4482 = vmul.f32 %v4469, 1.442695
        %v4483 = vpow.pop %v4482
        %v4484 = vmul.f32 %v4470, 1.442695
        %v4485 = vpow.pop %v4484
        %v4486 = vmul.f32 %v4471, 1.442695
        %v4487 = vpow.pop %v4486
        %v4488 = vsel %vm4439, %v4473, 0.0
        %4489 = vadd.xlane.f32.xlu0 %v4488
        %v4490 = vpop.xlane.xlu0 %4489
        %v4491 = vsel %vm4439, %v4475, 0.0
        %4492 = vadd.xlane.f32.xlu0 %v4491
        %v4493 = vpop.xlane.xlu0 %4492
        %v4494 = vsel %vm4439, %v4477, 0.0
        %4495 = vadd.xlane.f32.xlu0 %v4494
        %v4496 = vpop.xlane.xlu0 %4495
        %v4497 = vsel %vm4439, %v4479, 0.0
        %4498 = vadd.xlane.f32.xlu0 %v4497
        %v4499 = vpop.xlane.xlu0 %4498
        %v4500 = vsel %vm4439, %v4481, 0.0
        %4501 = vadd.xlane.f32.xlu0 %v4500
        %v4502 = vpop.xlane.xlu0 %4501
        %v4503 = vsel %vm4439, %v4483, 0.0
        %4504 = vadd.xlane.f32.xlu0 %v4503
        %v4505 = vpop.xlane.xlu0 %4504
        %v4506 = vsel %vm4439, %v4485, 0.0
        %4507 = vadd.xlane.f32.xlu0 %v4506
        %v4508 = vpop.xlane.xlu0 %4507
        %v4509 = vsel %vm4439, %v4487, 0.0
        %4510 = vadd.xlane.f32.xlu0 %v4509
        %v4511 = vpop.xlane.xlu0 %4510
        %v4512 = vrcp.pop %v4490
        %v4513 = vrcp.pop %v4493
        %v4514 = vrcp.pop %v4496
        %v4515 = vrcp.pop %v4499
        %v4516 = vrcp.pop %v4502
        %v4517 = vrcp.pop %v4505
        %v4518 = vrcp.pop %v4508
        %v4519 = vrcp.pop %v4511
        %v4520 = vmul.f32 %v4473, %v4512
        %v4521 = vmul.f32 %v4475, %v4513
        %v4522 = vmul.f32 %v4477, %v4514
        %v4523 = vmul.f32 %v4479, %v4515
        %v4524 = vmul.f32 %v4481, %v4516
        %v4525 = vmul.f32 %v4483, %v4517
        %v4526 = vmul.f32 %v4485, %v4518
        %v4527 = vmul.f32 %v4487, %v4519
        %v4528 = vpack.c.bf16 %v4521, %v4520
        %v4529 = vpack.c.bf16 %v4523, %v4522
        %v4530 = vpack.c.bf16 %v4525, %v4524
        %v4531 = vpack.c.bf16 %v4527, %v4526
        %v4533 = vsel %vm4439, %v4528, 0
        %4535 = vmatprep.subr.bf16.mxu0 0
        %4536 = vmatpush1.bf16.msra.mxu0 %v4239
        %4537 = vmatprep.subr.bf16.mxu0 0
        %4538 = vmatpush1.bf16.msra.mxu0 %v4240
        %4539 = vmatprep.subr.bf16.mxu0 0
        %4540 = vmatpush1.bf16.msra.mxu0 0
        %4541 = vmatprep.subr.bf16.mxu0 0
        %4542 = vmatpush1.bf16.msra.mxu0 0
        %4543 = vmatprep.subr.bf16.mxu0 0
        %4544 = vmatpush1.bf16.msra.mxu0 0
        %4545 = vmatprep.subr.bf16.mxu0 0
        %4546 = vmatpush1.bf16.msra.mxu0 0
        %4547 = vmatprep.subr.bf16.mxu0 0
        %4548 = vmatpush1.bf16.msra.mxu0 0
        %4549 = vmatprep.subr.bf16.mxu0 0
        %4550 = vmatpush1.bf16.msra.mxu0 0
        %4551 = vmatprep.subr.bf16.mxu0 0
        %4552 = vmatpush1.bf16.msra.mxu0 0
        %4553 = vmatprep.subr.bf16.mxu0 0
        %4554 = vmatpush1.bf16.msra.mxu0 0
        %4555 = vmatprep.subr.bf16.mxu0 0
        %4556 = vmatpush1.bf16.msra.mxu0 0
        %4557 = vmatprep.subr.bf16.mxu0 0
        %4558 = vmatpush1.bf16.msra.mxu0 0
        %4559 = vmatprep.subr.bf16.mxu0 0
        %4560 = vmatpush1.bf16.msra.mxu0 0
        %4561 = vmatprep.subr.bf16.mxu0 0
        %4562 = vmatpush1.bf16.msra.mxu0 0
        %4563 = vmatprep.subr.bf16.mxu0 0
        %4564 = vmatpush1.bf16.msra.mxu0 0
        %4565 = vmatprep.subr.bf16.mxu0 0
        %4566 = vmatpush1.bf16.msra.mxu0 0
        %4567 = vmatprep.mubr.bf16.mxu0 0
        %4568 = vmatmul.mubr.bf16.gmra.mrb[0].mxu0 %v4533
        %v4569 = vpop.f32.mrb[0].mxu0
        %v4570 = vadd.f32 0.0, %v4569
        %v4571 = vpop.f32.mrb[0].mxu0
        %v4572 = vpop.f32.mrb[0].mxu0
        %v4573 = vadd.f32 0.0, %v4572
        %v4574 = vpop.f32.mrb[0].mxu0
        %4575 = vdwg.mxu0
        %v4577 = vsel %vm4439, %v4529, 0
        %4579 = vmatprep.subr.bf16.mxu0 0
        %4580 = vmatpush1.bf16.msra.mxu0 %v4241
        %4581 = vmatprep.subr.bf16.mxu0 0
        %4582 = vmatpush1.bf16.msra.mxu0 %v4242
        %4583 = vmatprep.subr.bf16.mxu0 0
        %4584 = vmatpush1.bf16.msra.mxu0 0
        %4585 = vmatprep.subr.bf16.mxu0 0
        %4586 = vmatpush1.bf16.msra.mxu0 0
        %4587 = vmatprep.subr.bf16.mxu0 0
        %4588 = vmatpush1.bf16.msra.mxu0 0
        %4589 = vmatprep.subr.bf16.mxu0 0
        %4590 = vmatpush1.bf16.msra.mxu0 0
        %4591 = vmatprep.subr.bf16.mxu0 0
        %4592 = vmatpush1.bf16.msra.mxu0 0
        %4593 = vmatprep.subr.bf16.mxu0 0
        %4594 = vmatpush1.bf16.msra.mxu0 0
        %4595 = vmatprep.subr.bf16.mxu0 0
        %4596 = vmatpush1.bf16.msra.mxu0 0
        %4597 = vmatprep.subr.bf16.mxu0 0
        %4598 = vmatpush1.bf16.msra.mxu0 0
        %4599 = vmatprep.subr.bf16.mxu0 0
        %4600 = vmatpush1.bf16.msra.mxu0 0
        %4601 = vmatprep.subr.bf16.mxu0 0
        %4602 = vmatpush1.bf16.msra.mxu0 0
        %4603 = vmatprep.subr.bf16.mxu0 0
        %4604 = vmatpush1.bf16.msra.mxu0 0
        %4605 = vmatprep.subr.bf16.mxu0 0
        %4606 = vmatpush1.bf16.msra.mxu0 0
        %4607 = vmatprep.subr.bf16.mxu0 0
        %4608 = vmatpush1.bf16.msra.mxu0 0
        %4609 = vmatprep.subr.bf16.mxu0 0
        %4610 = vmatpush1.bf16.msra.mxu0 0
        %4611 = vmatprep.mubr.bf16.mxu0 0
        %4612 = vmatmul.mubr.bf16.gmra.mrb[0].mxu0 %v4577
        %v4613 = vpop.f32.mrb[0].mxu0
        %v4614 = vadd.f32 0.0, %v4613
        %v4615 = vpop.f32.mrb[0].mxu0
        %v4616 = vpop.f32.mrb[0].mxu0
        %v4617 = vadd.f32 0.0, %v4616
        %v4618 = vpop.f32.mrb[0].mxu0
        %4619 = vdwg.mxu0
        %v4621 = vsel %vm4439, %v4530, 0
        %4623 = vmatprep.subr.bf16.mxu0 0
        %4624 = vmatpush1.bf16.msra.mxu0 %v4243
        %4625 = vmatprep.subr.bf16.mxu0 0
        %4626 = vmatpush1.bf16.msra.mxu0 %v4244
        %4627 = vmatprep.subr.bf16.mxu0 0
        %4628 = vmatpush1.bf16.msra.mxu0 0
        %4629 = vmatprep.subr.bf16.mxu0 0
        %4630 = vmatpush1.bf16.msra.mxu0 0
        %4631 = vmatprep.subr.bf16.mxu0 0
        %4632 = vmatpush1.bf16.msra.mxu0 0
        %4633 = vmatprep.subr.bf16.mxu0 0
        %4634 = vmatpush1.bf16.msra.mxu0 0
        %4635 = vmatprep.subr.bf16.mxu0 0
        %4636 = vmatpush1.bf16.msra.mxu0 0
        %4637 = vmatprep.subr.bf16.mxu0 0
        %4638 = vmatpush1.bf16.msra.mxu0 0
        %4639 = vmatprep.subr.bf16.mxu0 0
        %4640 = vmatpush1.bf16.msra.mxu0 0
        %4641 = vmatprep.subr.bf16.mxu0 0
        %4642 = vmatpush1.bf16.msra.mxu0 0
        %4643 = vmatprep.subr.bf16.mxu0 0
        %4644 = vmatpush1.bf16.msra.mxu0 0
        %4645 = vmatprep.subr.bf16.mxu0 0
        %4646 = vmatpush1.bf16.msra.mxu0 0
        %4647 = vmatprep.subr.bf16.mxu0 0
        %4648 = vmatpush1.bf16.msra.mxu0 0
        %4649 = vmatprep.subr.bf16.mxu0 0
        %4650 = vmatpush1.bf16.msra.mxu0 0
        %4651 = vmatprep.subr.bf16.mxu0 0
        %4652 = vmatpush1.bf16.msra.mxu0 0
        %4653 = vmatprep.subr.bf16.mxu0 0
        %4654 = vmatpush1.bf16.msra.mxu0 0
        %4655 = vmatprep.mubr.bf16.mxu0 0
        %4656 = vmatmul.mubr.bf16.gmra.mrb[0].mxu0 %v4621
        %v4657 = vpop.f32.mrb[0].mxu0
        %v4658 = vadd.f32 0.0, %v4657
        %v4659 = vpop.f32.mrb[0].mxu0
        %v4660 = vpop.f32.mrb[0].mxu0
        %v4661 = vadd.f32 0.0, %v4660
        %v4662 = vpop.f32.mrb[0].mxu0
        %4663 = vdwg.mxu0
        %v4665 = vsel %vm4439, %v4531, 0
        %4667 = vmatprep.subr.bf16.mxu0 0
        %4668 = vmatpush1.bf16.msra.mxu0 %v4245
        %4669 = vmatprep.subr.bf16.mxu0 0
        %4670 = vmatpush1.bf16.msra.mxu0 %v4246
        %4671 = vmatprep.subr.bf16.mxu0 0
        %4672 = vmatpush1.bf16.msra.mxu0 0
        %4673 = vmatprep.subr.bf16.mxu0 0
        %4674 = vmatpush1.bf16.msra.mxu0 0
        %4675 = vmatprep.subr.bf16.mxu0 0
        %4676 = vmatpush1.bf16.msra.mxu0 0
        %4677 = vmatprep.subr.bf16.mxu0 0
        %4678 = vmatpush1.bf16.msra.mxu0 0
        %4679 = vmatprep.subr.bf16.mxu0 0
        %4680 = vmatpush1.bf16.msra.mxu0 0
        %4681 = vmatprep.subr.bf16.mxu0 0
        %4682 = vmatpush1.bf16.msra.mxu0 0
        %4683 = vmatprep.subr.bf16.mxu0 0
        %4684 = vmatpush1.bf16.msra.mxu0 0
        %4685 = vmatprep.subr.bf16.mxu0 0
        %4686 = vmatpush1.bf16.msra.mxu0 0
        %4687 = vmatprep.subr.bf16.mxu0 0
        %4688 = vmatpush1.bf16.msra.mxu0 0
        %4689 = vmatprep.subr.bf16.mxu0 0
        %4690 = vmatpush1.bf16.msra.mxu0 0
        %4691 = vmatprep.subr.bf16.mxu0 0
        %4692 = vmatpush1.bf16.msra.mxu0 0
        %4693 = vmatprep.subr.bf16.mxu0 0
        %4694 = vmatpush1.bf16.msra.mxu0 0
        %4695 = vmatprep.subr.bf16.mxu0 0
        %4696 = vmatpush1.bf16.msra.mxu0 0
        %4697 = vmatprep.subr.bf16.mxu0 0
        %4698 = vmatpush1.bf16.msra.mxu0 0
        %4699 = vmatprep.mubr.bf16.mxu0 0
        %4700 = vmatmul.mubr.bf16.gmra.mrb[0].mxu0 %v4665
        %v4701 = vpop.f32.mrb[0].mxu0
        %v4702 = vadd.f32 0.0, %v4701
        %v4703 = vpop.f32.mrb[0].mxu0
        %v4704 = vpop.f32.mrb[0].mxu0
        %v4705 = vadd.f32 0.0, %v4704
        %v4706 = vpop.f32.mrb[0].mxu0
        %4707 = vdwg.mxu0
        %v4708 = vpack.c.bf16 %v4573, %v4570
        %v4709 = vpack.c.bf16 %v4617, %v4614
        %v4710 = vpack.c.bf16 %v4661, %v4658
        %v4711 = vpack.c.bf16 %v4705, %v4702
        %v4712 = vld [vmem:[%s737] sm:$0xff]
        %v4713 = vld [vmem:[%s737 + $0x8] sm:$0xff]
        %v4714 = vld [vmem:[%s737 + $0x10] sm:$0xff]
        %v4715 = vld [vmem:[%s737 + $0x18] sm:$0xff]
        %v4716 = vld [vmem:[%s737 + $0x20] sm:$0xff]
        %v4717 = vld [vmem:[%s737 + $0x28] sm:$0xff]
        %v4718 = vld [vmem:[%s737 + $0x30] sm:$0xff]
        %v4719 = vld [vmem:[%s737 + $0x38] sm:$0xff]
        %v4720 = vld [vmem:[%s737 + $0x40] sm:$0xff]
        %v4721 = vld [vmem:[%s737 + $0x48] sm:$0xff]
        %v4722 = vld [vmem:[%s737 + $0x50] sm:$0xff]
        %v4723 = vld [vmem:[%s737 + $0x58] sm:$0xff]
        %v4724 = vld [vmem:[%s737 + $0x60] sm:$0xff]
        %v4725 = vld [vmem:[%s737 + $0x68] sm:$0xff]
        %v4726 = vld [vmem:[%s737 + $0x70] sm:$0xff]
        %v4727 = vld [vmem:[%s737 + $0x78] sm:$0xff]
        %v4728 = vld [vmem:[%s737 + $0x80] sm:$0xff]
        %v4729 = vld [vmem:[%s737 + $0x88] sm:$0xff]
        %v4730 = vld [vmem:[%s737 + $0x90] sm:$0xff]
        %v4731 = vld [vmem:[%s737 + $0x98] sm:$0xff]
        %v4732 = vld [vmem:[%s737 + $0xa0] sm:$0xff]
        %v4733 = vld [vmem:[%s737 + $0xa8] sm:$0xff]
        %v4734 = vld [vmem:[%s737 + $0xb0] sm:$0xff]
        %v4735 = vld [vmem:[%s737 + $0xb8] sm:$0xff]
        %v4736 = vld [vmem:[%s737 + $0xc0] sm:$0xff]
        %v4737 = vld [vmem:[%s737 + $0xc8] sm:$0xff]
        %v4738 = vld [vmem:[%s737 + $0xd0] sm:$0xff]
        %v4739 = vld [vmem:[%s737 + $0xd8] sm:$0xff]
        %v4740 = vld [vmem:[%s737 + $0xe0] sm:$0xff]
        %v4741 = vld [vmem:[%s737 + $0xe8] sm:$0xff]
        %v4742 = vld [vmem:[%s737 + $0xf0] sm:$0xff]
        %v4743 = vld [vmem:[%s737 + $0xf8] sm:$0xff]
        %v4744 = vlaneseq
        %v4745 = vshrl.u32 %v4744, 7
        %v4746 = vsub.s32 1, %v4745
        %v4747 = vrot.slane %v865, %v4746
        %v4748 = vlaneseq
        %v4749 = vshrl.u32 %v4748, 7
        %v4750 = vsub.s32 1, %v4749
        %v4751 = vrot.slane %v866, %v4750
        %v4784 = vunpack.c.l.b16 %v4712
        %v4785 = vunpack.c.h.b16 %v4712
        %v4786 = vunpack.c.l.b16 %v4713
        %v4787 = vunpack.c.h.b16 %v4713
        %v4788 = vunpack.c.l.b16 %v4714
        %v4789 = vunpack.c.h.b16 %v4714
        %v4790 = vunpack.c.l.b16 %v4715
        %v4791 = vunpack.c.h.b16 %v4715
        %v4792 = vunpack.c.l.b16 %v4716
        %v4793 = vunpack.c.h.b16 %v4716
        %v4794 = vunpack.c.l.b16 %v4717
        %v4795 = vunpack.c.h.b16 %v4717
        %v4796 = vunpack.c.l.b16 %v4718
        %v4797 = vunpack.c.h.b16 %v4718
        %v4798 = vunpack.c.l.b16 %v4719
        %v4799 = vunpack.c.h.b16 %v4719
        %v4800 = vunpack.c.l.b16 %v4720
        %v4801 = vunpack.c.h.b16 %v4720
        %v4802 = vunpack.c.l.b16 %v4721
        %v4803 = vunpack.c.h.b16 %v4721
        %v4804 = vunpack.c.l.b16 %v4722
        %v4805 = vunpack.c.h.b16 %v4722
        %v4806 = vunpack.c.l.b16 %v4723
        %v4807 = vunpack.c.h.b16 %v4723
        %v4808 = vunpack.c.l.b16 %v4724
        %v4809 = vunpack.c.h.b16 %v4724
        %v4810 = vunpack.c.l.b16 %v4725
        %v4811 = vunpack.c.h.b16 %v4725
        %v4812 = vunpack.c.l.b16 %v4726
        %v4813 = vunpack.c.h.b16 %v4726
        %v4814 = vunpack.c.l.b16 %v4727
        %v4815 = vunpack.c.h.b16 %v4727
        %v4816 = vunpack.c.l.b16 %v4728
        %v4817 = vunpack.c.h.b16 %v4728
        %v4818 = vunpack.c.l.b16 %v4729
        %v4819 = vunpack.c.h.b16 %v4729
        %v4820 = vunpack.c.l.b16 %v4730
        %v4821 = vunpack.c.h.b16 %v4730
        %v4822 = vunpack.c.l.b16 %v4731
        %v4823 = vunpack.c.h.b16 %v4731
        %v4824 = vunpack.c.l.b16 %v4732
        %v4825 = vunpack.c.h.b16 %v4732
        %v4826 = vunpack.c.l.b16 %v4733
        %v4827 = vunpack.c.h.b16 %v4733
        %v4828 = vunpack.c.l.b16 %v4734
        %v4829 = vunpack.c.h.b16 %v4734
        %v4830 = vunpack.c.l.b16 %v4735
        %v4831 = vunpack.c.h.b16 %v4735
        %v4832 = vunpack.c.l.b16 %v4736
        %v4833 = vunpack.c.h.b16 %v4736
        %v4834 = vunpack.c.l.b16 %v4737
        %v4835 = vunpack.c.h.b16 %v4737
        %v4836 = vunpack.c.l.b16 %v4738
        %v4837 = vunpack.c.h.b16 %v4738
        %v4838 = vunpack.c.l.b16 %v4739
        %v4839 = vunpack.c.h.b16 %v4739
        %v4840 = vunpack.c.l.b16 %v4740
        %v4841 = vunpack.c.h.b16 %v4740
        %v4842 = vunpack.c.l.b16 %v4741
        %v4843 = vunpack.c.h.b16 %v4741
        %v4844 = vunpack.c.l.b16 %v4742
        %v4845 = vunpack.c.h.b16 %v4742
        %v4846 = vunpack.c.l.b16 %v4743
        %v4847 = vunpack.c.h.b16 %v4743
        %v4848 = vpack.c.b16 %v4786, %v4784
        %v4849 = vpack.c.b16 %v4787, %v4785
        %v4850 = vpack.c.b16 %v4790, %v4788
        %v4851 = vpack.c.b16 %v4791, %v4789
        %v4852 = vpack.c.b16 %v4794, %v4792
        %v4853 = vpack.c.b16 %v4795, %v4793
        %v4854 = vpack.c.b16 %v4798, %v4796
        %v4855 = vpack.c.b16 %v4799, %v4797
        %v4856 = vpack.c.b16 %v4802, %v4800
        %v4857 = vpack.c.b16 %v4803, %v4801
        %v4858 = vpack.c.b16 %v4806, %v4804
        %v4859 = vpack.c.b16 %v4807, %v4805
        %v4860 = vpack.c.b16 %v4810, %v4808
        %v4861 = vpack.c.b16 %v4811, %v4809
        %v4862 = vpack.c.b16 %v4814, %v4812
        %v4863 = vpack.c.b16 %v4815, %v4813
        %v4864 = vpack.c.b16 %v4818, %v4816
        %v4865 = vpack.c.b16 %v4819, %v4817
        %v4866 = vpack.c.b16 %v4822, %v4820
        %v4867 = vpack.c.b16 %v4823, %v4821
        %v4868 = vpack.c.b16 %v4826, %v4824
        %v4869 = vpack.c.b16 %v4827, %v4825
        %v4870 = vpack.c.b16 %v4830, %v4828
        %v4871 = vpack.c.b16 %v4831, %v4829
        %v4872 = vpack.c.b16 %v4834, %v4832
        %v4873 = vpack.c.b16 %v4835, %v4833
        %v4874 = vpack.c.b16 %v4838, %v4836
        %v4875 = vpack.c.b16 %v4839, %v4837
        %v4876 = vpack.c.b16 %v4842, %v4840
        %v4877 = vpack.c.b16 %v4843, %v4841
        %v4878 = vpack.c.b16 %v4846, %v4844
        %v4879 = vpack.c.b16 %v4847, %v4845
        %4912 = vmatprep.subr.bf16.mxu0 %v4849
        %4913 = vmatpush1.bf16.msra.mxu0 %v4848
        %4914 = vmatprep.subr.bf16.mxu0 %v4851
        %4915 = vmatpush1.bf16.msra.mxu0 %v4850
        %4916 = vmatprep.subr.bf16.mxu0 %v4853
        %4917 = vmatpush1.bf16.msra.mxu0 %v4852
        %4918 = vmatprep.subr.bf16.mxu0 %v4855
        %4919 = vmatpush1.bf16.msra.mxu0 %v4854
        %4920 = vmatprep.subr.bf16.mxu0 %v4857
        %4921 = vmatpush1.bf16.msra.mxu0 %v4856
        %4922 = vmatprep.subr.bf16.mxu0 %v4859
        %4923 = vmatpush1.bf16.msra.mxu0 %v4858
        %4924 = vmatprep.subr.bf16.mxu0 %v4861
        %4925 = vmatpush1.bf16.msra.mxu0 %v4860
        %4926 = vmatprep.subr.bf16.mxu0 %v4863
        %4927 = vmatpush1.bf16.msra.mxu0 %v4862
        %4928 = vmatprep.subr.bf16.mxu0 %v4865
        %4929 = vmatpush1.bf16.msra.mxu0 %v4864
        %4930 = vmatprep.subr.bf16.mxu0 %v4867
        %4931 = vmatpush1.bf16.msra.mxu0 %v4866
        %4932 = vmatprep.subr.bf16.mxu0 %v4869
        %4933 = vmatpush1.bf16.msra.mxu0 %v4868
        %4934 = vmatprep.subr.bf16.mxu0 %v4871
        %4935 = vmatpush1.bf16.msra.mxu0 %v4870
        %4936 = vmatprep.subr.bf16.mxu0 %v4873
        %4937 = vmatpush1.bf16.msra.mxu0 %v4872
        %4938 = vmatprep.subr.bf16.mxu0 %v4875
        %4939 = vmatpush1.bf16.msra.mxu0 %v4874
        %4940 = vmatprep.subr.bf16.mxu0 %v4877
        %4941 = vmatpush1.bf16.msra.mxu0 %v4876
        %4942 = vmatprep.subr.bf16.mxu0 %v4879
        %4943 = vmatpush1.bf16.msra.mxu0 %v4878
        %4944 = vmatprep.mubr.bf16.mxu0 %v4709
        %4945 = vmatmul.mubr.bf16.gmra.mrb[0].mxu0 %v4708
        %v4946 = vpop.f32.mrb[0].mxu0
        %v4947 = vadd.f32 %v4747, %v4946
        %v4948 = vpop.f32.mrb[0].mxu0
        %v4949 = vadd.f32 %v4751, %v4948
        %v4950 = vpop.f32.mrb[0].mxu0
        %v4951 = vadd.f32 %v4747, %v4950
        %v4952 = vpop.f32.mrb[0].mxu0
        %v4953 = vadd.f32 %v4751, %v4952
        %4954 = vmatprep.mubr.bf16.mxu0 %v4711
        %4955 = vmatmul.mubr.bf16.gmra.mrb[0].mxu0 %v4710
        %v4956 = vpop.f32.mrb[0].mxu0
        %v4957 = vadd.f32 %v4747, %v4956
        %v4958 = vpop.f32.mrb[0].mxu0
        %v4959 = vadd.f32 %v4751, %v4958
        %v4960 = vpop.f32.mrb[0].mxu0
        %v4961 = vadd.f32 %v4747, %v4960
        %v4962 = vpop.f32.mrb[0].mxu0
        %v4963 = vadd.f32 %v4751, %v4962
        %4964 = vdwg.mxu0
        %v4965 = vadd.f32 %v3240, %v4947
        %v4966 = vadd.f32 %v3241, %v4949
        %v4967 = vadd.f32 %v3242, %v4951
        %v4968 = vadd.f32 %v3243, %v4953
        %v4969 = vadd.f32 %v3244, %v4957
        %v4970 = vadd.f32 %v3245, %v4959
        %v4971 = vadd.f32 %v3246, %v4961
        %v4972 = vadd.f32 %v3247, %v4963
        %4973 = vst [vmem:[#allocation2] sm:$0xff] %v4965
        %4974 = vst [vmem:[#allocation2 + $0x8] sm:$0xff] %v4966
        %4975 = vst [vmem:[#allocation2 + $0x10] sm:$0xff] %v4967
        %4976 = vst [vmem:[#allocation2 + $0x18] sm:$0xff] %v4968
        %4977 = vst [vmem:[#allocation2 + $0x20] sm:$0xff] %v4969
        %4978 = vst [vmem:[#allocation2 + $0x28] sm:$0xff] %v4970
        %4979 = vst [vmem:[#allocation2 + $0x30] sm:$0xff] %v4971
        %4980 = vst [vmem:[#allocation2 + $0x38] sm:$0xff] %v4972
        %p4981 = scmp.eq.s32.totalorder %s30, 1
        // Predicated region
        $region137: #{paraformer_decoder_san_forward.2} parent=75 // pred_check
          %p4982 = pneg %p4981
        $region138: #{paraformer_decoder_san_forward.2} parent=75 // pred_check_branch
          %4984 = sbr.rel (%p4982) target = $region140
        $region139: #{paraformer_decoder_san_forward.2} parent=75 // pred_region
          %v4985 = vld [vmem:[#allocation12] sm:$0x3]
          %v4986 = vld [vmem:[#allocation13] sm:$0x3]
          %v4987 = vadd.f32 %v4965, %v4966
          %4988 = vadd.xlane.f32.xlu0 %v4987
          %v4989 = vpop.xlane.xlu0 %4988
          %v4990 = vadd.f32 %v4967, %v4968
          %4991 = vadd.xlane.f32.xlu0 %v4990
          %v4992 = vpop.xlane.xlu0 %4991
          %v4993 = vadd.f32 %v4969, %v4970
          %4994 = vadd.xlane.f32.xlu0 %v4993
          %v4995 = vpop.xlane.xlu0 %4994
          %v4996 = vadd.f32 %v4971, %v4972
          %4997 = vadd.xlane.f32.xlu0 %v4996
          %v4998 = vpop.xlane.xlu0 %4997
          %v4999 = vmul.f32 %v4989, %v881
          %v5000 = vmul.f32 %v4992, %v881
          %v5001 = vmul.f32 %v4995, %v881
          %v5002 = vmul.f32 %v4998, %v881
          %v5003 = vsub.f32 %v4965, %v4999
          %v5004 = vsub.f32 %v4966, %v4999
          %v5005 = vsub.f32 %v4967, %v5000
          %v5006 = vsub.f32 %v4968, %v5000
          %v5007 = vsub.f32 %v4969, %v5001
          %v5008 = vsub.f32 %v4970, %v5001
          %v5009 = vsub.f32 %v4971, %v5002
          %v5010 = vsub.f32 %v4972, %v5002
          %v5011 = vmul.f32 %v5003, %v5003
          %v5012 = vmul.f32 %v5004, %v5004
          %v5013 = vmul.f32 %v5005, %v5005
          %v5014 = vmul.f32 %v5006, %v5006
          %v5015 = vmul.f32 %v5007, %v5007
          %v5016 = vmul.f32 %v5008, %v5008
          %v5017 = vmul.f32 %v5009, %v5009
          %v5018 = vmul.f32 %v5010, %v5010
          %v5019 = vadd.f32 %v5011, %v5012
          %5020 = vadd.xlane.f32.xlu0 %v5019
          %v5021 = vpop.xlane.xlu0 %5020
          %v5022 = vadd.f32 %v5013, %v5014
          %5023 = vadd.xlane.f32.xlu0 %v5022
          %v5024 = vpop.xlane.xlu0 %5023
          %v5025 = vadd.f32 %v5015, %v5016
          %5026 = vadd.xlane.f32.xlu0 %v5025
          %v5027 = vpop.xlane.xlu0 %5026
          %v5028 = vadd.f32 %v5017, %v5018
          %5029 = vadd.xlane.f32.xlu0 %v5028
          %v5030 = vpop.xlane.xlu0 %5029
          %v5031 = vmul.f32 %v5021, %v881
          %v5032 = vmul.f32 %v5024, %v881
          %v5033 = vmul.f32 %v5027, %v881
          %v5034 = vmul.f32 %v5030, %v881
          %v5035 = vadd.f32 %v5031, 1e-05
          %v5036 = vadd.f32 %v5032, 1e-05
          %v5037 = vadd.f32 %v5033, 1e-05
          %v5038 = vadd.f32 %v5034, 1e-05
          %v5039 = vrsqrt.pop %v5035
          %v5040 = vrsqrt.pop %v5036
          %v5041 = vrsqrt.pop %v5037
          %v5042 = vrsqrt.pop %v5038
          %v5043 = vmul.f32 %v5003, %v5039
          %v5044 = vmul.f32 %v5004, %v5039
          %v5045 = vmul.f32 %v5005, %v5040
          %v5046 = vmul.f32 %v5006, %v5040
          %v5047 = vmul.f32 %v5007, %v5041
          %v5048 = vmul.f32 %v5008, %v5041
          %v5049 = vmul.f32 %v5009, %v5042
          %v5050 = vmul.f32 %v5010, %v5042
          %v5052 = vlaneseq
          %v5053 = vshrl.u32 %v5052, 7
          %v5054 = vsub.s32 0, %v5053
          %v5055 = vrot.slane %v4985, %v5054
          %v5056 = vlaneseq
          %v5057 = vshrl.u32 %v5056, 7
          %v5058 = vsub.s32 1, %v5057
          %v5059 = vrot.slane %v4985, %v5058
          %v5062 = vmul.f32 %v5043, %v5055
          %v5063 = vmul.f32 %v5044, %v5059
          %v5064 = vmul.f32 %v5045, %v5055
          %v5065 = vmul.f32 %v5046, %v5059
          %v5066 = vmul.f32 %v5047, %v5055
          %v5067 = vmul.f32 %v5048, %v5059
          %v5068 = vmul.f32 %v5049, %v5055
          %v5069 = vmul.f32 %v5050, %v5059
          %v5071 = vlaneseq
          %v5072 = vshrl.u32 %v5071, 7
          %v5073 = vsub.s32 0, %v5072
          %v5074 = vrot.slane %v4986, %v5073
          %v5075 = vlaneseq
          %v5076 = vshrl.u32 %v5075, 7
          %v5077 = vsub.s32 1, %v5076
          %v5078 = vrot.slane %v4986, %v5077
          %v5081 = vadd.f32 %v5062, %v5074
          %v5082 = vadd.f32 %v5063, %v5078
          %v5083 = vadd.f32 %v5064, %v5074
          %v5084 = vadd.f32 %v5065, %v5078
          %v5085 = vadd.f32 %v5066, %v5074
          %v5086 = vadd.f32 %v5067, %v5078
          %v5087 = vadd.f32 %v5068, %v5074
          %v5088 = vadd.f32 %v5069, %v5078
          %5089 = vst [vmem:[#allocation23] sm:$0xff] %v5081
          %5090 = vst [vmem:[#allocation23 + $0x8] sm:$0xff] %v5082
          %5091 = vst [vmem:[#allocation23 + $0x10] sm:$0xff] %v5083
          %5092 = vst [vmem:[#allocation23 + $0x18] sm:$0xff] %v5084
          %5093 = vst [vmem:[#allocation23 + $0x20] sm:$0xff] %v5085
          %5094 = vst [vmem:[#allocation23 + $0x28] sm:$0xff] %v5086
          %5095 = vst [vmem:[#allocation23 + $0x30] sm:$0xff] %v5087
          %5096 = vst [vmem:[#allocation23 + $0x38] sm:$0xff] %v5088
        $region140: #{paraformer_decoder_san_forward.2} parent=75 // pred_fallthru
          _
        // Predicated region
        $region141: #{paraformer_decoder_san_forward.2} parent=75 // pred_check
          %p5097 = pneg %p377
        $region142: #{paraformer_decoder_san_forward.2} parent=75 // pred_check_branch
          %5099 = sbr.rel (%p5097) target = $region144
        $region143: #{paraformer_decoder_san_forward.2} parent=75 // pred_region
          %s5101 = ssub.s32 1024, 1024
          %5102 = vsyncadd [#allocation6], %s5101
          %s5103 = sshll.u32 [#allocation23], 4
          %s5104 = int_to_ptr.vmem [resolvable:$true] %s5103
          %5109 = dma.vmem_to_hbm [thread:$0]  %s5104, 1024, %s14, [#allocation6], 256, 256, 16
        $region144: #{paraformer_decoder_san_forward.2} parent=75 // pred_fallthru
          _
        // Predicated region
        $region145: #{paraformer_decoder_san_forward.2} parent=75 // pred_check
          %p5110 = pneg %p377
        $region146: #{paraformer_decoder_san_forward.2} parent=75 // pred_check_branch
          %5112 = sbr.rel (%p5110) target = $region148
        $region147: #{paraformer_decoder_san_forward.2} parent=75 // pred_region
          %5113 = dma.done [#allocation6], 1024
        $region148: #{paraformer_decoder_san_forward.2} parent=75 // pred_fallthru
          _
      $region76: #{paraformer_decoder_san_forward.2} parent=5 // pred_fallthru
        _
      %p5114 = scmp.le.s32.totalorder 2, %s25
      // Predicated region
      $region149: #{paraformer_decoder_san_forward.2} parent=5 // pred_check
        %p5115 = pneg %p5114
      $region150: #{paraformer_decoder_san_forward.2} parent=5 // pred_check_branch
        %5117 = sbr.rel (%p5115) target = $region152
      $region151: #{paraformer_decoder_san_forward.2} parent=5 // pred_region
        %s5118 = ssub.s32 %s25, 2
      $region152: #{paraformer_decoder_san_forward.2} parent=5 // pred_fallthru
        _
    $region6: #{paraformer_decoder_san_forward.2} parent=1 // loop_footer
      %s29 = sadd.s32 1, %s25
    $region7: #{paraformer_decoder_san_forward.2} parent=1 // loop_footer_branch
      %24 = sbr.rel target = $region3
    $region8: #{paraformer_decoder_san_forward.2} parent=1 // loop_exit
      _
    %5119 = vsyncpa [#allocation5], 1
    %s5120 = scalar_lea.sflag [#allocation5], 1
    %5121 = vsyncpa %s5120, 1
    %5122 = vsyncpa [#allocation8], 1
    %5123 = vsyncpa [#allocation11], 1
    %5124 = vsyncpa [#allocation14], 1
    %5125 = vsyncpa [#allocation6], 1
    %s5126 = scalar_lea.sflag [#allocation6], 1
    %5127 = vsyncpa %s5126, 1

</llo_original>
